<compile_context>
chip_gen: v5e
topology: v5e:2x2
jax: 0.10.0
libtpu: 0.0.40
codegen_flags: <defaults>
</compile_context>

<pallas_src>
import functools
import math

import jax
import jax.numpy as jnp
from jax.experimental import pallas as pl
from jax.experimental.pallas import tpu as pltpu


_VMEM_LIMIT = 32 * 1024 * 1024  # safe on v5e/v6e (128 MiB) and v7x (64 MiB)


# ----------------------------------------------------------------------------
# Fused transformer-layer kernel
# ----------------------------------------------------------------------------

def _transformer_layer_kernel(x_ref, pe_ref, inw_ref, inb_ref, outw_ref,
                              outb_ref, ln1w_ref, ln1b_ref, w1_ref, b1_ref,
                              w2_ref, b2_ref, ln2w_ref, ln2b_ref, o_ref,
                              *, nhead, eps):
    """Whole TransformerLayer forward on one (S, B, E) block (dropout = id)."""
    S, B, E = x_ref.shape
    hd = E // nhead
    scale = 1.0 / math.sqrt(float(hd))

    x_all = x_ref[...]                      # (S, B, E) f32
    pe = pe_ref[...]                        # (S, E)    f32

    # Batch-major token matrix (row = b*S + s): per-batch row blocks are
    # sublane-aligned (S == 8), so attention slicing below is cheap.
    x_bm = jnp.concatenate([x_all[:, b, :] + pe for b in range(B)], axis=0)

    # ---- fused QKV projection: one MXU matmul (bf16 operands, f32 acc) ----
    qkv = jnp.dot(x_bm.astype(jnp.bfloat16), inw_ref[...],
                  preferred_element_type=jnp.float32) + inb_ref[...]  # (B*S, 3E)
    q = qkv[:, 0 * E:1 * E] * scale         # fold 1/sqrt(hd) into q (once)
    k = qkv[:, 1 * E:2 * E]
    v = qkv[:, 2 * E:3 * E]

    out_w = outw_ref[...]                   # (E, E) f32 (sliced per head below)
    out_b = outb_ref[...]                   # (1, E) f32

    # ---- per (batch, head) scaled-dot-product attention ----------------------
    # Out-projection folded per head: concat_h(ctx_h) @ Wo
    #   == sum_h ctx_h @ Wo[h*hd:(h+1)*hd, :]
    attn_rows = []
    for b in range(B):                      # static unroll, B is tiny
        r0 = b * S
        acc = out_b                         # (1, E) -> broadcasts to (S, E)
        for h in range(nhead):              # static unroll
            c0 = h * hd
            qh = q[r0:r0 + S, c0:c0 + hd]
            khT = k[r0:r0 + S, c0:c0 + hd].T          # (hd, S), f32 transpose
            vh = v[r0:r0 + S, c0:c0 + hd]
            s = jnp.dot(qh.astype(jnp.bfloat16), khT.astype(jnp.bfloat16),
                        preferred_element_type=jnp.float32)          # (S, S)
            s = s - jnp.max(s, axis=-1, keepdims=True)
            p = jnp.exp(s)
            p = p * pl.reciprocal(jnp.sum(p, axis=-1, keepdims=True),
                                  approx=True)
            ctx = jnp.dot(p.astype(jnp.bfloat16), vh.astype(jnp.bfloat16),
                          preferred_element_type=jnp.float32)        # (S, hd)
            wo_h = out_w[c0:c0 + hd, :].astype(jnp.bfloat16)
            acc = acc + jnp.dot(ctx.astype(jnp.bfloat16), wo_h,
                                preferred_element_type=jnp.float32)
        attn_rows.append(acc)               # (S, E)
    attn = jnp.concatenate(attn_rows, axis=0)                        # (B*S, E)

    # ---- residual + LayerNorm1 (f32) ----
    y = x_bm + attn
    mu = jnp.mean(y, axis=-1, keepdims=True)
    var = jnp.mean((y - mu) ** 2, axis=-1, keepdims=True)
    y = (y - mu) * jax.lax.rsqrt(var + eps) * ln1w_ref[...] + ln1b_ref[...]

    # ---- FFN: Linear1 + ReLU + Linear2 (hidden never leaves VMEM) ----
    h1 = jnp.dot(y.astype(jnp.bfloat16), w1_ref[...],
                 preferred_element_type=jnp.float32) + b1_ref[...]   # (B*S, F)
    h1 = jnp.maximum(h1, 0.0)
    ff = jnp.dot(h1.astype(jnp.bfloat16), w2_ref[...],
                 preferred_element_type=jnp.float32) + b2_ref[...]   # (B*S, E)

    # ---- residual + LayerNorm2, store back in (S, B, E) layout ----
    z = y + ff
    mu2 = jnp.mean(z, axis=-1, keepdims=True)
    var2 = jnp.mean((z - mu2) ** 2, axis=-1, keepdims=True)
    z = (z - mu2) * jax.lax.rsqrt(var2 + eps) * ln2w_ref[...] + ln2b_ref[...]

    for b in range(B):
        o_ref[:, b, :] = z[b * S:(b + 1) * S, :]


# ----------------------------------------------------------------------------
# Wrapper: one pallas_call, no wrapper-side transposes / pads / slices
# ----------------------------------------------------------------------------

def transformer_layer_forward(x, params, *, nhead=2):
    """x: (S, B, E) — PyTorch seq-first layout (batch_first=False).

    Eval-mode semantics: all dropout layers (positional-encoding dropout and
    the two dropouts inside nn.TransformerEncoderLayer) are identity.
    """
    S, B, E = x.shape
    F = params["w1_bf16"].shape[1]
    max_len = params["pe"].shape[0]
    assert S <= max_len and E % nhead == 0

    kernel = functools.partial(_transformer_layer_kernel, nhead=nhead, eps=1e-5)
    return pl.pallas_call(
        kernel,
        grid=(1,),
        in_specs=[
            pl.BlockSpec((S, B, E), lambda i: (0, 0, 0)),      # x (full block)
            pl.BlockSpec((S, E), lambda i: (0, 0)),            # pe[:S] via BlockSpec
            pl.BlockSpec((E, 3 * E), lambda i: (0, 0)),        # in_proj weight (bf16)
            pl.BlockSpec((1, 3 * E), lambda i: (0, 0)),        # in_proj bias
            pl.BlockSpec((E, E), lambda i: (0, 0)),            # out_proj weight (f32)
            pl.BlockSpec((1, E), lambda i: (0, 0)),            # out_proj bias
            pl.BlockSpec((1, E), lambda i: (0, 0)),            # ln1 weight
            pl.BlockSpec((1, E), lambda i: (0, 0)),            # ln1 bias
            pl.BlockSpec((E, F), lambda i: (0, 0)),            # linear1 weight (bf16)
            pl.BlockSpec((1, F), lambda i: (0, 0)),            # linear1 bias
            pl.BlockSpec((F, E), lambda i: (0, 0)),            # linear2 weight (bf16)
            pl.BlockSpec((1, E), lambda i: (0, 0)),            # linear2 bias
            pl.BlockSpec((1, E), lambda i: (0, 0)),            # ln2 weight
            pl.BlockSpec((1, E), lambda i: (0, 0)),            # ln2 bias
        ],
        out_specs=pl.BlockSpec((S, B, E), lambda i: (0, 0, 0)),
        out_shape=jax.ShapeDtypeStruct((S, B, E), jnp.float32),
        compiler_params=pltpu.CompilerParams(
            dimension_semantics=("arbitrary",),
            vmem_limit_bytes=_VMEM_LIMIT,
        ),
    )(x, params["pe"], params["in_w_bf16"], params["in_b"],
      params["out_w"], params["out_b"], params["ln1_w"], params["ln1_b"],
      params["w1_bf16"], params["b1"], params["w2_bf16"], params["b2"],
      params["ln2_w"], params["ln2_b"])


# ----------------------------------------------------------------------------
# Parameters (synthetic; shapes match nn.TransformerEncoderLayer(d_model,
# nhead, dim_feedforward) with weights stored transposed for row-major matmul)
# ----------------------------------------------------------------------------

def make_pe(d_model, max_len):
    position = jnp.arange(max_len, dtype=jnp.float32)[:, None]
    div_term = jnp.exp(jnp.arange(0, d_model, 2, dtype=jnp.float32)
                       * (-math.log(10000.0) / d_model))
    pe = jnp.zeros((max_len, d_model), jnp.float32)
    pe = pe.at[:, 0::2].set(jnp.sin(position * div_term))
    pe = pe.at[:, 1::2].set(jnp.cos(position * div_term))
    return pe                                            # (max_len, d_model)


def init_params(key, d_model=16, dim_feedforward=2048, max_len=1000):
    keys = iter(jax.random.split(key, 16))

    def nrm(shape, scale=0.1):
        return scale * jax.random.normal(next(keys), shape, dtype=jnp.float32)

    E, F = d_model, dim_feedforward
    p = {
        "in_w": nrm((E, 3 * E)),        # in_proj_weight.T
        "in_b": nrm((1, 3 * E)),
        "out_w": nrm((E, E)),           # out_proj.weight.T
        "out_b": nrm((1, E)),
        "w1": nrm((E, F)),              # linear1.weight.T
        "b1": nrm((1, F)),
        "w2": nrm((F, E)),              # linear2.weight.T
        "b2": nrm((1, E)),
        "ln1_w": jnp.ones((1, E), jnp.float32),
        "ln1_b": jnp.zeros((1, E), jnp.float32),
        "ln2_w": jnp.ones((1, E), jnp.float32),
        "ln2_b": jnp.zeros((1, E), jnp.float32),
        "pe": make_pe(E, max_len),
    }
    # One-time bf16 copies for MXU operands (f32 originals kept for reference).
    p["in_w_bf16"] = p["in_w"].astype(jnp.bfloat16)
    p["w1_bf16"] = p["w1"].astype(jnp.bfloat16)
    p["w2_bf16"] = p["w2"].astype(jnp.bfloat16)
    return p


# ----------------------------------------------------------------------------
# Pure-JAX reference (f32) for a correctness sanity check
# ----------------------------------------------------------------------------

def _layer_norm(x, w, b, eps=1e-5):
    mu = jnp.mean(x, axis=-1, keepdims=True)
    var = jnp.mean((x - mu) ** 2, axis=-1, keepdims=True)
    return (x - mu) / jnp.sqrt(var + eps) * w + b


def reference_forward(x, p, *, nhead=2, eps=1e-5):
    S, B, E = x.shape
    hd = E // nhead
    xx = x + p["pe"][:S][:, None, :]
    qkv = jnp.einsum("sbe,ef->sbf", xx, p["in_w"]) + p["in_b"][0]
    q, k, v = qkv[..., :E], qkv[..., E:2 * E], qkv[..., 2 * E:]

    def heads(a):                                     # (S,B,E) -> (B,nh,S,hd)
        return a.reshape(S, B, nhead, hd).transpose(1, 2, 0, 3)

    qh, kh, vh = heads(q), heads(k), heads(v)
    s = jnp.einsum("bhsd,bhtd->bhst", qh, kh) / math.sqrt(float(hd))
    a = jax.nn.softmax(s, axis=-1)
    ctx = jnp.einsum("bhst,bhtd->bhsd", a, vh)
    ctx = ctx.transpose(2, 0, 1, 3).reshape(S, B, E)
    attn_out = jnp.einsum("sbe,ef->sbf", ctx, p["out_w"]) + p["out_b"][0]
    y = _layer_norm(xx + attn_out, p["ln1_w"][0], p["ln1_b"][0], eps)
    ff = jnp.maximum(jnp.einsum("sbe,ef->sbf", y, p["w1"]) + p["b1"][0], 0.0)
    ff = jnp.einsum("sbf,fe->sbe", ff, p["w2"]) + p["b2"][0]
    return _layer_norm(y + ff, p["ln2_w"][0], p["ln2_b"][0], eps)


if __name__ == "__main__":
    key = jax.random.PRNGKey(0)
    pkey, xkey = jax.random.split(key)

    d_model, nhead, dim_feedforward = 16, 2, 2048
    S, B = 8, 4                                  # seq-first: x is (S, B, E)
    params = init_params(pkey, d_model=d_model, dim_feedforward=dim_feedforward)
    x = jax.random.normal(xkey, (S, B, d_model), dtype=jnp.float32)

    out = transformer_layer_forward(x, params, nhead=nhead)
    jax.block_until_ready(out)

    assert out.shape == (S, B, d_model)
    assert bool(jnp.all(jnp.isfinite(out)))
    ref = reference_forward(x, params, nhead=nhead)
    max_err = float(jnp.max(jnp.abs(out - ref)))
    assert max_err < 5e-2, f"mismatch vs reference: {max_err}"
    print("KERNEL_OK")
</pallas_src>

<mosaic_0001>
module attributes {stable_mosaic.version = 11 : i64} {
  func.func @_transformer_layer_kernel(%arg0: i32, %arg1: memref<8x4x16xf32, #tpu.memory_space<vmem>>, %arg2: memref<8x16xf32, #tpu.memory_space<vmem>>, %arg3: memref<16x48xbf16, #tpu.memory_space<vmem>>, %arg4: memref<1x48xf32, #tpu.memory_space<vmem>>, %arg5: memref<16x16xf32, #tpu.memory_space<vmem>>, %arg6: memref<1x16xf32, #tpu.memory_space<vmem>>, %arg7: memref<1x16xf32, #tpu.memory_space<vmem>>, %arg8: memref<1x16xf32, #tpu.memory_space<vmem>>, %arg9: memref<16x2048xbf16, #tpu.memory_space<vmem>>, %arg10: memref<1x2048xf32, #tpu.memory_space<vmem>>, %arg11: memref<2048x16xbf16, #tpu.memory_space<vmem>>, %arg12: memref<1x16xf32, #tpu.memory_space<vmem>>, %arg13: memref<1x16xf32, #tpu.memory_space<vmem>>, %arg14: memref<1x16xf32, #tpu.memory_space<vmem>>, %arg15: memref<8x4x16xf32, #tpu.memory_space<vmem>>) attributes {dimension_semantics = [#tpu.dimension_semantics<arbitrary>], iteration_bounds = array<i64: 1>, scalar_prefetch = 0 : i64, scratch_operands = 0 : i64, tpu.core_type = #tpu.core_type<tc>, window_params = [{pipeline_mode = #tpu.pipeline_mode<synchronous>, transform_indices = @transform_0, window_bounds = array<i64: 8, 4, 16>}, {transform_indices = @transform_1, window_bounds = array<i64: 8, 16>}, {pipeline_mode = #tpu.pipeline_mode<synchronous>, transform_indices = @transform_2, window_bounds = array<i64: 16, 48>}, {pipeline_mode = #tpu.pipeline_mode<synchronous>, transform_indices = @transform_3, window_bounds = array<i64: 1, 48>}, {pipeline_mode = #tpu.pipeline_mode<synchronous>, transform_indices = @transform_4, window_bounds = array<i64: 16, 16>}, {pipeline_mode = #tpu.pipeline_mode<synchronous>, transform_indices = @transform_5, window_bounds = array<i64: 1, 16>}, {pipeline_mode = #tpu.pipeline_mode<synchronous>, transform_indices = @transform_6, window_bounds = array<i64: 1, 16>}, {pipeline_mode = #tpu.pipeline_mode<synchronous>, transform_indices = @transform_7, window_bounds = array<i64: 1, 16>}, {pipeline_mode = #tpu.pipeline_mode<synchronous>, transform_indices = @transform_8, window_bounds = array<i64: 16, 2048>}, {pipeline_mode = #tpu.pipeline_mode<synchronous>, transform_indices = @transform_9, window_bounds = array<i64: 1, 2048>}, {pipeline_mode = #tpu.pipeline_mode<synchronous>, transform_indices = @transform_10, window_bounds = array<i64: 2048, 16>}, {pipeline_mode = #tpu.pipeline_mode<synchronous>, transform_indices = @transform_11, window_bounds = array<i64: 1, 16>}, {pipeline_mode = #tpu.pipeline_mode<synchronous>, transform_indices = @transform_12, window_bounds = array<i64: 1, 16>}, {pipeline_mode = #tpu.pipeline_mode<synchronous>, transform_indices = @transform_13, window_bounds = array<i64: 1, 16>}, {pipeline_mode = #tpu.pipeline_mode<synchronous>, transform_indices = @transform_14, window_bounds = array<i64: 8, 4, 16>}]} {
    %c0 = arith.constant 0 : index
    %c0_0 = arith.constant 0 : index
    %c0_1 = arith.constant 0 : index
    %0 = vector.load %arg1[%c0, %c0_0, %c0_1] : memref<8x4x16xf32, #tpu.memory_space<vmem>>, vector<8x4x16xf32>
    %c0_2 = arith.constant 0 : index
    %c0_3 = arith.constant 0 : index
    %1 = vector.load %arg2[%c0_2, %c0_3] : memref<8x16xf32, #tpu.memory_space<vmem>>, vector<8x16xf32>
    %2 = vector.extract_strided_slice %0 {offsets = [0, 0, 0], sizes = [8, 1, 16], strides = [1, 1, 1]} : vector<8x4x16xf32> to vector<8x1x16xf32>
    %3 = vector.shape_cast %2 : vector<8x1x16xf32> to vector<8x16xf32>
    %4 = arith.addf %3, %1 : vector<8x16xf32>
    %5 = vector.extract_strided_slice %0 {offsets = [0, 1, 0], sizes = [8, 1, 16], strides = [1, 1, 1]} : vector<8x4x16xf32> to vector<8x1x16xf32>
    %6 = vector.shape_cast %5 : vector<8x1x16xf32> to vector<8x16xf32>
    %7 = arith.addf %6, %1 : vector<8x16xf32>
    %8 = vector.extract_strided_slice %0 {offsets = [0, 2, 0], sizes = [8, 1, 16], strides = [1, 1, 1]} : vector<8x4x16xf32> to vector<8x1x16xf32>
    %9 = vector.shape_cast %8 : vector<8x1x16xf32> to vector<8x16xf32>
    %10 = arith.addf %9, %1 : vector<8x16xf32>
    %11 = vector.extract_strided_slice %0 {offsets = [0, 3, 0], sizes = [8, 1, 16], strides = [1, 1, 1]} : vector<8x4x16xf32> to vector<8x1x16xf32>
    %12 = vector.shape_cast %11 : vector<8x1x16xf32> to vector<8x16xf32>
    %13 = arith.addf %12, %1 : vector<8x16xf32>
    %14 = tpu.concatenate %4, %7, %10, %13 in 0 : vector<8x16xf32>, vector<8x16xf32>, vector<8x16xf32>, vector<8x16xf32> -> vector<32x16xf32>
    %15 = arith.truncf %14 : vector<32x16xf32> to vector<32x16xbf16>
    %c0_4 = arith.constant 0 : index
    %c0_5 = arith.constant 0 : index
    %16 = vector.load %arg3[%c0_4, %c0_5] : memref<16x48xbf16, #tpu.memory_space<vmem>>, vector<16x48xbf16>
    %cst = arith.constant dense<0.000000e+00> : vector<32x48xf32>
    %17 = tpu.matmul %15, %16, %cst {dimension_numbers = #tpu.dot_dimension_numbers<[1], [0], [0], [1], [0, 0, 1, 1], [], []>} : vector<32x16xbf16>, vector<16x48xbf16>, vector<32x48xf32> -> vector<32x48xf32>
    %c0_6 = arith.constant 0 : index
    %c0_7 = arith.constant 0 : index
    %18 = vector.load %arg4[%c0_6, %c0_7] : memref<1x48xf32, #tpu.memory_space<vmem>>, vector<1x48xf32>
    %19 = vector.broadcast %18 : vector<1x48xf32> to vector<32x48xf32>
    %20 = arith.addf %17, %19 : vector<32x48xf32>
    %21 = vector.extract_strided_slice %20 {offsets = [0, 0], sizes = [32, 16], strides = [1, 1]} : vector<32x48xf32> to vector<32x16xf32>
    %cst_8 = arith.constant 0.353553385 : f32
    %22 = vector.broadcast %cst_8 : f32 to vector<32x16xf32>
    %23 = arith.mulf %21, %22 : vector<32x16xf32>
    %24 = vector.extract_strided_slice %20 {offsets = [0, 16], sizes = [32, 16], strides = [1, 1]} : vector<32x48xf32> to vector<32x16xf32>
    %25 = vector.extract_strided_slice %20 {offsets = [0, 32], sizes = [32, 16], strides = [1, 1]} : vector<32x48xf32> to vector<32x16xf32>
    %c0_9 = arith.constant 0 : index
    %c0_10 = arith.constant 0 : index
    %26 = vector.load %arg5[%c0_9, %c0_10] : memref<16x16xf32, #tpu.memory_space<vmem>>, vector<16x16xf32>
    %c0_11 = arith.constant 0 : index
    %c0_12 = arith.constant 0 : index
    %27 = vector.load %arg6[%c0_11, %c0_12] : memref<1x16xf32, #tpu.memory_space<vmem>>, vector<1x16xf32>
    %28 = vector.extract_strided_slice %23 {offsets = [0, 0], sizes = [8, 8], strides = [1, 1]} : vector<32x16xf32> to vector<8x8xf32>
    %29 = vector.extract_strided_slice %24 {offsets = [0, 0], sizes = [8, 8], strides = [1, 1]} : vector<32x16xf32> to vector<8x8xf32>
    %30 = tpu.transpose %29, [1, 0] : vector<8x8xf32> -> vector<8x8xf32>
    %31 = vector.extract_strided_slice %25 {offsets = [0, 0], sizes = [8, 8], strides = [1, 1]} : vector<32x16xf32> to vector<8x8xf32>
    %32 = arith.truncf %28 : vector<8x8xf32> to vector<8x8xbf16>
    %33 = arith.truncf %30 : vector<8x8xf32> to vector<8x8xbf16>
    %cst_13 = arith.constant dense<0.000000e+00> : vector<8x8xf32>
    %34 = tpu.matmul %32, %33, %cst_13 {dimension_numbers = #tpu.dot_dimension_numbers<[1], [0], [0], [1], [0, 0, 1, 1], [], []>} : vector<8x8xbf16>, vector<8x8xbf16>, vector<8x8xf32> -> vector<8x8xf32>
    %cst_14 = arith.constant dense<0xFF800000> : vector<8xf32>
    %35 = vector.multi_reduction <maximumf>, %34, %cst_14 [1] : vector<8x8xf32> to vector<8xf32>
    %36 = vector.shape_cast %35 : vector<8xf32> to vector<8x1xf32>
    %37 = vector.broadcast %36 : vector<8x1xf32> to vector<8x8xf32>
    %38 = arith.subf %34, %37 : vector<8x8xf32>
    %39 = math.exp %38 : vector<8x8xf32>
    %cst_15 = arith.constant dense<0.000000e+00> : vector<8xf32>
    %40 = vector.multi_reduction <add>, %39, %cst_15 [1] : vector<8x8xf32> to vector<8xf32>
    %41 = vector.shape_cast %40 : vector<8xf32> to vector<8x1xf32>
    %42 = tpu.reciprocal %41 {approx = true} : vector<8x1xf32> -> vector<8x1xf32>
    %43 = vector.broadcast %42 : vector<8x1xf32> to vector<8x8xf32>
    %44 = arith.mulf %39, %43 : vector<8x8xf32>
    %45 = arith.truncf %44 : vector<8x8xf32> to vector<8x8xbf16>
    %46 = arith.truncf %31 : vector<8x8xf32> to vector<8x8xbf16>
    %cst_16 = arith.constant dense<0.000000e+00> : vector<8x8xf32>
    %47 = tpu.matmul %45, %46, %cst_16 {dimension_numbers = #tpu.dot_dimension_numbers<[1], [0], [0], [1], [0, 0, 1, 1], [], []>} : vector<8x8xbf16>, vector<8x8xbf16>, vector<8x8xf32> -> vector<8x8xf32>
    %48 = vector.extract_strided_slice %26 {offsets = [0, 0], sizes = [8, 16], strides = [1, 1]} : vector<16x16xf32> to vector<8x16xf32>
    %49 = arith.truncf %48 : vector<8x16xf32> to vector<8x16xbf16>
    %50 = arith.truncf %47 : vector<8x8xf32> to vector<8x8xbf16>
    %cst_17 = arith.constant dense<0.000000e+00> : vector<8x16xf32>
    %51 = tpu.matmul %50, %49, %cst_17 {dimension_numbers = #tpu.dot_dimension_numbers<[1], [0], [0], [1], [0, 0, 1, 1], [], []>} : vector<8x8xbf16>, vector<8x16xbf16>, vector<8x16xf32> -> vector<8x16xf32>
    %52 = vector.broadcast %27 : vector<1x16xf32> to vector<8x16xf32>
    %53 = arith.addf %52, %51 : vector<8x16xf32>
    %54 = vector.extract_strided_slice %23 {offsets = [0, 8], sizes = [8, 8], strides = [1, 1]} : vector<32x16xf32> to vector<8x8xf32>
    %55 = vector.extract_strided_slice %24 {offsets = [0, 8], sizes = [8, 8], strides = [1, 1]} : vector<32x16xf32> to vector<8x8xf32>
    %56 = tpu.transpose %55, [1, 0] : vector<8x8xf32> -> vector<8x8xf32>
    %57 = vector.extract_strided_slice %25 {offsets = [0, 8], sizes = [8, 8], strides = [1, 1]} : vector<32x16xf32> to vector<8x8xf32>
    %58 = arith.truncf %54 : vector<8x8xf32> to vector<8x8xbf16>
    %59 = arith.truncf %56 : vector<8x8xf32> to vector<8x8xbf16>
    %cst_18 = arith.constant dense<0.000000e+00> : vector<8x8xf32>
    %60 = tpu.matmul %58, %59, %cst_18 {dimension_numbers = #tpu.dot_dimension_numbers<[1], [0], [0], [1], [0, 0, 1, 1], [], []>} : vector<8x8xbf16>, vector<8x8xbf16>, vector<8x8xf32> -> vector<8x8xf32>
    %cst_19 = arith.constant dense<0xFF800000> : vector<8xf32>
    %61 = vector.multi_reduction <maximumf>, %60, %cst_19 [1] : vector<8x8xf32> to vector<8xf32>
    %62 = vector.shape_cast %61 : vector<8xf32> to vector<8x1xf32>
    %63 = vector.broadcast %62 : vector<8x1xf32> to vector<8x8xf32>
    %64 = arith.subf %60, %63 : vector<8x8xf32>
    %65 = math.exp %64 : vector<8x8xf32>
    %cst_20 = arith.constant dense<0.000000e+00> : vector<8xf32>
    %66 = vector.multi_reduction <add>, %65, %cst_20 [1] : vector<8x8xf32> to vector<8xf32>
    %67 = vector.shape_cast %66 : vector<8xf32> to vector<8x1xf32>
    %68 = tpu.reciprocal %67 {approx = true} : vector<8x1xf32> -> vector<8x1xf32>
    %69 = vector.broadcast %68 : vector<8x1xf32> to vector<8x8xf32>
    %70 = arith.mulf %65, %69 : vector<8x8xf32>
    %71 = arith.truncf %70 : vector<8x8xf32> to vector<8x8xbf16>
    %72 = arith.truncf %57 : vector<8x8xf32> to vector<8x8xbf16>
    %cst_21 = arith.constant dense<0.000000e+00> : vector<8x8xf32>
    %73 = tpu.matmul %71, %72, %cst_21 {dimension_numbers = #tpu.dot_dimension_numbers<[1], [0], [0], [1], [0, 0, 1, 1], [], []>} : vector<8x8xbf16>, vector<8x8xbf16>, vector<8x8xf32> -> vector<8x8xf32>
    %74 = vector.extract_strided_slice %26 {offsets = [8, 0], sizes = [8, 16], strides = [1, 1]} : vector<16x16xf32> to vector<8x16xf32>
    %75 = arith.truncf %74 : vector<8x16xf32> to vector<8x16xbf16>
    %76 = arith.truncf %73 : vector<8x8xf32> to vector<8x8xbf16>
    %cst_22 = arith.constant dense<0.000000e+00> : vector<8x16xf32>
    %77 = tpu.matmul %76, %75, %cst_22 {dimension_numbers = #tpu.dot_dimension_numbers<[1], [0], [0], [1], [0, 0, 1, 1], [], []>} : vector<8x8xbf16>, vector<8x16xbf16>, vector<8x16xf32> -> vector<8x16xf32>
    %78 = arith.addf %53, %77 : vector<8x16xf32>
    %79 = vector.extract_strided_slice %23 {offsets = [8, 0], sizes = [8, 8], strides = [1, 1]} : vector<32x16xf32> to vector<8x8xf32>
    %80 = vector.extract_strided_slice %24 {offsets = [8, 0], sizes = [8, 8], strides = [1, 1]} : vector<32x16xf32> to vector<8x8xf32>
    %81 = tpu.transpose %80, [1, 0] : vector<8x8xf32> -> vector<8x8xf32>
    %82 = vector.extract_strided_slice %25 {offsets = [8, 0], sizes = [8, 8], strides = [1, 1]} : vector<32x16xf32> to vector<8x8xf32>
    %83 = arith.truncf %79 : vector<8x8xf32> to vector<8x8xbf16>
    %84 = arith.truncf %81 : vector<8x8xf32> to vector<8x8xbf16>
    %cst_23 = arith.constant dense<0.000000e+00> : vector<8x8xf32>
    %85 = tpu.matmul %83, %84, %cst_23 {dimension_numbers = #tpu.dot_dimension_numbers<[1], [0], [0], [1], [0, 0, 1, 1], [], []>} : vector<8x8xbf16>, vector<8x8xbf16>, vector<8x8xf32> -> vector<8x8xf32>
    %cst_24 = arith.constant dense<0xFF800000> : vector<8xf32>
    %86 = vector.multi_reduction <maximumf>, %85, %cst_24 [1] : vector<8x8xf32> to vector<8xf32>
    %87 = vector.shape_cast %86 : vector<8xf32> to vector<8x1xf32>
    %88 = vector.broadcast %87 : vector<8x1xf32> to vector<8x8xf32>
    %89 = arith.subf %85, %88 : vector<8x8xf32>
    %90 = math.exp %89 : vector<8x8xf32>
    %cst_25 = arith.constant dense<0.000000e+00> : vector<8xf32>
    %91 = vector.multi_reduction <add>, %90, %cst_25 [1] : vector<8x8xf32> to vector<8xf32>
    %92 = vector.shape_cast %91 : vector<8xf32> to vector<8x1xf32>
    %93 = tpu.reciprocal %92 {approx = true} : vector<8x1xf32> -> vector<8x1xf32>
    %94 = vector.broadcast %93 : vector<8x1xf32> to vector<8x8xf32>
    %95 = arith.mulf %90, %94 : vector<8x8xf32>
    %96 = arith.truncf %95 : vector<8x8xf32> to vector<8x8xbf16>
    %97 = arith.truncf %82 : vector<8x8xf32> to vector<8x8xbf16>
    %cst_26 = arith.constant dense<0.000000e+00> : vector<8x8xf32>
    %98 = tpu.matmul %96, %97, %cst_26 {dimension_numbers = #tpu.dot_dimension_numbers<[1], [0], [0], [1], [0, 0, 1, 1], [], []>} : vector<8x8xbf16>, vector<8x8xbf16>, vector<8x8xf32> -> vector<8x8xf32>
    %99 = vector.extract_strided_slice %26 {offsets = [0, 0], sizes = [8, 16], strides = [1, 1]} : vector<16x16xf32> to vector<8x16xf32>
    %100 = arith.truncf %99 : vector<8x16xf32> to vector<8x16xbf16>
    %101 = arith.truncf %98 : vector<8x8xf32> to vector<8x8xbf16>
    %cst_27 = arith.constant dense<0.000000e+00> : vector<8x16xf32>
    %102 = tpu.matmul %101, %100, %cst_27 {dimension_numbers = #tpu.dot_dimension_numbers<[1], [0], [0], [1], [0, 0, 1, 1], [], []>} : vector<8x8xbf16>, vector<8x16xbf16>, vector<8x16xf32> -> vector<8x16xf32>
    %103 = vector.broadcast %27 : vector<1x16xf32> to vector<8x16xf32>
    %104 = arith.addf %103, %102 : vector<8x16xf32>
    %105 = vector.extract_strided_slice %23 {offsets = [8, 8], sizes = [8, 8], strides = [1, 1]} : vector<32x16xf32> to vector<8x8xf32>
    %106 = vector.extract_strided_slice %24 {offsets = [8, 8], sizes = [8, 8], strides = [1, 1]} : vector<32x16xf32> to vector<8x8xf32>
    %107 = tpu.transpose %106, [1, 0] : vector<8x8xf32> -> vector<8x8xf32>
    %108 = vector.extract_strided_slice %25 {offsets = [8, 8], sizes = [8, 8], strides = [1, 1]} : vector<32x16xf32> to vector<8x8xf32>
    %109 = arith.truncf %105 : vector<8x8xf32> to vector<8x8xbf16>
    %110 = arith.truncf %107 : vector<8x8xf32> to vector<8x8xbf16>
    %cst_28 = arith.constant dense<0.000000e+00> : vector<8x8xf32>
    %111 = tpu.matmul %109, %110, %cst_28 {dimension_numbers = #tpu.dot_dimension_numbers<[1], [0], [0], [1], [0, 0, 1, 1], [], []>} : vector<8x8xbf16>, vector<8x8xbf16>, vector<8x8xf32> -> vector<8x8xf32>
    %cst_29 = arith.constant dense<0xFF800000> : vector<8xf32>
    %112 = vector.multi_reduction <maximumf>, %111, %cst_29 [1] : vector<8x8xf32> to vector<8xf32>
    %113 = vector.shape_cast %112 : vector<8xf32> to vector<8x1xf32>
    %114 = vector.broadcast %113 : vector<8x1xf32> to vector<8x8xf32>
    %115 = arith.subf %111, %114 : vector<8x8xf32>
    %116 = math.exp %115 : vector<8x8xf32>
    %cst_30 = arith.constant dense<0.000000e+00> : vector<8xf32>
    %117 = vector.multi_reduction <add>, %116, %cst_30 [1] : vector<8x8xf32> to vector<8xf32>
    %118 = vector.shape_cast %117 : vector<8xf32> to vector<8x1xf32>
    %119 = tpu.reciprocal %118 {approx = true} : vector<8x1xf32> -> vector<8x1xf32>
    %120 = vector.broadcast %119 : vector<8x1xf32> to vector<8x8xf32>
    %121 = arith.mulf %116, %120 : vector<8x8xf32>
    %122 = arith.truncf %121 : vector<8x8xf32> to vector<8x8xbf16>
    %123 = arith.truncf %108 : vector<8x8xf32> to vector<8x8xbf16>
    %cst_31 = arith.constant dense<0.000000e+00> : vector<8x8xf32>
    %124 = tpu.matmul %122, %123, %cst_31 {dimension_numbers = #tpu.dot_dimension_numbers<[1], [0], [0], [1], [0, 0, 1, 1], [], []>} : vector<8x8xbf16>, vector<8x8xbf16>, vector<8x8xf32> -> vector<8x8xf32>
    %125 = vector.extract_strided_slice %26 {offsets = [8, 0], sizes = [8, 16], strides = [1, 1]} : vector<16x16xf32> to vector<8x16xf32>
    %126 = arith.truncf %125 : vector<8x16xf32> to vector<8x16xbf16>
    %127 = arith.truncf %124 : vector<8x8xf32> to vector<8x8xbf16>
    %cst_32 = arith.constant dense<0.000000e+00> : vector<8x16xf32>
    %128 = tpu.matmul %127, %126, %cst_32 {dimension_numbers = #tpu.dot_dimension_numbers<[1], [0], [0], [1], [0, 0, 1, 1], [], []>} : vector<8x8xbf16>, vector<8x16xbf16>, vector<8x16xf32> -> vector<8x16xf32>
    %129 = arith.addf %104, %128 : vector<8x16xf32>
    %130 = vector.extract_strided_slice %23 {offsets = [16, 0], sizes = [8, 8], strides = [1, 1]} : vector<32x16xf32> to vector<8x8xf32>
    %131 = vector.extract_strided_slice %24 {offsets = [16, 0], sizes = [8, 8], strides = [1, 1]} : vector<32x16xf32> to vector<8x8xf32>
    %132 = tpu.transpose %131, [1, 0] : vector<8x8xf32> -> vector<8x8xf32>
    %133 = vector.extract_strided_slice %25 {offsets = [16, 0], sizes = [8, 8], strides = [1, 1]} : vector<32x16xf32> to vector<8x8xf32>
    %134 = arith.truncf %130 : vector<8x8xf32> to vector<8x8xbf16>
    %135 = arith.truncf %132 : vector<8x8xf32> to vector<8x8xbf16>
    %cst_33 = arith.constant dense<0.000000e+00> : vector<8x8xf32>
    %136 = tpu.matmul %134, %135, %cst_33 {dimension_numbers = #tpu.dot_dimension_numbers<[1], [0], [0], [1], [0, 0, 1, 1], [], []>} : vector<8x8xbf16>, vector<8x8xbf16>, vector<8x8xf32> -> vector<8x8xf32>
    %cst_34 = arith.constant dense<0xFF800000> : vector<8xf32>
    %137 = vector.multi_reduction <maximumf>, %136, %cst_34 [1] : vector<8x8xf32> to vector<8xf32>
    %138 = vector.shape_cast %137 : vector<8xf32> to vector<8x1xf32>
    %139 = vector.broadcast %138 : vector<8x1xf32> to vector<8x8xf32>
    %140 = arith.subf %136, %139 : vector<8x8xf32>
    %141 = math.exp %140 : vector<8x8xf32>
    %cst_35 = arith.constant dense<0.000000e+00> : vector<8xf32>
    %142 = vector.multi_reduction <add>, %141, %cst_35 [1] : vector<8x8xf32> to vector<8xf32>
    %143 = vector.shape_cast %142 : vector<8xf32> to vector<8x1xf32>
    %144 = tpu.reciprocal %143 {approx = true} : vector<8x1xf32> -> vector<8x1xf32>
    %145 = vector.broadcast %144 : vector<8x1xf32> to vector<8x8xf32>
    %146 = arith.mulf %141, %145 : vector<8x8xf32>
    %147 = arith.truncf %146 : vector<8x8xf32> to vector<8x8xbf16>
    %148 = arith.truncf %133 : vector<8x8xf32> to vector<8x8xbf16>
    %cst_36 = arith.constant dense<0.000000e+00> : vector<8x8xf32>
    %149 = tpu.matmul %147, %148, %cst_36 {dimension_numbers = #tpu.dot_dimension_numbers<[1], [0], [0], [1], [0, 0, 1, 1], [], []>} : vector<8x8xbf16>, vector<8x8xbf16>, vector<8x8xf32> -> vector<8x8xf32>
    %150 = vector.extract_strided_slice %26 {offsets = [0, 0], sizes = [8, 16], strides = [1, 1]} : vector<16x16xf32> to vector<8x16xf32>
    %151 = arith.truncf %150 : vector<8x16xf32> to vector<8x16xbf16>
    %152 = arith.truncf %149 : vector<8x8xf32> to vector<8x8xbf16>
    %cst_37 = arith.constant dense<0.000000e+00> : vector<8x16xf32>
    %153 = tpu.matmul %152, %151, %cst_37 {dimension_numbers = #tpu.dot_dimension_numbers<[1], [0], [0], [1], [0, 0, 1, 1], [], []>} : vector<8x8xbf16>, vector<8x16xbf16>, vector<8x16xf32> -> vector<8x16xf32>
    %154 = vector.broadcast %27 : vector<1x16xf32> to vector<8x16xf32>
    %155 = arith.addf %154, %153 : vector<8x16xf32>
    %156 = vector.extract_strided_slice %23 {offsets = [16, 8], sizes = [8, 8], strides = [1, 1]} : vector<32x16xf32> to vector<8x8xf32>
    %157 = vector.extract_strided_slice %24 {offsets = [16, 8], sizes = [8, 8], strides = [1, 1]} : vector<32x16xf32> to vector<8x8xf32>
    %158 = tpu.transpose %157, [1, 0] : vector<8x8xf32> -> vector<8x8xf32>
    %159 = vector.extract_strided_slice %25 {offsets = [16, 8], sizes = [8, 8], strides = [1, 1]} : vector<32x16xf32> to vector<8x8xf32>
    %160 = arith.truncf %156 : vector<8x8xf32> to vector<8x8xbf16>
    %161 = arith.truncf %158 : vector<8x8xf32> to vector<8x8xbf16>
    %cst_38 = arith.constant dense<0.000000e+00> : vector<8x8xf32>
    %162 = tpu.matmul %160, %161, %cst_38 {dimension_numbers = #tpu.dot_dimension_numbers<[1], [0], [0], [1], [0, 0, 1, 1], [], []>} : vector<8x8xbf16>, vector<8x8xbf16>, vector<8x8xf32> -> vector<8x8xf32>
    %cst_39 = arith.constant dense<0xFF800000> : vector<8xf32>
    %163 = vector.multi_reduction <maximumf>, %162, %cst_39 [1] : vector<8x8xf32> to vector<8xf32>
    %164 = vector.shape_cast %163 : vector<8xf32> to vector<8x1xf32>
    %165 = vector.broadcast %164 : vector<8x1xf32> to vector<8x8xf32>
    %166 = arith.subf %162, %165 : vector<8x8xf32>
    %167 = math.exp %166 : vector<8x8xf32>
    %cst_40 = arith.constant dense<0.000000e+00> : vector<8xf32>
    %168 = vector.multi_reduction <add>, %167, %cst_40 [1] : vector<8x8xf32> to vector<8xf32>
    %169 = vector.shape_cast %168 : vector<8xf32> to vector<8x1xf32>
    %170 = tpu.reciprocal %169 {approx = true} : vector<8x1xf32> -> vector<8x1xf32>
    %171 = vector.broadcast %170 : vector<8x1xf32> to vector<8x8xf32>
    %172 = arith.mulf %167, %171 : vector<8x8xf32>
    %173 = arith.truncf %172 : vector<8x8xf32> to vector<8x8xbf16>
    %174 = arith.truncf %159 : vector<8x8xf32> to vector<8x8xbf16>
    %cst_41 = arith.constant dense<0.000000e+00> : vector<8x8xf32>
    %175 = tpu.matmul %173, %174, %cst_41 {dimension_numbers = #tpu.dot_dimension_numbers<[1], [0], [0], [1], [0, 0, 1, 1], [], []>} : vector<8x8xbf16>, vector<8x8xbf16>, vector<8x8xf32> -> vector<8x8xf32>
    %176 = vector.extract_strided_slice %26 {offsets = [8, 0], sizes = [8, 16], strides = [1, 1]} : vector<16x16xf32> to vector<8x16xf32>
    %177 = arith.truncf %176 : vector<8x16xf32> to vector<8x16xbf16>
    %178 = arith.truncf %175 : vector<8x8xf32> to vector<8x8xbf16>
    %cst_42 = arith.constant dense<0.000000e+00> : vector<8x16xf32>
    %179 = tpu.matmul %178, %177, %cst_42 {dimension_numbers = #tpu.dot_dimension_numbers<[1], [0], [0], [1], [0, 0, 1, 1], [], []>} : vector<8x8xbf16>, vector<8x16xbf16>, vector<8x16xf32> -> vector<8x16xf32>
    %180 = arith.addf %155, %179 : vector<8x16xf32>
    %181 = vector.extract_strided_slice %23 {offsets = [24, 0], sizes = [8, 8], strides = [1, 1]} : vector<32x16xf32> to vector<8x8xf32>
    %182 = vector.extract_strided_slice %24 {offsets = [24, 0], sizes = [8, 8], strides = [1, 1]} : vector<32x16xf32> to vector<8x8xf32>
    %183 = tpu.transpose %182, [1, 0] : vector<8x8xf32> -> vector<8x8xf32>
    %184 = vector.extract_strided_slice %25 {offsets = [24, 0], sizes = [8, 8], strides = [1, 1]} : vector<32x16xf32> to vector<8x8xf32>
    %185 = arith.truncf %181 : vector<8x8xf32> to vector<8x8xbf16>
    %186 = arith.truncf %183 : vector<8x8xf32> to vector<8x8xbf16>
    %cst_43 = arith.constant dense<0.000000e+00> : vector<8x8xf32>
    %187 = tpu.matmul %185, %186, %cst_43 {dimension_numbers = #tpu.dot_dimension_numbers<[1], [0], [0], [1], [0, 0, 1, 1], [], []>} : vector<8x8xbf16>, vector<8x8xbf16>, vector<8x8xf32> -> vector<8x8xf32>
    %cst_44 = arith.constant dense<0xFF800000> : vector<8xf32>
    %188 = vector.multi_reduction <maximumf>, %187, %cst_44 [1] : vector<8x8xf32> to vector<8xf32>
    %189 = vector.shape_cast %188 : vector<8xf32> to vector<8x1xf32>
    %190 = vector.broadcast %189 : vector<8x1xf32> to vector<8x8xf32>
    %191 = arith.subf %187, %190 : vector<8x8xf32>
    %192 = math.exp %191 : vector<8x8xf32>
    %cst_45 = arith.constant dense<0.000000e+00> : vector<8xf32>
    %193 = vector.multi_reduction <add>, %192, %cst_45 [1] : vector<8x8xf32> to vector<8xf32>
    %194 = vector.shape_cast %193 : vector<8xf32> to vector<8x1xf32>
    %195 = tpu.reciprocal %194 {approx = true} : vector<8x1xf32> -> vector<8x1xf32>
    %196 = vector.broadcast %195 : vector<8x1xf32> to vector<8x8xf32>
    %197 = arith.mulf %192, %196 : vector<8x8xf32>
    %198 = arith.truncf %197 : vector<8x8xf32> to vector<8x8xbf16>
    %199 = arith.truncf %184 : vector<8x8xf32> to vector<8x8xbf16>
    %cst_46 = arith.constant dense<0.000000e+00> : vector<8x8xf32>
    %200 = tpu.matmul %198, %199, %cst_46 {dimension_numbers = #tpu.dot_dimension_numbers<[1], [0], [0], [1], [0, 0, 1, 1], [], []>} : vector<8x8xbf16>, vector<8x8xbf16>, vector<8x8xf32> -> vector<8x8xf32>
    %201 = vector.extract_strided_slice %26 {offsets = [0, 0], sizes = [8, 16], strides = [1, 1]} : vector<16x16xf32> to vector<8x16xf32>
    %202 = arith.truncf %201 : vector<8x16xf32> to vector<8x16xbf16>
    %203 = arith.truncf %200 : vector<8x8xf32> to vector<8x8xbf16>
    %cst_47 = arith.constant dense<0.000000e+00> : vector<8x16xf32>
    %204 = tpu.matmul %203, %202, %cst_47 {dimension_numbers = #tpu.dot_dimension_numbers<[1], [0], [0], [1], [0, 0, 1, 1], [], []>} : vector<8x8xbf16>, vector<8x16xbf16>, vector<8x16xf32> -> vector<8x16xf32>
    %205 = vector.broadcast %27 : vector<1x16xf32> to vector<8x16xf32>
    %206 = arith.addf %205, %204 : vector<8x16xf32>
    %207 = vector.extract_strided_slice %23 {offsets = [24, 8], sizes = [8, 8], strides = [1, 1]} : vector<32x16xf32> to vector<8x8xf32>
    %208 = vector.extract_strided_slice %24 {offsets = [24, 8], sizes = [8, 8], strides = [1, 1]} : vector<32x16xf32> to vector<8x8xf32>
    %209 = tpu.transpose %208, [1, 0] : vector<8x8xf32> -> vector<8x8xf32>
    %210 = vector.extract_strided_slice %25 {offsets = [24, 8], sizes = [8, 8], strides = [1, 1]} : vector<32x16xf32> to vector<8x8xf32>
    %211 = arith.truncf %207 : vector<8x8xf32> to vector<8x8xbf16>
    %212 = arith.truncf %209 : vector<8x8xf32> to vector<8x8xbf16>
    %cst_48 = arith.constant dense<0.000000e+00> : vector<8x8xf32>
    %213 = tpu.matmul %211, %212, %cst_48 {dimension_numbers = #tpu.dot_dimension_numbers<[1], [0], [0], [1], [0, 0, 1, 1], [], []>} : vector<8x8xbf16>, vector<8x8xbf16>, vector<8x8xf32> -> vector<8x8xf32>
    %cst_49 = arith.constant dense<0xFF800000> : vector<8xf32>
    %214 = vector.multi_reduction <maximumf>, %213, %cst_49 [1] : vector<8x8xf32> to vector<8xf32>
    %215 = vector.shape_cast %214 : vector<8xf32> to vector<8x1xf32>
    %216 = vector.broadcast %215 : vector<8x1xf32> to vector<8x8xf32>
    %217 = arith.subf %213, %216 : vector<8x8xf32>
    %218 = math.exp %217 : vector<8x8xf32>
    %cst_50 = arith.constant dense<0.000000e+00> : vector<8xf32>
    %219 = vector.multi_reduction <add>, %218, %cst_50 [1] : vector<8x8xf32> to vector<8xf32>
    %220 = vector.shape_cast %219 : vector<8xf32> to vector<8x1xf32>
    %221 = tpu.reciprocal %220 {approx = true} : vector<8x1xf32> -> vector<8x1xf32>
    %222 = vector.broadcast %221 : vector<8x1xf32> to vector<8x8xf32>
    %223 = arith.mulf %218, %222 : vector<8x8xf32>
    %224 = arith.truncf %223 : vector<8x8xf32> to vector<8x8xbf16>
    %225 = arith.truncf %210 : vector<8x8xf32> to vector<8x8xbf16>
    %cst_51 = arith.constant dense<0.000000e+00> : vector<8x8xf32>
    %226 = tpu.matmul %224, %225, %cst_51 {dimension_numbers = #tpu.dot_dimension_numbers<[1], [0], [0], [1], [0, 0, 1, 1], [], []>} : vector<8x8xbf16>, vector<8x8xbf16>, vector<8x8xf32> -> vector<8x8xf32>
    %227 = vector.extract_strided_slice %26 {offsets = [8, 0], sizes = [8, 16], strides = [1, 1]} : vector<16x16xf32> to vector<8x16xf32>
    %228 = arith.truncf %227 : vector<8x16xf32> to vector<8x16xbf16>
    %229 = arith.truncf %226 : vector<8x8xf32> to vector<8x8xbf16>
    %cst_52 = arith.constant dense<0.000000e+00> : vector<8x16xf32>
    %230 = tpu.matmul %229, %228, %cst_52 {dimension_numbers = #tpu.dot_dimension_numbers<[1], [0], [0], [1], [0, 0, 1, 1], [], []>} : vector<8x8xbf16>, vector<8x16xbf16>, vector<8x16xf32> -> vector<8x16xf32>
    %231 = arith.addf %206, %230 : vector<8x16xf32>
    %232 = tpu.concatenate %78, %129, %180, %231 in 0 : vector<8x16xf32>, vector<8x16xf32>, vector<8x16xf32>, vector<8x16xf32> -> vector<32x16xf32>
    %233 = arith.addf %14, %232 : vector<32x16xf32>
    %cst_53 = arith.constant dense<0.000000e+00> : vector<32xf32>
    %234 = vector.multi_reduction <add>, %233, %cst_53 [1] : vector<32x16xf32> to vector<32xf32>
    %235 = vector.shape_cast %234 : vector<32xf32> to vector<32x1xf32>
    %cst_54 = arith.constant 1.600000e+01 : f32
    %236 = vector.broadcast %cst_54 : f32 to vector<32x1xf32>
    %237 = arith.divf %235, %236 : vector<32x1xf32>
    %238 = vector.broadcast %237 : vector<32x1xf32> to vector<32x16xf32>
    %239 = arith.subf %233, %238 : vector<32x16xf32>
    %240 = arith.mulf %239, %239 : vector<32x16xf32>
    %cst_55 = arith.constant dense<0.000000e+00> : vector<32xf32>
    %241 = vector.multi_reduction <add>, %240, %cst_55 [1] : vector<32x16xf32> to vector<32xf32>
    %242 = vector.shape_cast %241 : vector<32xf32> to vector<32x1xf32>
    %cst_56 = arith.constant 1.600000e+01 : f32
    %243 = vector.broadcast %cst_56 : f32 to vector<32x1xf32>
    %244 = arith.divf %242, %243 : vector<32x1xf32>
    %245 = vector.broadcast %237 : vector<32x1xf32> to vector<32x16xf32>
    %246 = arith.subf %233, %245 : vector<32x16xf32>
    %cst_57 = arith.constant 9.99999974E-6 : f32
    %247 = vector.broadcast %cst_57 : f32 to vector<32x1xf32>
    %248 = arith.addf %244, %247 : vector<32x1xf32>
    %249 = math.rsqrt %248 : vector<32x1xf32>
    %250 = vector.broadcast %249 : vector<32x1xf32> to vector<32x16xf32>
    %251 = arith.mulf %246, %250 : vector<32x16xf32>
    %c0_58 = arith.constant 0 : index
    %c0_59 = arith.constant 0 : index
    %252 = vector.load %arg7[%c0_58, %c0_59] : memref<1x16xf32, #tpu.memory_space<vmem>>, vector<1x16xf32>
    %253 = vector.broadcast %252 : vector<1x16xf32> to vector<32x16xf32>
    %254 = arith.mulf %251, %253 : vector<32x16xf32>
    %c0_60 = arith.constant 0 : index
    %c0_61 = arith.constant 0 : index
    %255 = vector.load %arg8[%c0_60, %c0_61] : memref<1x16xf32, #tpu.memory_space<vmem>>, vector<1x16xf32>
    %256 = vector.broadcast %255 : vector<1x16xf32> to vector<32x16xf32>
    %257 = arith.addf %254, %256 : vector<32x16xf32>
    %258 = arith.truncf %257 : vector<32x16xf32> to vector<32x16xbf16>
    %c0_62 = arith.constant 0 : index
    %c0_63 = arith.constant 0 : index
    %259 = vector.load %arg9[%c0_62, %c0_63] : memref<16x2048xbf16, #tpu.memory_space<vmem>>, vector<16x2048xbf16>
    %cst_64 = arith.constant dense<0.000000e+00> : vector<32x2048xf32>
    %260 = tpu.matmul %258, %259, %cst_64 {dimension_numbers = #tpu.dot_dimension_numbers<[1], [0], [0], [1], [0, 0, 1, 1], [], []>} : vector<32x16xbf16>, vector<16x2048xbf16>, vector<32x2048xf32> -> vector<32x2048xf32>
    %c0_65 = arith.constant 0 : index
    %c0_66 = arith.constant 0 : index
    %261 = vector.load %arg10[%c0_65, %c0_66] : memref<1x2048xf32, #tpu.memory_space<vmem>>, vector<1x2048xf32>
    %262 = vector.broadcast %261 : vector<1x2048xf32> to vector<32x2048xf32>
    %263 = arith.addf %260, %262 : vector<32x2048xf32>
    %cst_67 = arith.constant 0.000000e+00 : f32
    %264 = vector.broadcast %cst_67 : f32 to vector<32x2048xf32>
    %265 = arith.maximumf %263, %264 : vector<32x2048xf32>
    %266 = arith.truncf %265 : vector<32x2048xf32> to vector<32x2048xbf16>
    %c0_68 = arith.constant 0 : index
    %c0_69 = arith.constant 0 : index
    %267 = vector.load %arg11[%c0_68, %c0_69] : memref<2048x16xbf16, #tpu.memory_space<vmem>>, vector<2048x16xbf16>
    %cst_70 = arith.constant dense<0.000000e+00> : vector<32x16xf32>
    %268 = tpu.matmul %266, %267, %cst_70 {dimension_numbers = #tpu.dot_dimension_numbers<[1], [0], [0], [1], [0, 0, 1, 1], [], []>} : vector<32x2048xbf16>, vector<2048x16xbf16>, vector<32x16xf32> -> vector<32x16xf32>
    %c0_71 = arith.constant 0 : index
    %c0_72 = arith.constant 0 : index
    %269 = vector.load %arg12[%c0_71, %c0_72] : memref<1x16xf32, #tpu.memory_space<vmem>>, vector<1x16xf32>
    %270 = vector.broadcast %269 : vector<1x16xf32> to vector<32x16xf32>
    %271 = arith.addf %268, %270 : vector<32x16xf32>
    %272 = arith.addf %257, %271 : vector<32x16xf32>
    %cst_73 = arith.constant dense<0.000000e+00> : vector<32xf32>
    %273 = vector.multi_reduction <add>, %272, %cst_73 [1] : vector<32x16xf32> to vector<32xf32>
    %274 = vector.shape_cast %273 : vector<32xf32> to vector<32x1xf32>
    %cst_74 = arith.constant 1.600000e+01 : f32
    %275 = vector.broadcast %cst_74 : f32 to vector<32x1xf32>
    %276 = arith.divf %274, %275 : vector<32x1xf32>
    %277 = vector.broadcast %276 : vector<32x1xf32> to vector<32x16xf32>
    %278 = arith.subf %272, %277 : vector<32x16xf32>
    %279 = arith.mulf %278, %278 : vector<32x16xf32>
    %cst_75 = arith.constant dense<0.000000e+00> : vector<32xf32>
    %280 = vector.multi_reduction <add>, %279, %cst_75 [1] : vector<32x16xf32> to vector<32xf32>
    %281 = vector.shape_cast %280 : vector<32xf32> to vector<32x1xf32>
    %cst_76 = arith.constant 1.600000e+01 : f32
    %282 = vector.broadcast %cst_76 : f32 to vector<32x1xf32>
    %283 = arith.divf %281, %282 : vector<32x1xf32>
    %284 = vector.broadcast %276 : vector<32x1xf32> to vector<32x16xf32>
    %285 = arith.subf %272, %284 : vector<32x16xf32>
    %cst_77 = arith.constant 9.99999974E-6 : f32
    %286 = vector.broadcast %cst_77 : f32 to vector<32x1xf32>
    %287 = arith.addf %283, %286 : vector<32x1xf32>
    %288 = math.rsqrt %287 : vector<32x1xf32>
    %289 = vector.broadcast %288 : vector<32x1xf32> to vector<32x16xf32>
    %290 = arith.mulf %285, %289 : vector<32x16xf32>
    %c0_78 = arith.constant 0 : index
    %c0_79 = arith.constant 0 : index
    %291 = vector.load %arg13[%c0_78, %c0_79] : memref<1x16xf32, #tpu.memory_space<vmem>>, vector<1x16xf32>
    %292 = vector.broadcast %291 : vector<1x16xf32> to vector<32x16xf32>
    %293 = arith.mulf %290, %292 : vector<32x16xf32>
    %c0_80 = arith.constant 0 : index
    %c0_81 = arith.constant 0 : index
    %294 = vector.load %arg14[%c0_80, %c0_81] : memref<1x16xf32, #tpu.memory_space<vmem>>, vector<1x16xf32>
    %295 = vector.broadcast %294 : vector<1x16xf32> to vector<32x16xf32>
    %296 = arith.addf %293, %295 : vector<32x16xf32>
    %297 = vector.extract_strided_slice %296 {offsets = [0, 0], sizes = [8, 16], strides = [1, 1]} : vector<32x16xf32> to vector<8x16xf32>
    %c0_82 = arith.constant 0 : index
    %c0_83 = arith.constant 0 : index
    %c0_84 = arith.constant 0 : index
    %298 = vector.load %arg15[%c0_82, %c0_83, %c0_84] : memref<8x4x16xf32, #tpu.memory_space<vmem>>, vector<8x1x16xf32>
    %299 = vector.shape_cast %298 : vector<8x1x16xf32> to vector<8x16xf32>
    %300 = vector.shape_cast %297 : vector<8x16xf32> to vector<8x1x16xf32>
    tpu.vector_store %arg15[%c0_82, %c0_83, %c0_84], %300 {strides = array<i32>} : memref<8x4x16xf32, #tpu.memory_space<vmem>>, vector<8x1x16xf32>,
    %301 = vector.extract_strided_slice %296 {offsets = [8, 0], sizes = [8, 16], strides = [1, 1]} : vector<32x16xf32> to vector<8x16xf32>
    %c0_85 = arith.constant 0 : index
    %c1 = arith.constant 1 : index
    %c0_86 = arith.constant 0 : index
    %302 = vector.load %arg15[%c0_85, %c1, %c0_86] : memref<8x4x16xf32, #tpu.memory_space<vmem>>, vector<8x1x16xf32>
    %303 = vector.shape_cast %302 : vector<8x1x16xf32> to vector<8x16xf32>
    %304 = vector.shape_cast %301 : vector<8x16xf32> to vector<8x1x16xf32>
    tpu.vector_store %arg15[%c0_85, %c1, %c0_86], %304 {strides = array<i32>} : memref<8x4x16xf32, #tpu.memory_space<vmem>>, vector<8x1x16xf32>,
    %305 = vector.extract_strided_slice %296 {offsets = [16, 0], sizes = [8, 16], strides = [1, 1]} : vector<32x16xf32> to vector<8x16xf32>
    %c0_87 = arith.constant 0 : index
    %c2 = arith.constant 2 : index
    %c0_88 = arith.constant 0 : index
    %306 = vector.load %arg15[%c0_87, %c2, %c0_88] : memref<8x4x16xf32, #tpu.memory_space<vmem>>, vector<8x1x16xf32>
    %307 = vector.shape_cast %306 : vector<8x1x16xf32> to vector<8x16xf32>
    %308 = vector.shape_cast %305 : vector<8x16xf32> to vector<8x1x16xf32>
    tpu.vector_store %arg15[%c0_87, %c2, %c0_88], %308 {strides = array<i32>} : memref<8x4x16xf32, #tpu.memory_space<vmem>>, vector<8x1x16xf32>,
    %309 = vector.extract_strided_slice %296 {offsets = [24, 0], sizes = [8, 16], strides = [1, 1]} : vector<32x16xf32> to vector<8x16xf32>
    %c0_89 = arith.constant 0 : index
    %c3 = arith.constant 3 : index
    %c0_90 = arith.constant 0 : index
    %310 = vector.load %arg15[%c0_89, %c3, %c0_90] : memref<8x4x16xf32, #tpu.memory_space<vmem>>, vector<8x1x16xf32>
    %311 = vector.shape_cast %310 : vector<8x1x16xf32> to vector<8x16xf32>
    %312 = vector.shape_cast %309 : vector<8x16xf32> to vector<8x1x16xf32>
    tpu.vector_store %arg15[%c0_89, %c3, %c0_90], %312 {strides = array<i32>} : memref<8x4x16xf32, #tpu.memory_space<vmem>>, vector<8x1x16xf32>,
    return
  }
  func.func @transform_0(%arg0: i32) -> (i32, i32, i32) {
    %c0_i32 = arith.constant 0 : i32
    %c0_i32_0 = arith.constant 0 : i32
    %c0_i32_1 = arith.constant 0 : i32
    %c0_i32_2 = arith.constant 0 : i32
    return %c0_i32, %c0_i32_0, %c0_i32_1 : i32, i32, i32
  }
  func.func @transform_1(%arg0: i32) -> (i32, i32) {
    %c0_i32 = arith.constant 0 : i32
    %c0_i32_0 = arith.constant 0 : i32
    %c0_i32_1 = arith.constant 0 : i32
    return %c0_i32, %c0_i32_0 : i32, i32
  }
  func.func @transform_2(%arg0: i32) -> (i32, i32) {
    %c0_i32 = arith.constant 0 : i32
    %c0_i32_0 = arith.constant 0 : i32
    %c0_i32_1 = arith.constant 0 : i32
    return %c0_i32, %c0_i32_0 : i32, i32
  }
  func.func @transform_3(%arg0: i32) -> (i32, i32) {
    %c0_i32 = arith.constant 0 : i32
    %c0_i32_0 = arith.constant 0 : i32
    %c0_i32_1 = arith.constant 0 : i32
    return %c0_i32, %c0_i32_0 : i32, i32
  }
  func.func @transform_4(%arg0: i32) -> (i32, i32) {
    %c0_i32 = arith.constant 0 : i32
    %c0_i32_0 = arith.constant 0 : i32
    %c0_i32_1 = arith.constant 0 : i32
    return %c0_i32, %c0_i32_0 : i32, i32
  }
  func.func @transform_5(%arg0: i32) -> (i32, i32) {
    %c0_i32 = arith.constant 0 : i32
    %c0_i32_0 = arith.constant 0 : i32
    %c0_i32_1 = arith.constant 0 : i32
    return %c0_i32, %c0_i32_0 : i32, i32
  }
  func.func @transform_6(%arg0: i32) -> (i32, i32) {
    %c0_i32 = arith.constant 0 : i32
    %c0_i32_0 = arith.constant 0 : i32
    %c0_i32_1 = arith.constant 0 : i32
    return %c0_i32, %c0_i32_0 : i32, i32
  }
  func.func @transform_7(%arg0: i32) -> (i32, i32) {
    %c0_i32 = arith.constant 0 : i32
    %c0_i32_0 = arith.constant 0 : i32
    %c0_i32_1 = arith.constant 0 : i32
    return %c0_i32, %c0_i32_0 : i32, i32
  }
  func.func @transform_8(%arg0: i32) -> (i32, i32) {
    %c0_i32 = arith.constant 0 : i32
    %c0_i32_0 = arith.constant 0 : i32
    %c0_i32_1 = arith.constant 0 : i32
    return %c0_i32, %c0_i32_0 : i32, i32
  }
  func.func @transform_9(%arg0: i32) -> (i32, i32) {
    %c0_i32 = arith.constant 0 : i32
    %c0_i32_0 = arith.constant 0 : i32
    %c0_i32_1 = arith.constant 0 : i32
    return %c0_i32, %c0_i32_0 : i32, i32
  }
  func.func @transform_10(%arg0: i32) -> (i32, i32) {
    %c0_i32 = arith.constant 0 : i32
    %c0_i32_0 = arith.constant 0 : i32
    %c0_i32_1 = arith.constant 0 : i32
    return %c0_i32, %c0_i32_0 : i32, i32
  }
  func.func @transform_11(%arg0: i32) -> (i32, i32) {
    %c0_i32 = arith.constant 0 : i32
    %c0_i32_0 = arith.constant 0 : i32
    %c0_i32_1 = arith.constant 0 : i32
    return %c0_i32, %c0_i32_0 : i32, i32
  }
  func.func @transform_12(%arg0: i32) -> (i32, i32) {
    %c0_i32 = arith.constant 0 : i32
    %c0_i32_0 = arith.constant 0 : i32
    %c0_i32_1 = arith.constant 0 : i32
    return %c0_i32, %c0_i32_0 : i32, i32
  }
  func.func @transform_13(%arg0: i32) -> (i32, i32) {
    %c0_i32 = arith.constant 0 : i32
    %c0_i32_0 = arith.constant 0 : i32
    %c0_i32_1 = arith.constant 0 : i32
    return %c0_i32, %c0_i32_0 : i32, i32
  }
  func.func @transform_14(%arg0: i32) -> (i32, i32, i32) {
    %c0_i32 = arith.constant 0 : i32
    %c0_i32_0 = arith.constant 0 : i32
    %c0_i32_1 = arith.constant 0 : i32
    %c0_i32_2 = arith.constant 0 : i32
    return %c0_i32, %c0_i32_0, %c0_i32_1 : i32, i32, i32
  }
}

</mosaic_0001>

<llo_original>
// kernel: tpu_custom_call.1
$region0: #{tpu_custom_call.1}
  #allocation0 [shape = 'u32[]', space=smem, size = 0x4, offset = 0x4, fixed_abs, tag = 'smem constant byte address 0x4 - core index']
  #allocation1 [shape = 'u32[72,128]{1,0:T(1,128)}', space=vmem, size = 0x9000, scoped, tag = 'internal scratch']
  %s0 = inlined_call_operand.vmem [shape: f32[8,4,16], index: 0, kind: input, shape index: {}]
  %s1 = inlined_call_operand.vmem [shape: f32[1000,16], index: 1, kind: input, shape index: {}]
  %s2 = inlined_call_operand.vmem [shape: bf16[16,48], index: 2, kind: input, shape index: {}]
  %s3 = inlined_call_operand.vmem [shape: f32[1,48], index: 3, kind: input, shape index: {}]
  %s4 = inlined_call_operand.vmem [shape: f32[16,16], index: 4, kind: input, shape index: {}]
  %s5 = inlined_call_operand.vmem [shape: f32[1,16], index: 5, kind: input, shape index: {}]
  %s6 = inlined_call_operand.vmem [shape: f32[1,16], index: 6, kind: input, shape index: {}]
  %s7 = inlined_call_operand.vmem [shape: f32[1,16], index: 7, kind: input, shape index: {}]
  %s8 = inlined_call_operand.vmem [shape: bf16[16,2048], index: 8, kind: input, shape index: {}]
  %s9 = inlined_call_operand.vmem [shape: f32[1,2048], index: 9, kind: input, shape index: {}]
  %s10 = inlined_call_operand.vmem [shape: bf16[2048,16], index: 10, kind: input, shape index: {}]
  %s11 = inlined_call_operand.vmem [shape: f32[1,16], index: 11, kind: input, shape index: {}]
  %s12 = inlined_call_operand.vmem [shape: f32[1,16], index: 12, kind: input, shape index: {}]
  %s13 = inlined_call_operand.vmem [shape: f32[1,16], index: 13, kind: input, shape index: {}]
  %s14 = inlined_call_operand.hbm [shape: f32[8,4,16], index: 14, kind: output, shape index: {}]
  %s15 = sld [smem:[#allocation0]]
  $region66: #{tpu_custom_call.1} parent=0
    _
  %s17 = ssub.s32 1, %s15
  %s18 = scalar_select 0, %s17, %s15
  $region1: #{tpu_custom_call.1} parent=0
    #allocation2 [shape = 'u8[16384]{0}', space=vmem, size = 0x4000, scoped, tag = 'output window, operand 0, single buffered']
    #allocation3 [shape = 's32[1]{0}', space=sflag, size = 0x4, scoped, tag = 'scoped memory for tpu_custom_call.1']
    %19 = vsyncpa [#allocation3], 0
    // Predicated region
    $region2: #{tpu_custom_call.1} parent=1 // pred_check
      _
    $region3: #{tpu_custom_call.1} parent=1 // pred_check_branch
      %21 = sbr.rel (0) target = $region5
    $region4: #{tpu_custom_call.1} parent=1 // pred_region
      _
    $region5: #{tpu_custom_call.1} parent=1 // pred_fallthru
      _
    // Predicated region
    $region6: #{tpu_custom_call.1} parent=1 // pred_check
      _
    $region7: #{tpu_custom_call.1} parent=1 // pred_check_branch
      %23 = sbr.rel (0) target = $region9
    $region8: #{tpu_custom_call.1} parent=1 // pred_region
      _
    $region9: #{tpu_custom_call.1} parent=1 // pred_fallthru
      _
    // Predicated region
    $region10: #{tpu_custom_call.1} parent=1 // pred_check
      _
    $region11: #{tpu_custom_call.1} parent=1 // pred_check_branch
      %25 = sbr.rel (0) target = $region13
    $region12: #{tpu_custom_call.1} parent=1 // pred_region
      _
    $region13: #{tpu_custom_call.1} parent=1 // pred_fallthru
      _
    // Predicated region
    $region14: #{tpu_custom_call.1} parent=1 // pred_check
      _
    $region15: #{tpu_custom_call.1} parent=1 // pred_check_branch
      %27 = sbr.rel (0) target = $region17
    $region16: #{tpu_custom_call.1} parent=1 // pred_region
      _
    $region17: #{tpu_custom_call.1} parent=1 // pred_fallthru
      _
    // Predicated region
    $region18: #{tpu_custom_call.1} parent=1 // pred_check
      _
    $region19: #{tpu_custom_call.1} parent=1 // pred_check_branch
      %29 = sbr.rel (0) target = $region21
    $region20: #{tpu_custom_call.1} parent=1 // pred_region
      _
    $region21: #{tpu_custom_call.1} parent=1 // pred_fallthru
      _
    // Predicated region
    $region22: #{tpu_custom_call.1} parent=1 // pred_check
      _
    $region23: #{tpu_custom_call.1} parent=1 // pred_check_branch
      %31 = sbr.rel (0) target = $region25
    $region24: #{tpu_custom_call.1} parent=1 // pred_region
      _
    $region25: #{tpu_custom_call.1} parent=1 // pred_fallthru
      _
    // Predicated region
    $region26: #{tpu_custom_call.1} parent=1 // pred_check
      _
    $region27: #{tpu_custom_call.1} parent=1 // pred_check_branch
      %33 = sbr.rel (0) target = $region29
    $region28: #{tpu_custom_call.1} parent=1 // pred_region
      _
    $region29: #{tpu_custom_call.1} parent=1 // pred_fallthru
      _
    // Predicated region
    $region30: #{tpu_custom_call.1} parent=1 // pred_check
      _
    $region31: #{tpu_custom_call.1} parent=1 // pred_check_branch
      %35 = sbr.rel (0) target = $region33
    $region32: #{tpu_custom_call.1} parent=1 // pred_region
      _
    $region33: #{tpu_custom_call.1} parent=1 // pred_fallthru
      _
    // Predicated region
    $region34: #{tpu_custom_call.1} parent=1 // pred_check
      _
    $region35: #{tpu_custom_call.1} parent=1 // pred_check_branch
      %37 = sbr.rel (0) target = $region37
    $region36: #{tpu_custom_call.1} parent=1 // pred_region
      _
    $region37: #{tpu_custom_call.1} parent=1 // pred_fallthru
      _
    // Predicated region
    $region38: #{tpu_custom_call.1} parent=1 // pred_check
      _
    $region39: #{tpu_custom_call.1} parent=1 // pred_check_branch
      %39 = sbr.rel (0) target = $region41
    $region40: #{tpu_custom_call.1} parent=1 // pred_region
      _
    $region41: #{tpu_custom_call.1} parent=1 // pred_fallthru
      _
    // Predicated region
    $region42: #{tpu_custom_call.1} parent=1 // pred_check
      _
    $region43: #{tpu_custom_call.1} parent=1 // pred_check_branch
      %41 = sbr.rel (0) target = $region45
    $region44: #{tpu_custom_call.1} parent=1 // pred_region
      _
    $region45: #{tpu_custom_call.1} parent=1 // pred_fallthru
      _
    // Predicated region
    $region46: #{tpu_custom_call.1} parent=1 // pred_check
      _
    $region47: #{tpu_custom_call.1} parent=1 // pred_check_branch
      %43 = sbr.rel (0) target = $region49
    $region48: #{tpu_custom_call.1} parent=1 // pred_region
      _
    $region49: #{tpu_custom_call.1} parent=1 // pred_fallthru
      _
    // Predicated region
    $region50: #{tpu_custom_call.1} parent=1 // pred_check
      _
    $region51: #{tpu_custom_call.1} parent=1 // pred_check_branch
      %45 = sbr.rel (0) target = $region53
    $region52: #{tpu_custom_call.1} parent=1 // pred_region
      _
    $region53: #{tpu_custom_call.1} parent=1 // pred_fallthru
      _
    // Predicated region
    $region54: #{tpu_custom_call.1} parent=1 // pred_check
      _
    $region55: #{tpu_custom_call.1} parent=1 // pred_check_branch
      %47 = sbr.rel (0) target = $region57
    $region56: #{tpu_custom_call.1} parent=1 // pred_region
      _
    $region57: #{tpu_custom_call.1} parent=1 // pred_fallthru
      _
    %v49 = vld [vmem:[%s0] sm:$0xf]
    %v50 = vld [vmem:[%s0 + $0x4] sm:$0xf]
    %v51 = vld [vmem:[%s0 + $0x8] sm:$0xf]
    %v52 = vld [vmem:[%s0 + $0xc] sm:$0xf]
    %v53 = vld [vmem:[%s0 + $0x10] sm:$0xf]
    %v54 = vld [vmem:[%s0 + $0x14] sm:$0xf]
    %v55 = vld [vmem:[%s0 + $0x18] sm:$0xf]
    %v56 = vld [vmem:[%s0 + $0x1c] sm:$0xf]
    %v57 = vld [vmem:[%s1] sm:$0xff]
    %v59 = vrot.slane %v57, 1
    %v60 = vrot.slane %v57, 2
    %v61 = vrot.slane %v57, 3
    %v62 = vrot.slane %v57, 4
    %v63 = vrot.slane %v57, 5
    %v64 = vrot.slane %v57, 6
    %v65 = vrot.slane %v57, 7
    %v74 = vadd.f32 %v49, %v57
    %v75 = vadd.f32 %v50, %v59
    %v76 = vadd.f32 %v51, %v60
    %v77 = vadd.f32 %v52, %v61
    %v78 = vadd.f32 %v53, %v62
    %v79 = vadd.f32 %v54, %v63
    %v80 = vadd.f32 %v55, %v64
    %v81 = vadd.f32 %v56, %v65
    %v82 = vadd.f32 %v49, %v65
    %v83 = vadd.f32 %v50, %v57
    %v84 = vadd.f32 %v51, %v59
    %v85 = vadd.f32 %v52, %v60
    %v86 = vadd.f32 %v53, %v61
    %v87 = vadd.f32 %v54, %v62
    %v88 = vadd.f32 %v55, %v63
    %v89 = vadd.f32 %v56, %v64
    %v90 = vadd.f32 %v49, %v64
    %v91 = vadd.f32 %v50, %v65
    %v92 = vadd.f32 %v51, %v57
    %v93 = vadd.f32 %v52, %v59
    %v94 = vadd.f32 %v53, %v60
    %v95 = vadd.f32 %v54, %v61
    %v96 = vadd.f32 %v55, %v62
    %v97 = vadd.f32 %v56, %v63
    %v98 = vadd.f32 %v49, %v63
    %v99 = vadd.f32 %v50, %v64
    %v100 = vadd.f32 %v51, %v65
    %v101 = vadd.f32 %v52, %v57
    %v102 = vadd.f32 %v53, %v59
    %v103 = vadd.f32 %v54, %v60
    %v104 = vadd.f32 %v55, %v61
    %v105 = vadd.f32 %v56, %v62
    %v114 = vrot.slane %v75, 7
    %vm115 = vcmask 1041409
    %v116 = vsel %vm115, %v114, %v74
    %v117 = vrot.slane %v76, 6
    %vm118 = vcmask 1042434
    %v119 = vsel %vm118, %v117, %v116
    %v120 = vrot.slane %v77, 5
    %vm121 = vcmask 1043459
    %v122 = vsel %vm121, %v120, %v119
    %v123 = vrot.slane %v78, 4
    %vm124 = vcmask 1044484
    %v125 = vsel %vm124, %v123, %v122
    %v126 = vrot.slane %v79, 3
    %vm127 = vcmask 1045509
    %v128 = vsel %vm127, %v126, %v125
    %v129 = vrot.slane %v80, 2
    %vm130 = vcmask 1046534
    %v131 = vsel %vm130, %v129, %v128
    %v132 = vrot.slane %v81, 1
    %vm133 = vcmask 1047559
    %v134 = vsel %vm133, %v132, %v131
    %v144 = vrot.slane %v82, 1
    %v145 = vsel %vm115, %v83, %v144
    %v146 = vrot.slane %v84, 7
    %v147 = vsel %vm118, %v146, %v145
    %v148 = vrot.slane %v85, 6
    %v149 = vsel %vm121, %v148, %v147
    %v150 = vrot.slane %v86, 5
    %v151 = vsel %vm124, %v150, %v149
    %v152 = vrot.slane %v87, 4
    %v153 = vsel %vm127, %v152, %v151
    %v154 = vrot.slane %v88, 3
    %v155 = vsel %vm130, %v154, %v153
    %v156 = vrot.slane %v89, 2
    %v157 = vsel %vm133, %v156, %v155
    %v167 = vrot.slane %v90, 2
    %v168 = vrot.slane %v91, 1
    %v169 = vsel %vm115, %v168, %v167
    %v170 = vsel %vm118, %v92, %v169
    %v171 = vrot.slane %v93, 7
    %v172 = vsel %vm121, %v171, %v170
    %v173 = vrot.slane %v94, 6
    %v174 = vsel %vm124, %v173, %v172
    %v175 = vrot.slane %v95, 5
    %v176 = vsel %vm127, %v175, %v174
    %v177 = vrot.slane %v96, 4
    %v178 = vsel %vm130, %v177, %v176
    %v179 = vrot.slane %v97, 3
    %v180 = vsel %vm133, %v179, %v178
    %v190 = vrot.slane %v98, 3
    %v191 = vrot.slane %v99, 2
    %v192 = vsel %vm115, %v191, %v190
    %v193 = vrot.slane %v100, 1
    %v194 = vsel %vm118, %v193, %v192
    %v195 = vsel %vm121, %v101, %v194
    %v196 = vrot.slane %v102, 7
    %v197 = vsel %vm124, %v196, %v195
    %v198 = vrot.slane %v103, 6
    %v199 = vsel %vm127, %v198, %v197
    %v200 = vrot.slane %v104, 5
    %v201 = vsel %vm130, %v200, %v199
    %v202 = vrot.slane %v105, 4
    %v203 = vsel %vm133, %v202, %v201
    %v205 = vpack.c.bf16 %v157, %v134
    %v206 = vpack.c.bf16 %v203, %v180
    %v207 = vld [vmem:[%s2] sm:$0xf]
    %v208 = vld [vmem:[%s2 + $0x4] sm:$0xf]
    %v209 = vld [vmem:[%s3] sm:$0x1]
    %v211 = vperm.slane %v209, 0
    %v215 = vunpack.c.l.b16 %v207
    %v216 = vunpack.c.l.b16 %v208
    %v217 = vpack.c.b16 %v216, %v215
    %vm219 = vcmask 130048
    %v221 = vsel %vm219, %v205, 0
    %v224 = vsel %vm219, %v206, 0
    %226 = vmatpush.bf16.msra.mxu0 0
    %227 = vmatpush.bf16.msra.mxu0 0
    %228 = vmatpush.bf16.msra.mxu0 0
    %229 = vmatpush.bf16.msra.mxu0 0
    %230 = vmatpush.bf16.msra.mxu0 0
    %231 = vmatpush.bf16.msra.mxu0 0
    %232 = vmatpush.bf16.msra.mxu0 0
    %233 = vmatpush.bf16.msra.mxu0 %v217
    %234 = vmatmul.bf16.gmra.mxu0 %v221
    %v235 = vpop.f32.mrf.mxu0
    %v236 = vadd.f32 %v211, %v235
    %v237 = vpop.f32.mrf.mxu0
    %v238 = vadd.f32 %v211, %v237
    %239 = vmatmul.bf16.gmra.mxu0 %v224
    %v240 = vpop.f32.mrf.mxu0
    %v241 = vadd.f32 %v211, %v240
    %v242 = vpop.f32.mrf.mxu0
    %v243 = vadd.f32 %v211, %v242
    %244 = vdwg.mxu0
    %v245 = vmul.f32 %v236, 0.35355338
    %v246 = vmul.f32 %v238, 0.35355338
    %v247 = vmul.f32 %v241, 0.35355338
    %v248 = vmul.f32 %v243, 0.35355338
    %v249 = vld [vmem:[%s4] sm:$0xff]
    %v250 = vld [vmem:[%s4 + $0x8] sm:$0xff]
    %v251 = vld [vmem:[%s5] sm:$0x1]
    %253 = vrot.lane.b32.xlu0 %v236, 112
    %v254 = vpop.permute.xlu0 %253
    %256 = vxpose.xlu0.b32.start [1/16] %v254, 128
    %257 = vxpose.xlu0.b32.cont [2/16] 0.0, 128
    %258 = vxpose.xlu0.b32.cont [3/16] 0.0, 128
    %259 = vxpose.xlu0.b32.cont [4/16] 0.0, 128
    %260 = vxpose.xlu0.b32.cont [5/16] 0.0, 128
    %261 = vxpose.xlu0.b32.cont [6/16] 0.0, 128
    %262 = vxpose.xlu0.b32.cont [7/16] 0.0, 128
    %263 = vxpose.xlu0.b32.cont [8/16] 0.0, 128
    %264 = vxpose.xlu0.b32.cont [9/16] 0.0, 128
    %265 = vxpose.xlu0.b32.cont [10/16] 0.0, 128
    %266 = vxpose.xlu0.b32.cont [11/16] 0.0, 128
    %267 = vxpose.xlu0.b32.cont [12/16] 0.0, 128
    %268 = vxpose.xlu0.b32.cont [13/16] 0.0, 128
    %269 = vxpose.xlu0.b32.cont [14/16] 0.0, 128
    %270 = vxpose.xlu0.b32.cont [15/16] 0.0, 128
    %271 = vxpose.xlu0.b32.end [16/16] 0.0, 128
    %v272 = vpop.trf.xlu0
    %v273 = vpop.trf.xlu0
    %v274 = vpop.trf.xlu0
    %v275 = vpop.trf.xlu0
    %v276 = vpop.trf.xlu0
    %v277 = vpop.trf.xlu0
    %v278 = vpop.trf.xlu0
    %v279 = vpop.trf.xlu0
    %v280 = vpop.trf.xlu0
    %v281 = vpop.trf.xlu0
    %v282 = vpop.trf.xlu0
    %v283 = vpop.trf.xlu0
    %v284 = vpop.trf.xlu0
    %v285 = vpop.trf.xlu0
    %v286 = vpop.trf.xlu0
    %v287 = vpop.trf.xlu0
    %v288 = vpack.c.bf16 %v245, %v245
    %v289 = vpack.c.bf16 %v272, %v272
    %vm290 = vcmask 64512
    %v292 = vsel %vm290, %v288, 0
    %vm294 = vcmask 1043456
    %v296 = vsel %vm294, %v289, 0
    %298 = vmatpush.bf16.msra.mxu0 0
    %299 = vmatpush.bf16.msra.mxu0 0
    %300 = vmatpush.bf16.msra.mxu0 0
    %301 = vmatpush.bf16.msra.mxu0 0
    %302 = vmatpush.bf16.msra.mxu0 0
    %303 = vmatpush.bf16.msra.mxu0 0
    %304 = vmatpush.bf16.msra.mxu0 0
    %305 = vmatpush.bf16.msra.mxu0 %v296
    %306 = vmatmul.bf16.gmra.mxu0 %v292
    %v307 = vpop.f32.mrf.mxu0
    %v308 = vadd.f32 0.0, %v307
    %v309 = vpop.f32.mrf.mxu0
    %310 = vdwg.mxu0
    %v311 = vsel %vm290, %v308, -inf
    %312 = vmax.xlane.f32.xlu0 %v311
    %v313 = vpop.xlane.xlu0 %312
    %v314 = vsub.f32 %v308, %v313
    %v315 = vmul.f32 %v314, 1.442695
    %v316 = vpow.pop %v315
    %v317 = vsel %vm290, %v316, 0.0
    %318 = vadd.xlane.f32.xlu0 %v317
    %v319 = vpop.xlane.xlu0 %318
    %v320 = vrcp.pop %v319
    %v321 = vmul.f32 %v316, %v320
    %v322 = vpack.c.bf16 %v321, %v321
    %v323 = vpack.c.bf16 %v236, %v236
    %325 = vrot.lane.b32.xlu0 %v323, 96
    %v326 = vpop.permute.xlu0 %325
    %v328 = vsel %vm290, %v322, 0
    %v331 = vsel %vm294, %v326, 0
    %333 = vmatpush.bf16.msra.mxu0 0
    %334 = vmatpush.bf16.msra.mxu0 0
    %335 = vmatpush.bf16.msra.mxu0 0
    %336 = vmatpush.bf16.msra.mxu0 0
    %337 = vmatpush.bf16.msra.mxu0 0
    %338 = vmatpush.bf16.msra.mxu0 0
    %339 = vmatpush.bf16.msra.mxu0 0
    %340 = vmatpush.bf16.msra.mxu0 %v331
    %341 = vmatmul.bf16.gmra.mxu0 %v328
    %v342 = vpop.f32.mrf.mxu0
    %v343 = vadd.f32 0.0, %v342
    %v344 = vpop.f32.mrf.mxu0
    %345 = vdwg.mxu0
    %v346 = vpack.c.bf16 %v249, %v249
    %v347 = vpack.c.bf16 %v343, %v343
    %v349 = vsel %vm290, %v347, 0
    %v352 = vsel %vm294, %v346, 0
    %354 = vmatpush.bf16.msra.mxu0 0
    %355 = vmatpush.bf16.msra.mxu0 0
    %356 = vmatpush.bf16.msra.mxu0 0
    %357 = vmatpush.bf16.msra.mxu0 0
    %358 = vmatpush.bf16.msra.mxu0 0
    %359 = vmatpush.bf16.msra.mxu0 0
    %360 = vmatpush.bf16.msra.mxu0 0
    %361 = vmatpush.bf16.msra.mxu0 %v352
    %362 = vmatmul.bf16.gmra.mxu0 %v349
    %v363 = vpop.f32.mrf.mxu0
    %v364 = vadd.f32 0.0, %v363
    %v365 = vpop.f32.mrf.mxu0
    %366 = vdwg.mxu0
    %v368 = vperm.slane %v251, 0
    %v370 = vadd.f32 %v368, %v364
    %371 = vrot.lane.b32.xlu0 %v236, 104
    %v372 = vpop.permute.xlu0 %371
    %374 = vxpose.xlu0.b32.start [1/16] %v372, 128
    %375 = vxpose.xlu0.b32.cont [2/16] 0.0, 128
    %376 = vxpose.xlu0.b32.cont [3/16] 0.0, 128
    %377 = vxpose.xlu0.b32.cont [4/16] 0.0, 128
    %378 = vxpose.xlu0.b32.cont [5/16] 0.0, 128
    %379 = vxpose.xlu0.b32.cont [6/16] 0.0, 128
    %380 = vxpose.xlu0.b32.cont [7/16] 0.0, 128
    %381 = vxpose.xlu0.b32.cont [8/16] 0.0, 128
    %382 = vxpose.xlu0.b32.cont [9/16] 0.0, 128
    %383 = vxpose.xlu0.b32.cont [10/16] 0.0, 128
    %384 = vxpose.xlu0.b32.cont [11/16] 0.0, 128
    %385 = vxpose.xlu0.b32.cont [12/16] 0.0, 128
    %386 = vxpose.xlu0.b32.cont [13/16] 0.0, 128
    %387 = vxpose.xlu0.b32.cont [14/16] 0.0, 128
    %388 = vxpose.xlu0.b32.cont [15/16] 0.0, 128
    %389 = vxpose.xlu0.b32.end [16/16] 0.0, 128
    %v390 = vpop.trf.xlu0
    %v391 = vpop.trf.xlu0
    %v392 = vpop.trf.xlu0
    %v393 = vpop.trf.xlu0
    %v394 = vpop.trf.xlu0
    %v395 = vpop.trf.xlu0
    %v396 = vpop.trf.xlu0
    %v397 = vpop.trf.xlu0
    %v398 = vpop.trf.xlu0
    %v399 = vpop.trf.xlu0
    %v400 = vpop.trf.xlu0
    %v401 = vpop.trf.xlu0
    %v402 = vpop.trf.xlu0
    %v403 = vpop.trf.xlu0
    %v404 = vpop.trf.xlu0
    %v405 = vpop.trf.xlu0
    %v406 = vpack.c.bf16 %v390, %v390
    %408 = vrot.lane.b32.xlu0 %v288, 120
    %v409 = vpop.permute.xlu0 %408
    %v411 = vsel %vm290, %v409, 0
    %v414 = vsel %vm294, %v406, 0
    %416 = vmatpush.bf16.msra.mxu0 0
    %417 = vmatpush.bf16.msra.mxu0 0
    %418 = vmatpush.bf16.msra.mxu0 0
    %419 = vmatpush.bf16.msra.mxu0 0
    %420 = vmatpush.bf16.msra.mxu0 0
    %421 = vmatpush.bf16.msra.mxu0 0
    %422 = vmatpush.bf16.msra.mxu0 0
    %423 = vmatpush.bf16.msra.mxu0 %v414
    %424 = vmatmul.bf16.gmra.mxu0 %v411
    %v425 = vpop.f32.mrf.mxu0
    %v426 = vadd.f32 0.0, %v425
    %v427 = vpop.f32.mrf.mxu0
    %428 = vdwg.mxu0
    %v429 = vsel %vm290, %v426, -inf
    %430 = vmax.xlane.f32.xlu0 %v429
    %v431 = vpop.xlane.xlu0 %430
    %v432 = vsub.f32 %v426, %v431
    %v433 = vmul.f32 %v432, 1.442695
    %v434 = vpow.pop %v433
    %v435 = vsel %vm290, %v434, 0.0
    %436 = vadd.xlane.f32.xlu0 %v435
    %v437 = vpop.xlane.xlu0 %436
    %v438 = vrcp.pop %v437
    %v439 = vmul.f32 %v434, %v438
    %v440 = vpack.c.bf16 %v439, %v439
    %441 = vrot.lane.b32.xlu0 %v323, 88
    %v442 = vpop.permute.xlu0 %441
    %v444 = vsel %vm290, %v440, 0
    %v447 = vsel %vm294, %v442, 0
    %449 = vmatpush.bf16.msra.mxu0 0
    %450 = vmatpush.bf16.msra.mxu0 0
    %451 = vmatpush.bf16.msra.mxu0 0
    %452 = vmatpush.bf16.msra.mxu0 0
    %453 = vmatpush.bf16.msra.mxu0 0
    %454 = vmatpush.bf16.msra.mxu0 0
    %455 = vmatpush.bf16.msra.mxu0 0
    %456 = vmatpush.bf16.msra.mxu0 %v447
    %457 = vmatmul.bf16.gmra.mxu0 %v444
    %v458 = vpop.f32.mrf.mxu0
    %v459 = vadd.f32 0.0, %v458
    %v460 = vpop.f32.mrf.mxu0
    %461 = vdwg.mxu0
    %v462 = vpack.c.bf16 %v250, %v250
    %v463 = vpack.c.bf16 %v459, %v459
    %v465 = vsel %vm290, %v463, 0
    %v468 = vsel %vm294, %v462, 0
    %470 = vmatpush.bf16.msra.mxu0 0
    %471 = vmatpush.bf16.msra.mxu0 0
    %472 = vmatpush.bf16.msra.mxu0 0
    %473 = vmatpush.bf16.msra.mxu0 0
    %474 = vmatpush.bf16.msra.mxu0 0
    %475 = vmatpush.bf16.msra.mxu0 0
    %476 = vmatpush.bf16.msra.mxu0 0
    %477 = vmatpush.bf16.msra.mxu0 %v468
    %478 = vmatmul.bf16.gmra.mxu0 %v465
    %v479 = vpop.f32.mrf.mxu0
    %v480 = vadd.f32 0.0, %v479
    %v481 = vpop.f32.mrf.mxu0
    %482 = vdwg.mxu0
    %v483 = vadd.f32 %v370, %v480
    %485 = vrot.lane.b32.xlu0 %v238, 112
    %v486 = vpop.permute.xlu0 %485
    %488 = vxpose.xlu0.b32.start [1/16] %v486, 128
    %489 = vxpose.xlu0.b32.cont [2/16] 0.0, 128
    %490 = vxpose.xlu0.b32.cont [3/16] 0.0, 128
    %491 = vxpose.xlu0.b32.cont [4/16] 0.0, 128
    %492 = vxpose.xlu0.b32.cont [5/16] 0.0, 128
    %493 = vxpose.xlu0.b32.cont [6/16] 0.0, 128
    %494 = vxpose.xlu0.b32.cont [7/16] 0.0, 128
    %495 = vxpose.xlu0.b32.cont [8/16] 0.0, 128
    %496 = vxpose.xlu0.b32.cont [9/16] 0.0, 128
    %497 = vxpose.xlu0.b32.cont [10/16] 0.0, 128
    %498 = vxpose.xlu0.b32.cont [11/16] 0.0, 128
    %499 = vxpose.xlu0.b32.cont [12/16] 0.0, 128
    %500 = vxpose.xlu0.b32.cont [13/16] 0.0, 128
    %501 = vxpose.xlu0.b32.cont [14/16] 0.0, 128
    %502 = vxpose.xlu0.b32.cont [15/16] 0.0, 128
    %503 = vxpose.xlu0.b32.end [16/16] 0.0, 128
    %v504 = vpop.trf.xlu0
    %v505 = vpop.trf.xlu0
    %v506 = vpop.trf.xlu0
    %v507 = vpop.trf.xlu0
    %v508 = vpop.trf.xlu0
    %v509 = vpop.trf.xlu0
    %v510 = vpop.trf.xlu0
    %v511 = vpop.trf.xlu0
    %v512 = vpop.trf.xlu0
    %v513 = vpop.trf.xlu0
    %v514 = vpop.trf.xlu0
    %v515 = vpop.trf.xlu0
    %v516 = vpop.trf.xlu0
    %v517 = vpop.trf.xlu0
    %v518 = vpop.trf.xlu0
    %v519 = vpop.trf.xlu0
    %v520 = vpack.c.bf16 %v246, %v246
    %v521 = vpack.c.bf16 %v504, %v504
    %v523 = vsel %vm290, %v520, 0
    %v526 = vsel %vm294, %v521, 0
    %528 = vmatpush.bf16.msra.mxu0 0
    %529 = vmatpush.bf16.msra.mxu0 0
    %530 = vmatpush.bf16.msra.mxu0 0
    %531 = vmatpush.bf16.msra.mxu0 0
    %532 = vmatpush.bf16.msra.mxu0 0
    %533 = vmatpush.bf16.msra.mxu0 0
    %534 = vmatpush.bf16.msra.mxu0 0
    %535 = vmatpush.bf16.msra.mxu0 %v526
    %536 = vmatmul.bf16.gmra.mxu0 %v523
    %v537 = vpop.f32.mrf.mxu0
    %v538 = vadd.f32 0.0, %v537
    %v539 = vpop.f32.mrf.mxu0
    %540 = vdwg.mxu0
    %v541 = vsel %vm290, %v538, -inf
    %542 = vmax.xlane.f32.xlu0 %v541
    %v543 = vpop.xlane.xlu0 %542
    %v544 = vsub.f32 %v538, %v543
    %v545 = vmul.f32 %v544, 1.442695
    %v546 = vpow.pop %v545
    %v547 = vsel %vm290, %v546, 0.0
    %548 = vadd.xlane.f32.xlu0 %v547
    %v549 = vpop.xlane.xlu0 %548
    %v550 = vrcp.pop %v549
    %v551 = vmul.f32 %v546, %v550
    %v552 = vpack.c.bf16 %v551, %v551
    %v553 = vpack.c.bf16 %v238, %v238
    %555 = vrot.lane.b32.xlu0 %v553, 96
    %v556 = vpop.permute.xlu0 %555
    %v558 = vsel %vm290, %v552, 0
    %v561 = vsel %vm294, %v556, 0
    %563 = vmatpush.bf16.msra.mxu0 0
    %564 = vmatpush.bf16.msra.mxu0 0
    %565 = vmatpush.bf16.msra.mxu0 0
    %566 = vmatpush.bf16.msra.mxu0 0
    %567 = vmatpush.bf16.msra.mxu0 0
    %568 = vmatpush.bf16.msra.mxu0 0
    %569 = vmatpush.bf16.msra.mxu0 0
    %570 = vmatpush.bf16.msra.mxu0 %v561
    %571 = vmatmul.bf16.gmra.mxu0 %v558
    %v572 = vpop.f32.mrf.mxu0
    %v573 = vadd.f32 0.0, %v572
    %v574 = vpop.f32.mrf.mxu0
    %575 = vdwg.mxu0
    %v576 = vpack.c.bf16 %v573, %v573
    %v578 = vsel %vm290, %v576, 0
    %580 = vmatpush.bf16.msra.mxu0 0
    %581 = vmatpush.bf16.msra.mxu0 0
    %582 = vmatpush.bf16.msra.mxu0 0
    %583 = vmatpush.bf16.msra.mxu0 0
    %584 = vmatpush.bf16.msra.mxu0 0
    %585 = vmatpush.bf16.msra.mxu0 0
    %586 = vmatpush.bf16.msra.mxu0 0
    %587 = vmatpush.bf16.msra.mxu0 %v352
    %588 = vmatmul.bf16.gmra.mxu0 %v578
    %v589 = vpop.f32.mrf.mxu0
    %v590 = vadd.f32 0.0, %v589
    %v591 = vpop.f32.mrf.mxu0
    %592 = vdwg.mxu0
    %v593 = vadd.f32 %v368, %v590
    %594 = vrot.lane.b32.xlu0 %v238, 104
    %v595 = vpop.permute.xlu0 %594
    %597 = vxpose.xlu0.b32.start [1/16] %v595, 128
    %598 = vxpose.xlu0.b32.cont [2/16] 0.0, 128
    %599 = vxpose.xlu0.b32.cont [3/16] 0.0, 128
    %600 = vxpose.xlu0.b32.cont [4/16] 0.0, 128
    %601 = vxpose.xlu0.b32.cont [5/16] 0.0, 128
    %602 = vxpose.xlu0.b32.cont [6/16] 0.0, 128
    %603 = vxpose.xlu0.b32.cont [7/16] 0.0, 128
    %604 = vxpose.xlu0.b32.cont [8/16] 0.0, 128
    %605 = vxpose.xlu0.b32.cont [9/16] 0.0, 128
    %606 = vxpose.xlu0.b32.cont [10/16] 0.0, 128
    %607 = vxpose.xlu0.b32.cont [11/16] 0.0, 128
    %608 = vxpose.xlu0.b32.cont [12/16] 0.0, 128
    %609 = vxpose.xlu0.b32.cont [13/16] 0.0, 128
    %610 = vxpose.xlu0.b32.cont [14/16] 0.0, 128
    %611 = vxpose.xlu0.b32.cont [15/16] 0.0, 128
    %612 = vxpose.xlu0.b32.end [16/16] 0.0, 128
    %v613 = vpop.trf.xlu0
    %v614 = vpop.trf.xlu0
    %v615 = vpop.trf.xlu0
    %v616 = vpop.trf.xlu0
    %v617 = vpop.trf.xlu0
    %v618 = vpop.trf.xlu0
    %v619 = vpop.trf.xlu0
    %v620 = vpop.trf.xlu0
    %v621 = vpop.trf.xlu0
    %v622 = vpop.trf.xlu0
    %v623 = vpop.trf.xlu0
    %v624 = vpop.trf.xlu0
    %v625 = vpop.trf.xlu0
    %v626 = vpop.trf.xlu0
    %v627 = vpop.trf.xlu0
    %v628 = vpop.trf.xlu0
    %v629 = vpack.c.bf16 %v613, %v613
    %631 = vrot.lane.b32.xlu0 %v520, 120
    %v632 = vpop.permute.xlu0 %631
    %v634 = vsel %vm290, %v632, 0
    %v637 = vsel %vm294, %v629, 0
    %639 = vmatpush.bf16.msra.mxu0 0
    %640 = vmatpush.bf16.msra.mxu0 0
    %641 = vmatpush.bf16.msra.mxu0 0
    %642 = vmatpush.bf16.msra.mxu0 0
    %643 = vmatpush.bf16.msra.mxu0 0
    %644 = vmatpush.bf16.msra.mxu0 0
    %645 = vmatpush.bf16.msra.mxu0 0
    %646 = vmatpush.bf16.msra.mxu0 %v637
    %647 = vmatmul.bf16.gmra.mxu0 %v634
    %v648 = vpop.f32.mrf.mxu0
    %v649 = vadd.f32 0.0, %v648
    %v650 = vpop.f32.mrf.mxu0
    %651 = vdwg.mxu0
    %v652 = vsel %vm290, %v649, -inf
    %653 = vmax.xlane.f32.xlu0 %v652
    %v654 = vpop.xlane.xlu0 %653
    %v655 = vsub.f32 %v649, %v654
    %v656 = vmul.f32 %v655, 1.442695
    %v657 = vpow.pop %v656
    %v658 = vsel %vm290, %v657, 0.0
    %659 = vadd.xlane.f32.xlu0 %v658
    %v660 = vpop.xlane.xlu0 %659
    %v661 = vrcp.pop %v660
    %v662 = vmul.f32 %v657, %v661
    %v663 = vpack.c.bf16 %v662, %v662
    %664 = vrot.lane.b32.xlu0 %v553, 88
    %v665 = vpop.permute.xlu0 %664
    %v667 = vsel %vm290, %v663, 0
    %v670 = vsel %vm294, %v665, 0
    %672 = vmatpush.bf16.msra.mxu0 0
    %673 = vmatpush.bf16.msra.mxu0 0
    %674 = vmatpush.bf16.msra.mxu0 0
    %675 = vmatpush.bf16.msra.mxu0 0
    %676 = vmatpush.bf16.msra.mxu0 0
    %677 = vmatpush.bf16.msra.mxu0 0
    %678 = vmatpush.bf16.msra.mxu0 0
    %679 = vmatpush.bf16.msra.mxu0 %v670
    %680 = vmatmul.bf16.gmra.mxu0 %v667
    %v681 = vpop.f32.mrf.mxu0
    %v682 = vadd.f32 0.0, %v681
    %v683 = vpop.f32.mrf.mxu0
    %684 = vdwg.mxu0
    %v685 = vpack.c.bf16 %v682, %v682
    %v687 = vsel %vm290, %v685, 0
    %689 = vmatpush.bf16.msra.mxu0 0
    %690 = vmatpush.bf16.msra.mxu0 0
    %691 = vmatpush.bf16.msra.mxu0 0
    %692 = vmatpush.bf16.msra.mxu0 0
    %693 = vmatpush.bf16.msra.mxu0 0
    %694 = vmatpush.bf16.msra.mxu0 0
    %695 = vmatpush.bf16.msra.mxu0 0
    %696 = vmatpush.bf16.msra.mxu0 %v468
    %697 = vmatmul.bf16.gmra.mxu0 %v687
    %v698 = vpop.f32.mrf.mxu0
    %v699 = vadd.f32 0.0, %v698
    %v700 = vpop.f32.mrf.mxu0
    %701 = vdwg.mxu0
    %v702 = vadd.f32 %v593, %v699
    %704 = vrot.lane.b32.xlu0 %v241, 112
    %v705 = vpop.permute.xlu0 %704
    %707 = vxpose.xlu0.b32.start [1/16] %v705, 128
    %708 = vxpose.xlu0.b32.cont [2/16] 0.0, 128
    %709 = vxpose.xlu0.b32.cont [3/16] 0.0, 128
    %710 = vxpose.xlu0.b32.cont [4/16] 0.0, 128
    %711 = vxpose.xlu0.b32.cont [5/16] 0.0, 128
    %712 = vxpose.xlu0.b32.cont [6/16] 0.0, 128
    %713 = vxpose.xlu0.b32.cont [7/16] 0.0, 128
    %714 = vxpose.xlu0.b32.cont [8/16] 0.0, 128
    %715 = vxpose.xlu0.b32.cont [9/16] 0.0, 128
    %716 = vxpose.xlu0.b32.cont [10/16] 0.0, 128
    %717 = vxpose.xlu0.b32.cont [11/16] 0.0, 128
    %718 = vxpose.xlu0.b32.cont [12/16] 0.0, 128
    %719 = vxpose.xlu0.b32.cont [13/16] 0.0, 128
    %720 = vxpose.xlu0.b32.cont [14/16] 0.0, 128
    %721 = vxpose.xlu0.b32.cont [15/16] 0.0, 128
    %722 = vxpose.xlu0.b32.end [16/16] 0.0, 128
    %v723 = vpop.trf.xlu0
    %v724 = vpop.trf.xlu0
    %v725 = vpop.trf.xlu0
    %v726 = vpop.trf.xlu0
    %v727 = vpop.trf.xlu0
    %v728 = vpop.trf.xlu0
    %v729 = vpop.trf.xlu0
    %v730 = vpop.trf.xlu0
    %v731 = vpop.trf.xlu0
    %v732 = vpop.trf.xlu0
    %v733 = vpop.trf.xlu0
    %v734 = vpop.trf.xlu0
    %v735 = vpop.trf.xlu0
    %v736 = vpop.trf.xlu0
    %v737 = vpop.trf.xlu0
    %v738 = vpop.trf.xlu0
    %v739 = vpack.c.bf16 %v247, %v247
    %v740 = vpack.c.bf16 %v723, %v723
    %v742 = vsel %vm290, %v739, 0
    %v745 = vsel %vm294, %v740, 0
    %747 = vmatpush.bf16.msra.mxu0 0
    %748 = vmatpush.bf16.msra.mxu0 0
    %749 = vmatpush.bf16.msra.mxu0 0
    %750 = vmatpush.bf16.msra.mxu0 0
    %751 = vmatpush.bf16.msra.mxu0 0
    %752 = vmatpush.bf16.msra.mxu0 0
    %753 = vmatpush.bf16.msra.mxu0 0
    %754 = vmatpush.bf16.msra.mxu0 %v745
    %755 = vmatmul.bf16.gmra.mxu0 %v742
    %v756 = vpop.f32.mrf.mxu0
    %v757 = vadd.f32 0.0, %v756
    %v758 = vpop.f32.mrf.mxu0
    %759 = vdwg.mxu0
    %v760 = vsel %vm290, %v757, -inf
    %761 = vmax.xlane.f32.xlu0 %v760
    %v762 = vpop.xlane.xlu0 %761
    %v763 = vsub.f32 %v757, %v762
    %v764 = vmul.f32 %v763, 1.442695
    %v765 = vpow.pop %v764
    %v766 = vsel %vm290, %v765, 0.0
    %767 = vadd.xlane.f32.xlu0 %v766
    %v768 = vpop.xlane.xlu0 %767
    %v769 = vrcp.pop %v768
    %v770 = vmul.f32 %v765, %v769
    %v771 = vpack.c.bf16 %v770, %v770
    %v772 = vpack.c.bf16 %v241, %v241
    %774 = vrot.lane.b32.xlu0 %v772, 96
    %v775 = vpop.permute.xlu0 %774
    %v777 = vsel %vm290, %v771, 0
    %v780 = vsel %vm294, %v775, 0
    %782 = vmatpush.bf16.msra.mxu0 0
    %783 = vmatpush.bf16.msra.mxu0 0
    %784 = vmatpush.bf16.msra.mxu0 0
    %785 = vmatpush.bf16.msra.mxu0 0
    %786 = vmatpush.bf16.msra.mxu0 0
    %787 = vmatpush.bf16.msra.mxu0 0
    %788 = vmatpush.bf16.msra.mxu0 0
    %789 = vmatpush.bf16.msra.mxu0 %v780
    %790 = vmatmul.bf16.gmra.mxu0 %v777
    %v791 = vpop.f32.mrf.mxu0
    %v792 = vadd.f32 0.0, %v791
    %v793 = vpop.f32.mrf.mxu0
    %794 = vdwg.mxu0
    %v795 = vpack.c.bf16 %v792, %v792
    %v797 = vsel %vm290, %v795, 0
    %799 = vmatpush.bf16.msra.mxu0 0
    %800 = vmatpush.bf16.msra.mxu0 0
    %801 = vmatpush.bf16.msra.mxu0 0
    %802 = vmatpush.bf16.msra.mxu0 0
    %803 = vmatpush.bf16.msra.mxu0 0
    %804 = vmatpush.bf16.msra.mxu0 0
    %805 = vmatpush.bf16.msra.mxu0 0
    %806 = vmatpush.bf16.msra.mxu0 %v352
    %807 = vmatmul.bf16.gmra.mxu0 %v797
    %v808 = vpop.f32.mrf.mxu0
    %v809 = vadd.f32 0.0, %v808
    %v810 = vpop.f32.mrf.mxu0
    %811 = vdwg.mxu0
    %v812 = vadd.f32 %v368, %v809
    %813 = vrot.lane.b32.xlu0 %v241, 104
    %v814 = vpop.permute.xlu0 %813
    %816 = vxpose.xlu0.b32.start [1/16] %v814, 128
    %817 = vxpose.xlu0.b32.cont [2/16] 0.0, 128
    %818 = vxpose.xlu0.b32.cont [3/16] 0.0, 128
    %819 = vxpose.xlu0.b32.cont [4/16] 0.0, 128
    %820 = vxpose.xlu0.b32.cont [5/16] 0.0, 128
    %821 = vxpose.xlu0.b32.cont [6/16] 0.0, 128
    %822 = vxpose.xlu0.b32.cont [7/16] 0.0, 128
    %823 = vxpose.xlu0.b32.cont [8/16] 0.0, 128
    %824 = vxpose.xlu0.b32.cont [9/16] 0.0, 128
    %825 = vxpose.xlu0.b32.cont [10/16] 0.0, 128
    %826 = vxpose.xlu0.b32.cont [11/16] 0.0, 128
    %827 = vxpose.xlu0.b32.cont [12/16] 0.0, 128
    %828 = vxpose.xlu0.b32.cont [13/16] 0.0, 128
    %829 = vxpose.xlu0.b32.cont [14/16] 0.0, 128
    %830 = vxpose.xlu0.b32.cont [15/16] 0.0, 128
    %831 = vxpose.xlu0.b32.end [16/16] 0.0, 128
    %v832 = vpop.trf.xlu0
    %v833 = vpop.trf.xlu0
    %v834 = vpop.trf.xlu0
    %v835 = vpop.trf.xlu0
    %v836 = vpop.trf.xlu0
    %v837 = vpop.trf.xlu0
    %v838 = vpop.trf.xlu0
    %v839 = vpop.trf.xlu0
    %v840 = vpop.trf.xlu0
    %v841 = vpop.trf.xlu0
    %v842 = vpop.trf.xlu0
    %v843 = vpop.trf.xlu0
    %v844 = vpop.trf.xlu0
    %v845 = vpop.trf.xlu0
    %v846 = vpop.trf.xlu0
    %v847 = vpop.trf.xlu0
    %v848 = vpack.c.bf16 %v832, %v832
    %850 = vrot.lane.b32.xlu0 %v739, 120
    %v851 = vpop.permute.xlu0 %850
    %v853 = vsel %vm290, %v851, 0
    %v856 = vsel %vm294, %v848, 0
    %858 = vmatpush.bf16.msra.mxu0 0
    %859 = vmatpush.bf16.msra.mxu0 0
    %860 = vmatpush.bf16.msra.mxu0 0
    %861 = vmatpush.bf16.msra.mxu0 0
    %862 = vmatpush.bf16.msra.mxu0 0
    %863 = vmatpush.bf16.msra.mxu0 0
    %864 = vmatpush.bf16.msra.mxu0 0
    %865 = vmatpush.bf16.msra.mxu0 %v856
    %866 = vmatmul.bf16.gmra.mxu0 %v853
    %v867 = vpop.f32.mrf.mxu0
    %v868 = vadd.f32 0.0, %v867
    %v869 = vpop.f32.mrf.mxu0
    %870 = vdwg.mxu0
    %v871 = vsel %vm290, %v868, -inf
    %872 = vmax.xlane.f32.xlu0 %v871
    %v873 = vpop.xlane.xlu0 %872
    %v874 = vsub.f32 %v868, %v873
    %v875 = vmul.f32 %v874, 1.442695
    %v876 = vpow.pop %v875
    %v877 = vsel %vm290, %v876, 0.0
    %878 = vadd.xlane.f32.xlu0 %v877
    %v879 = vpop.xlane.xlu0 %878
    %v880 = vrcp.pop %v879
    %v881 = vmul.f32 %v876, %v880
    %v882 = vpack.c.bf16 %v881, %v881
    %883 = vrot.lane.b32.xlu0 %v772, 88
    %v884 = vpop.permute.xlu0 %883
    %v886 = vsel %vm290, %v882, 0
    %v889 = vsel %vm294, %v884, 0
    %891 = vmatpush.bf16.msra.mxu0 0
    %892 = vmatpush.bf16.msra.mxu0 0
    %893 = vmatpush.bf16.msra.mxu0 0
    %894 = vmatpush.bf16.msra.mxu0 0
    %895 = vmatpush.bf16.msra.mxu0 0
    %896 = vmatpush.bf16.msra.mxu0 0
    %897 = vmatpush.bf16.msra.mxu0 0
    %898 = vmatpush.bf16.msra.mxu0 %v889
    %899 = vmatmul.bf16.gmra.mxu0 %v886
    %v900 = vpop.f32.mrf.mxu0
    %v901 = vadd.f32 0.0, %v900
    %v902 = vpop.f32.mrf.mxu0
    %903 = vdwg.mxu0
    %v904 = vpack.c.bf16 %v901, %v901
    %v906 = vsel %vm290, %v904, 0
    %908 = vmatpush.bf16.msra.mxu0 0
    %909 = vmatpush.bf16.msra.mxu0 0
    %910 = vmatpush.bf16.msra.mxu0 0
    %911 = vmatpush.bf16.msra.mxu0 0
    %912 = vmatpush.bf16.msra.mxu0 0
    %913 = vmatpush.bf16.msra.mxu0 0
    %914 = vmatpush.bf16.msra.mxu0 0
    %915 = vmatpush.bf16.msra.mxu0 %v468
    %916 = vmatmul.bf16.gmra.mxu0 %v906
    %v917 = vpop.f32.mrf.mxu0
    %v918 = vadd.f32 0.0, %v917
    %v919 = vpop.f32.mrf.mxu0
    %920 = vdwg.mxu0
    %v921 = vadd.f32 %v812, %v918
    %923 = vrot.lane.b32.xlu0 %v243, 112
    %v924 = vpop.permute.xlu0 %923
    %926 = vxpose.xlu0.b32.start [1/16] %v924, 128
    %927 = vxpose.xlu0.b32.cont [2/16] 0.0, 128
    %928 = vxpose.xlu0.b32.cont [3/16] 0.0, 128
    %929 = vxpose.xlu0.b32.cont [4/16] 0.0, 128
    %930 = vxpose.xlu0.b32.cont [5/16] 0.0, 128
    %931 = vxpose.xlu0.b32.cont [6/16] 0.0, 128
    %932 = vxpose.xlu0.b32.cont [7/16] 0.0, 128
    %933 = vxpose.xlu0.b32.cont [8/16] 0.0, 128
    %934 = vxpose.xlu0.b32.cont [9/16] 0.0, 128
    %935 = vxpose.xlu0.b32.cont [10/16] 0.0, 128
    %936 = vxpose.xlu0.b32.cont [11/16] 0.0, 128
    %937 = vxpose.xlu0.b32.cont [12/16] 0.0, 128
    %938 = vxpose.xlu0.b32.cont [13/16] 0.0, 128
    %939 = vxpose.xlu0.b32.cont [14/16] 0.0, 128
    %940 = vxpose.xlu0.b32.cont [15/16] 0.0, 128
    %941 = vxpose.xlu0.b32.end [16/16] 0.0, 128
    %v942 = vpop.trf.xlu0
    %v943 = vpop.trf.xlu0
    %v944 = vpop.trf.xlu0
    %v945 = vpop.trf.xlu0
    %v946 = vpop.trf.xlu0
    %v947 = vpop.trf.xlu0
    %v948 = vpop.trf.xlu0
    %v949 = vpop.trf.xlu0
    %v950 = vpop.trf.xlu0
    %v951 = vpop.trf.xlu0
    %v952 = vpop.trf.xlu0
    %v953 = vpop.trf.xlu0
    %v954 = vpop.trf.xlu0
    %v955 = vpop.trf.xlu0
    %v956 = vpop.trf.xlu0
    %v957 = vpop.trf.xlu0
    %v958 = vpack.c.bf16 %v248, %v248
    %v959 = vpack.c.bf16 %v942, %v942
    %v961 = vsel %vm290, %v958, 0
    %v964 = vsel %vm294, %v959, 0
    %966 = vmatpush.bf16.msra.mxu0 0
    %967 = vmatpush.bf16.msra.mxu0 0
    %968 = vmatpush.bf16.msra.mxu0 0
    %969 = vmatpush.bf16.msra.mxu0 0
    %970 = vmatpush.bf16.msra.mxu0 0
    %971 = vmatpush.bf16.msra.mxu0 0
    %972 = vmatpush.bf16.msra.mxu0 0
    %973 = vmatpush.bf16.msra.mxu0 %v964
    %974 = vmatmul.bf16.gmra.mxu0 %v961
    %v975 = vpop.f32.mrf.mxu0
    %v976 = vadd.f32 0.0, %v975
    %v977 = vpop.f32.mrf.mxu0
    %978 = vdwg.mxu0
    %v979 = vsel %vm290, %v976, -inf
    %980 = vmax.xlane.f32.xlu0 %v979
    %v981 = vpop.xlane.xlu0 %980
    %v982 = vsub.f32 %v976, %v981
    %v983 = vmul.f32 %v982, 1.442695
    %v984 = vpow.pop %v983
    %v985 = vsel %vm290, %v984, 0.0
    %986 = vadd.xlane.f32.xlu0 %v985
    %v987 = vpop.xlane.xlu0 %986
    %v988 = vrcp.pop %v987
    %v989 = vmul.f32 %v984, %v988
    %v990 = vpack.c.bf16 %v989, %v989
    %v991 = vpack.c.bf16 %v243, %v243
    %993 = vrot.lane.b32.xlu0 %v991, 96
    %v994 = vpop.permute.xlu0 %993
    %v996 = vsel %vm290, %v990, 0
    %v999 = vsel %vm294, %v994, 0
    %1001 = vmatpush.bf16.msra.mxu0 0
    %1002 = vmatpush.bf16.msra.mxu0 0
    %1003 = vmatpush.bf16.msra.mxu0 0
    %1004 = vmatpush.bf16.msra.mxu0 0
    %1005 = vmatpush.bf16.msra.mxu0 0
    %1006 = vmatpush.bf16.msra.mxu0 0
    %1007 = vmatpush.bf16.msra.mxu0 0
    %1008 = vmatpush.bf16.msra.mxu0 %v999
    %1009 = vmatmul.bf16.gmra.mxu0 %v996
    %v1010 = vpop.f32.mrf.mxu0
    %v1011 = vadd.f32 0.0, %v1010
    %v1012 = vpop.f32.mrf.mxu0
    %1013 = vdwg.mxu0
    %v1014 = vpack.c.bf16 %v1011, %v1011
    %v1016 = vsel %vm290, %v1014, 0
    %1018 = vmatpush.bf16.msra.mxu0 0
    %1019 = vmatpush.bf16.msra.mxu0 0
    %1020 = vmatpush.bf16.msra.mxu0 0
    %1021 = vmatpush.bf16.msra.mxu0 0
    %1022 = vmatpush.bf16.msra.mxu0 0
    %1023 = vmatpush.bf16.msra.mxu0 0
    %1024 = vmatpush.bf16.msra.mxu0 0
    %1025 = vmatpush.bf16.msra.mxu0 %v352
    %1026 = vmatmul.bf16.gmra.mxu0 %v1016
    %v1027 = vpop.f32.mrf.mxu0
    %v1028 = vadd.f32 0.0, %v1027
    %v1029 = vpop.f32.mrf.mxu0
    %1030 = vdwg.mxu0
    %v1031 = vadd.f32 %v368, %v1028
    %1032 = vrot.lane.b32.xlu0 %v243, 104
    %v1033 = vpop.permute.xlu0 %1032
    %1035 = vxpose.xlu0.b32.start [1/16] %v1033, 128
    %1036 = vxpose.xlu0.b32.cont [2/16] 0.0, 128
    %1037 = vxpose.xlu0.b32.cont [3/16] 0.0, 128
    %1038 = vxpose.xlu0.b32.cont [4/16] 0.0, 128
    %1039 = vxpose.xlu0.b32.cont [5/16] 0.0, 128
    %1040 = vxpose.xlu0.b32.cont [6/16] 0.0, 128
    %1041 = vxpose.xlu0.b32.cont [7/16] 0.0, 128
    %1042 = vxpose.xlu0.b32.cont [8/16] 0.0, 128
    %1043 = vxpose.xlu0.b32.cont [9/16] 0.0, 128
    %1044 = vxpose.xlu0.b32.cont [10/16] 0.0, 128
    %1045 = vxpose.xlu0.b32.cont [11/16] 0.0, 128
    %1046 = vxpose.xlu0.b32.cont [12/16] 0.0, 128
    %1047 = vxpose.xlu0.b32.cont [13/16] 0.0, 128
    %1048 = vxpose.xlu0.b32.cont [14/16] 0.0, 128
    %1049 = vxpose.xlu0.b32.cont [15/16] 0.0, 128
    %1050 = vxpose.xlu0.b32.end [16/16] 0.0, 128
    %v1051 = vpop.trf.xlu0
    %v1052 = vpop.trf.xlu0
    %v1053 = vpop.trf.xlu0
    %v1054 = vpop.trf.xlu0
    %v1055 = vpop.trf.xlu0
    %v1056 = vpop.trf.xlu0
    %v1057 = vpop.trf.xlu0
    %v1058 = vpop.trf.xlu0
    %v1059 = vpop.trf.xlu0
    %v1060 = vpop.trf.xlu0
    %v1061 = vpop.trf.xlu0
    %v1062 = vpop.trf.xlu0
    %v1063 = vpop.trf.xlu0
    %v1064 = vpop.trf.xlu0
    %v1065 = vpop.trf.xlu0
    %v1066 = vpop.trf.xlu0
    %v1067 = vpack.c.bf16 %v1051, %v1051
    %1069 = vrot.lane.b32.xlu0 %v958, 120
    %v1070 = vpop.permute.xlu0 %1069
    %v1072 = vsel %vm290, %v1070, 0
    %v1075 = vsel %vm294, %v1067, 0
    %1077 = vmatpush.bf16.msra.mxu0 0
    %1078 = vmatpush.bf16.msra.mxu0 0
    %1079 = vmatpush.bf16.msra.mxu0 0
    %1080 = vmatpush.bf16.msra.mxu0 0
    %1081 = vmatpush.bf16.msra.mxu0 0
    %1082 = vmatpush.bf16.msra.mxu0 0
    %1083 = vmatpush.bf16.msra.mxu0 0
    %1084 = vmatpush.bf16.msra.mxu0 %v1075
    %1085 = vmatmul.bf16.gmra.mxu0 %v1072
    %v1086 = vpop.f32.mrf.mxu0
    %v1087 = vadd.f32 0.0, %v1086
    %v1088 = vpop.f32.mrf.mxu0
    %1089 = vdwg.mxu0
    %v1090 = vsel %vm290, %v1087, -inf
    %1091 = vmax.xlane.f32.xlu0 %v1090
    %v1092 = vpop.xlane.xlu0 %1091
    %v1093 = vsub.f32 %v1087, %v1092
    %v1094 = vmul.f32 %v1093, 1.442695
    %v1095 = vpow.pop %v1094
    %v1096 = vsel %vm290, %v1095, 0.0
    %1097 = vadd.xlane.f32.xlu0 %v1096
    %v1098 = vpop.xlane.xlu0 %1097
    %v1099 = vrcp.pop %v1098
    %v1100 = vmul.f32 %v1095, %v1099
    %v1101 = vpack.c.bf16 %v1100, %v1100
    %1102 = vrot.lane.b32.xlu0 %v991, 88
    %v1103 = vpop.permute.xlu0 %1102
    %v1105 = vsel %vm290, %v1101, 0
    %v1108 = vsel %vm294, %v1103, 0
    %1110 = vmatpush.bf16.msra.mxu0 0
    %1111 = vmatpush.bf16.msra.mxu0 0
    %1112 = vmatpush.bf16.msra.mxu0 0
    %1113 = vmatpush.bf16.msra.mxu0 0
    %1114 = vmatpush.bf16.msra.mxu0 0
    %1115 = vmatpush.bf16.msra.mxu0 0
    %1116 = vmatpush.bf16.msra.mxu0 0
    %1117 = vmatpush.bf16.msra.mxu0 %v1108
    %1118 = vmatmul.bf16.gmra.mxu0 %v1105
    %v1119 = vpop.f32.mrf.mxu0
    %v1120 = vadd.f32 0.0, %v1119
    %v1121 = vpop.f32.mrf.mxu0
    %1122 = vdwg.mxu0
    %v1123 = vpack.c.bf16 %v1120, %v1120
    %v1125 = vsel %vm290, %v1123, 0
    %1127 = vmatpush.bf16.msra.mxu0 0
    %1128 = vmatpush.bf16.msra.mxu0 0
    %1129 = vmatpush.bf16.msra.mxu0 0
    %1130 = vmatpush.bf16.msra.mxu0 0
    %1131 = vmatpush.bf16.msra.mxu0 0
    %1132 = vmatpush.bf16.msra.mxu0 0
    %1133 = vmatpush.bf16.msra.mxu0 0
    %1134 = vmatpush.bf16.msra.mxu0 %v468
    %1135 = vmatmul.bf16.gmra.mxu0 %v1125
    %v1136 = vpop.f32.mrf.mxu0
    %v1137 = vadd.f32 0.0, %v1136
    %v1138 = vpop.f32.mrf.mxu0
    %1139 = vdwg.mxu0
    %v1140 = vadd.f32 %v1031, %v1137
    %v1141 = vadd.f32 %v134, %v483
    %v1142 = vadd.f32 %v157, %v702
    %v1143 = vadd.f32 %v180, %v921
    %v1144 = vadd.f32 %v203, %v1140
    %v1145 = vsel %vm219, %v1141, 0.0
    %1146 = vadd.xlane.f32.xlu0 %v1145
    %v1147 = vpop.xlane.xlu0 %1146
    %v1148 = vsel %vm219, %v1142, 0.0
    %1149 = vadd.xlane.f32.xlu0 %v1148
    %v1150 = vpop.xlane.xlu0 %1149
    %v1151 = vsel %vm219, %v1143, 0.0
    %1152 = vadd.xlane.f32.xlu0 %v1151
    %v1153 = vpop.xlane.xlu0 %1152
    %v1154 = vsel %vm219, %v1144, 0.0
    %1155 = vadd.xlane.f32.xlu0 %v1154
    %v1156 = vpop.xlane.xlu0 %1155
    %v1157 = vrcp.pop 16.0
    %v1158 = vmul.f32 16.0, %v1157
    %v1159 = vsub.f32 1.0, %v1158
    %v1160 = vmul.f32 %v1157, %v1159
    %v1161 = vadd.f32 %v1157, %v1160
    %vm1162 = vweird.f32 %v1157
    %v1163 = vsel %vm1162, %v1157, %v1161
    %v1164 = vmul.f32 %v1147, %v1163
    %v1165 = vmul.f32 %v1150, %v1163
    %v1166 = vmul.f32 %v1153, %v1163
    %v1167 = vmul.f32 %v1156, %v1163
    %v1168 = vsub.f32 %v1141, %v1164
    %v1169 = vsub.f32 %v1142, %v1165
    %v1170 = vsub.f32 %v1143, %v1166
    %v1171 = vsub.f32 %v1144, %v1167
    %v1172 = vmul.f32 %v1168, %v1168
    %v1173 = vmul.f32 %v1169, %v1169
    %v1174 = vmul.f32 %v1170, %v1170
    %v1175 = vmul.f32 %v1171, %v1171
    %v1176 = vsel %vm219, %v1172, 0.0
    %1177 = vadd.xlane.f32.xlu0 %v1176
    %v1178 = vpop.xlane.xlu0 %1177
    %v1179 = vsel %vm219, %v1173, 0.0
    %1180 = vadd.xlane.f32.xlu0 %v1179
    %v1181 = vpop.xlane.xlu0 %1180
    %v1182 = vsel %vm219, %v1174, 0.0
    %1183 = vadd.xlane.f32.xlu0 %v1182
    %v1184 = vpop.xlane.xlu0 %1183
    %v1185 = vsel %vm219, %v1175, 0.0
    %1186 = vadd.xlane.f32.xlu0 %v1185
    %v1187 = vpop.xlane.xlu0 %1186
    %v1188 = vmul.f32 %v1178, %v1163
    %v1189 = vmul.f32 %v1181, %v1163
    %v1190 = vmul.f32 %v1184, %v1163
    %v1191 = vmul.f32 %v1187, %v1163
    %v1192 = vadd.f32 %v1188, 1e-05
    %v1193 = vadd.f32 %v1189, 1e-05
    %v1194 = vadd.f32 %v1190, 1e-05
    %v1195 = vadd.f32 %v1191, 1e-05
    %v1196 = vrsqrt.pop %v1192
    %v1197 = vmul.f32 %v1196, %v1192
    %v1198 = vmul.f32 %v1197, %v1196
    %v1199 = vmul.f32 0.5, %v1198
    %v1200 = vsub.f32 1.5, %v1199
    %v1201 = vmul.f32 %v1196, %v1200
    %vm1202 = vweird.f32 %v1192
    %vm1203 = vweird.f32 %v1196
    %vm1204 = vmor %vm1202, %vm1203
    %v1205 = vsel %vm1204, %v1196, %v1201
    %v1206 = vrsqrt.pop %v1193
    %v1207 = vmul.f32 %v1206, %v1193
    %v1208 = vmul.f32 %v1207, %v1206
    %v1209 = vmul.f32 0.5, %v1208
    %v1210 = vsub.f32 1.5, %v1209
    %v1211 = vmul.f32 %v1206, %v1210
    %vm1212 = vweird.f32 %v1193
    %vm1213 = vweird.f32 %v1206
    %vm1214 = vmor %vm1212, %vm1213
    %v1215 = vsel %vm1214, %v1206, %v1211
    %v1216 = vrsqrt.pop %v1194
    %v1217 = vmul.f32 %v1216, %v1194
    %v1218 = vmul.f32 %v1217, %v1216
    %v1219 = vmul.f32 0.5, %v1218
    %v1220 = vsub.f32 1.5, %v1219
    %v1221 = vmul.f32 %v1216, %v1220
    %vm1222 = vweird.f32 %v1194
    %vm1223 = vweird.f32 %v1216
    %vm1224 = vmor %vm1222, %vm1223
    %v1225 = vsel %vm1224, %v1216, %v1221
    %v1226 = vrsqrt.pop %v1195
    %v1227 = vmul.f32 %v1226, %v1195
    %v1228 = vmul.f32 %v1227, %v1226
    %v1229 = vmul.f32 0.5, %v1228
    %v1230 = vsub.f32 1.5, %v1229
    %v1231 = vmul.f32 %v1226, %v1230
    %vm1232 = vweird.f32 %v1195
    %vm1233 = vweird.f32 %v1226
    %vm1234 = vmor %vm1232, %vm1233
    %v1235 = vsel %vm1234, %v1226, %v1231
    %v1236 = vmul.f32 %v1168, %v1205
    %v1237 = vmul.f32 %v1169, %v1215
    %v1238 = vmul.f32 %v1170, %v1225
    %v1239 = vmul.f32 %v1171, %v1235
    %v1240 = vld [vmem:[%s6] sm:$0x1]
    %v1242 = vperm.slane %v1240, 0
    %v1244 = vmul.f32 %v1236, %v1242
    %v1245 = vmul.f32 %v1237, %v1242
    %v1246 = vmul.f32 %v1238, %v1242
    %v1247 = vmul.f32 %v1239, %v1242
    %v1248 = vld [vmem:[%s7] sm:$0x1]
    %v1250 = vperm.slane %v1248, 0
    %v1252 = vadd.f32 %v1244, %v1250
    %v1253 = vadd.f32 %v1245, %v1250
    %v1254 = vadd.f32 %v1246, %v1250
    %v1255 = vadd.f32 %v1247, %v1250
    %v1256 = vpack.c.bf16 %v1253, %v1252
    %v1257 = vpack.c.bf16 %v1255, %v1254
    %v1258 = vld [vmem:[%s8] sm:$0xff]
    %v1259 = vld [vmem:[%s8 + $0x8] sm:$0xff]
    %v1260 = vld [vmem:[%s8 + $0x10] sm:$0xff]
    %v1261 = vld [vmem:[%s8 + $0x18] sm:$0xff]
    %v1262 = vld [vmem:[%s8 + $0x20] sm:$0xff]
    %v1263 = vld [vmem:[%s8 + $0x28] sm:$0xff]
    %v1264 = vld [vmem:[%s8 + $0x30] sm:$0xff]
    %v1265 = vld [vmem:[%s8 + $0x38] sm:$0xff]
    %v1266 = vld [vmem:[%s8 + $0x40] sm:$0xff]
    %v1267 = vld [vmem:[%s8 + $0x48] sm:$0xff]
    %v1268 = vld [vmem:[%s8 + $0x50] sm:$0xff]
    %v1269 = vld [vmem:[%s8 + $0x58] sm:$0xff]
    %v1270 = vld [vmem:[%s8 + $0x60] sm:$0xff]
    %v1271 = vld [vmem:[%s8 + $0x68] sm:$0xff]
    %v1272 = vld [vmem:[%s8 + $0x70] sm:$0xff]
    %v1273 = vld [vmem:[%s8 + $0x78] sm:$0xff]
    %v1274 = vld [vmem:[%s9] sm:$0xff]
    %v1275 = vld [vmem:[%s9 + $0x8] sm:$0xff]
    %v1278 = vperm.slane %v1274, 0
    %v1279 = vperm.slane %v1274, 1
    %v1280 = vperm.slane %v1274, 2
    %v1281 = vperm.slane %v1274, 3
    %v1282 = vperm.slane %v1274, 4
    %v1283 = vperm.slane %v1274, 5
    %v1284 = vperm.slane %v1274, 6
    %v1285 = vperm.slane %v1274, 7
    %v1286 = vperm.slane %v1275, 0
    %v1287 = vperm.slane %v1275, 1
    %v1288 = vperm.slane %v1275, 2
    %v1289 = vperm.slane %v1275, 3
    %v1290 = vperm.slane %v1275, 4
    %v1291 = vperm.slane %v1275, 5
    %v1292 = vperm.slane %v1275, 6
    %v1293 = vperm.slane %v1275, 7
    %v1326 = vunpack.c.l.b16 %v1258
    %v1327 = vunpack.c.h.b16 %v1258
    %v1328 = vunpack.c.l.b16 %v1259
    %v1329 = vunpack.c.h.b16 %v1259
    %v1330 = vunpack.c.l.b16 %v1260
    %v1331 = vunpack.c.h.b16 %v1260
    %v1332 = vunpack.c.l.b16 %v1261
    %v1333 = vunpack.c.h.b16 %v1261
    %v1334 = vunpack.c.l.b16 %v1262
    %v1335 = vunpack.c.h.b16 %v1262
    %v1336 = vunpack.c.l.b16 %v1263
    %v1337 = vunpack.c.h.b16 %v1263
    %v1338 = vunpack.c.l.b16 %v1264
    %v1339 = vunpack.c.h.b16 %v1264
    %v1340 = vunpack.c.l.b16 %v1265
    %v1341 = vunpack.c.h.b16 %v1265
    %v1342 = vunpack.c.l.b16 %v1266
    %v1343 = vunpack.c.h.b16 %v1266
    %v1344 = vunpack.c.l.b16 %v1267
    %v1345 = vunpack.c.h.b16 %v1267
    %v1346 = vunpack.c.l.b16 %v1268
    %v1347 = vunpack.c.h.b16 %v1268
    %v1348 = vunpack.c.l.b16 %v1269
    %v1349 = vunpack.c.h.b16 %v1269
    %v1350 = vunpack.c.l.b16 %v1270
    %v1351 = vunpack.c.h.b16 %v1270
    %v1352 = vunpack.c.l.b16 %v1271
    %v1353 = vunpack.c.h.b16 %v1271
    %v1354 = vunpack.c.l.b16 %v1272
    %v1355 = vunpack.c.h.b16 %v1272
    %v1356 = vunpack.c.l.b16 %v1273
    %v1357 = vunpack.c.h.b16 %v1273
    %v1358 = vpack.c.b16 %v1342, %v1326
    %v1359 = vpack.c.b16 %v1343, %v1327
    %v1360 = vpack.c.b16 %v1344, %v1328
    %v1361 = vpack.c.b16 %v1345, %v1329
    %v1362 = vpack.c.b16 %v1346, %v1330
    %v1363 = vpack.c.b16 %v1347, %v1331
    %v1364 = vpack.c.b16 %v1348, %v1332
    %v1365 = vpack.c.b16 %v1349, %v1333
    %v1366 = vpack.c.b16 %v1350, %v1334
    %v1367 = vpack.c.b16 %v1351, %v1335
    %v1368 = vpack.c.b16 %v1352, %v1336
    %v1369 = vpack.c.b16 %v1353, %v1337
    %v1370 = vpack.c.b16 %v1354, %v1338
    %v1371 = vpack.c.b16 %v1355, %v1339
    %v1372 = vpack.c.b16 %v1356, %v1340
    %v1373 = vpack.c.b16 %v1357, %v1341
    %v1391 = vsel %vm219, %v1256, 0
    %v1394 = vsel %vm219, %v1257, 0
    %1396 = vmatpush.bf16.msra.mxu0 0
    %1397 = vmatpush.bf16.msra.mxu0 0
    %1398 = vmatpush.bf16.msra.mxu0 0
    %1399 = vmatpush.bf16.msra.mxu0 0
    %1400 = vmatpush.bf16.msra.mxu0 0
    %1401 = vmatpush.bf16.msra.mxu0 0
    %1402 = vmatpush.bf16.msra.mxu0 0
    %1403 = vmatpush.bf16.msra.mxu0 %v1358
    %1404 = vmatmul.bf16.gmra.mxu0 %v1391
    %v1405 = vpop.f32.mrf.mxu0
    %v1406 = vadd.f32 %v1278, %v1405
    %v1407 = vpop.f32.mrf.mxu0
    %v1408 = vadd.f32 %v1278, %v1407
    %1409 = vmatmul.bf16.gmra.mxu0 %v1394
    %v1410 = vpop.f32.mrf.mxu0
    %v1411 = vadd.f32 %v1278, %v1410
    %v1412 = vpop.f32.mrf.mxu0
    %v1413 = vadd.f32 %v1278, %v1412
    %1414 = vdwg.mxu0
    %1415 = vmatpush.bf16.msra.mxu0 0
    %1416 = vmatpush.bf16.msra.mxu0 0
    %1417 = vmatpush.bf16.msra.mxu0 0
    %1418 = vmatpush.bf16.msra.mxu0 0
    %1419 = vmatpush.bf16.msra.mxu0 0
    %1420 = vmatpush.bf16.msra.mxu0 0
    %1421 = vmatpush.bf16.msra.mxu0 0
    %1422 = vmatpush.bf16.msra.mxu0 %v1359
    %1423 = vmatmul.bf16.gmra.mxu0 %v1391
    %v1424 = vpop.f32.mrf.mxu0
    %v1425 = vadd.f32 %v1279, %v1424
    %v1426 = vpop.f32.mrf.mxu0
    %v1427 = vadd.f32 %v1279, %v1426
    %1428 = vmatmul.bf16.gmra.mxu0 %v1394
    %v1429 = vpop.f32.mrf.mxu0
    %v1430 = vadd.f32 %v1279, %v1429
    %v1431 = vpop.f32.mrf.mxu0
    %v1432 = vadd.f32 %v1279, %v1431
    %1433 = vdwg.mxu0
    %1434 = vmatpush.bf16.msra.mxu0 0
    %1435 = vmatpush.bf16.msra.mxu0 0
    %1436 = vmatpush.bf16.msra.mxu0 0
    %1437 = vmatpush.bf16.msra.mxu0 0
    %1438 = vmatpush.bf16.msra.mxu0 0
    %1439 = vmatpush.bf16.msra.mxu0 0
    %1440 = vmatpush.bf16.msra.mxu0 0
    %1441 = vmatpush.bf16.msra.mxu0 %v1360
    %1442 = vmatmul.bf16.gmra.mxu0 %v1391
    %v1443 = vpop.f32.mrf.mxu0
    %v1444 = vadd.f32 %v1280, %v1443
    %v1445 = vpop.f32.mrf.mxu0
    %v1446 = vadd.f32 %v1280, %v1445
    %1447 = vmatmul.bf16.gmra.mxu0 %v1394
    %v1448 = vpop.f32.mrf.mxu0
    %v1449 = vadd.f32 %v1280, %v1448
    %v1450 = vpop.f32.mrf.mxu0
    %v1451 = vadd.f32 %v1280, %v1450
    %1452 = vdwg.mxu0
    %1453 = vmatpush.bf16.msra.mxu0 0
    %1454 = vmatpush.bf16.msra.mxu0 0
    %1455 = vmatpush.bf16.msra.mxu0 0
    %1456 = vmatpush.bf16.msra.mxu0 0
    %1457 = vmatpush.bf16.msra.mxu0 0
    %1458 = vmatpush.bf16.msra.mxu0 0
    %1459 = vmatpush.bf16.msra.mxu0 0
    %1460 = vmatpush.bf16.msra.mxu0 %v1361
    %1461 = vmatmul.bf16.gmra.mxu0 %v1391
    %v1462 = vpop.f32.mrf.mxu0
    %v1463 = vadd.f32 %v1281, %v1462
    %v1464 = vpop.f32.mrf.mxu0
    %v1465 = vadd.f32 %v1281, %v1464
    %1466 = vmatmul.bf16.gmra.mxu0 %v1394
    %v1467 = vpop.f32.mrf.mxu0
    %v1468 = vadd.f32 %v1281, %v1467
    %v1469 = vpop.f32.mrf.mxu0
    %v1470 = vadd.f32 %v1281, %v1469
    %1471 = vdwg.mxu0
    %1472 = vmatpush.bf16.msra.mxu0 0
    %1473 = vmatpush.bf16.msra.mxu0 0
    %1474 = vmatpush.bf16.msra.mxu0 0
    %1475 = vmatpush.bf16.msra.mxu0 0
    %1476 = vmatpush.bf16.msra.mxu0 0
    %1477 = vmatpush.bf16.msra.mxu0 0
    %1478 = vmatpush.bf16.msra.mxu0 0
    %1479 = vmatpush.bf16.msra.mxu0 %v1362
    %1480 = vmatmul.bf16.gmra.mxu0 %v1391
    %v1481 = vpop.f32.mrf.mxu0
    %v1482 = vadd.f32 %v1282, %v1481
    %v1483 = vpop.f32.mrf.mxu0
    %v1484 = vadd.f32 %v1282, %v1483
    %1485 = vmatmul.bf16.gmra.mxu0 %v1394
    %v1486 = vpop.f32.mrf.mxu0
    %v1487 = vadd.f32 %v1282, %v1486
    %v1488 = vpop.f32.mrf.mxu0
    %v1489 = vadd.f32 %v1282, %v1488
    %1490 = vdwg.mxu0
    %1491 = vmatpush.bf16.msra.mxu0 0
    %1492 = vmatpush.bf16.msra.mxu0 0
    %1493 = vmatpush.bf16.msra.mxu0 0
    %1494 = vmatpush.bf16.msra.mxu0 0
    %1495 = vmatpush.bf16.msra.mxu0 0
    %1496 = vmatpush.bf16.msra.mxu0 0
    %1497 = vmatpush.bf16.msra.mxu0 0
    %1498 = vmatpush.bf16.msra.mxu0 %v1363
    %1499 = vmatmul.bf16.gmra.mxu0 %v1391
    %v1500 = vpop.f32.mrf.mxu0
    %v1501 = vadd.f32 %v1283, %v1500
    %v1502 = vpop.f32.mrf.mxu0
    %v1503 = vadd.f32 %v1283, %v1502
    %1504 = vmatmul.bf16.gmra.mxu0 %v1394
    %v1505 = vpop.f32.mrf.mxu0
    %v1506 = vadd.f32 %v1283, %v1505
    %v1507 = vpop.f32.mrf.mxu0
    %v1508 = vadd.f32 %v1283, %v1507
    %1509 = vdwg.mxu0
    %1510 = vmatpush.bf16.msra.mxu0 0
    %1511 = vmatpush.bf16.msra.mxu0 0
    %1512 = vmatpush.bf16.msra.mxu0 0
    %1513 = vmatpush.bf16.msra.mxu0 0
    %1514 = vmatpush.bf16.msra.mxu0 0
    %1515 = vmatpush.bf16.msra.mxu0 0
    %1516 = vmatpush.bf16.msra.mxu0 0
    %1517 = vmatpush.bf16.msra.mxu0 %v1364
    %1518 = vmatmul.bf16.gmra.mxu0 %v1391
    %v1519 = vpop.f32.mrf.mxu0
    %v1520 = vadd.f32 %v1284, %v1519
    %v1521 = vpop.f32.mrf.mxu0
    %v1522 = vadd.f32 %v1284, %v1521
    %1523 = vmatmul.bf16.gmra.mxu0 %v1394
    %v1524 = vpop.f32.mrf.mxu0
    %v1525 = vadd.f32 %v1284, %v1524
    %v1526 = vpop.f32.mrf.mxu0
    %v1527 = vadd.f32 %v1284, %v1526
    %1528 = vdwg.mxu0
    %1529 = vmatpush.bf16.msra.mxu0 0
    %1530 = vmatpush.bf16.msra.mxu0 0
    %1531 = vmatpush.bf16.msra.mxu0 0
    %1532 = vmatpush.bf16.msra.mxu0 0
    %1533 = vmatpush.bf16.msra.mxu0 0
    %1534 = vmatpush.bf16.msra.mxu0 0
    %1535 = vmatpush.bf16.msra.mxu0 0
    %1536 = vmatpush.bf16.msra.mxu0 %v1365
    %1537 = vmatmul.bf16.gmra.mxu0 %v1391
    %v1538 = vpop.f32.mrf.mxu0
    %v1539 = vadd.f32 %v1285, %v1538
    %v1540 = vpop.f32.mrf.mxu0
    %v1541 = vadd.f32 %v1285, %v1540
    %1542 = vmatmul.bf16.gmra.mxu0 %v1394
    %v1543 = vpop.f32.mrf.mxu0
    %v1544 = vadd.f32 %v1285, %v1543
    %v1545 = vpop.f32.mrf.mxu0
    %v1546 = vadd.f32 %v1285, %v1545
    %1547 = vdwg.mxu0
    %1548 = vmatpush.bf16.msra.mxu0 0
    %1549 = vmatpush.bf16.msra.mxu0 0
    %1550 = vmatpush.bf16.msra.mxu0 0
    %1551 = vmatpush.bf16.msra.mxu0 0
    %1552 = vmatpush.bf16.msra.mxu0 0
    %1553 = vmatpush.bf16.msra.mxu0 0
    %1554 = vmatpush.bf16.msra.mxu0 0
    %1555 = vmatpush.bf16.msra.mxu0 %v1366
    %1556 = vmatmul.bf16.gmra.mxu0 %v1391
    %v1557 = vpop.f32.mrf.mxu0
    %v1558 = vadd.f32 %v1286, %v1557
    %v1559 = vpop.f32.mrf.mxu0
    %v1560 = vadd.f32 %v1286, %v1559
    %1561 = vmatmul.bf16.gmra.mxu0 %v1394
    %v1562 = vpop.f32.mrf.mxu0
    %v1563 = vadd.f32 %v1286, %v1562
    %v1564 = vpop.f32.mrf.mxu0
    %v1565 = vadd.f32 %v1286, %v1564
    %1566 = vdwg.mxu0
    %1567 = vmatpush.bf16.msra.mxu0 0
    %1568 = vmatpush.bf16.msra.mxu0 0
    %1569 = vmatpush.bf16.msra.mxu0 0
    %1570 = vmatpush.bf16.msra.mxu0 0
    %1571 = vmatpush.bf16.msra.mxu0 0
    %1572 = vmatpush.bf16.msra.mxu0 0
    %1573 = vmatpush.bf16.msra.mxu0 0
    %1574 = vmatpush.bf16.msra.mxu0 %v1367
    %1575 = vmatmul.bf16.gmra.mxu0 %v1391
    %v1576 = vpop.f32.mrf.mxu0
    %v1577 = vadd.f32 %v1287, %v1576
    %v1578 = vpop.f32.mrf.mxu0
    %v1579 = vadd.f32 %v1287, %v1578
    %1580 = vmatmul.bf16.gmra.mxu0 %v1394
    %v1581 = vpop.f32.mrf.mxu0
    %v1582 = vadd.f32 %v1287, %v1581
    %v1583 = vpop.f32.mrf.mxu0
    %v1584 = vadd.f32 %v1287, %v1583
    %1585 = vdwg.mxu0
    %1586 = vmatpush.bf16.msra.mxu0 0
    %1587 = vmatpush.bf16.msra.mxu0 0
    %1588 = vmatpush.bf16.msra.mxu0 0
    %1589 = vmatpush.bf16.msra.mxu0 0
    %1590 = vmatpush.bf16.msra.mxu0 0
    %1591 = vmatpush.bf16.msra.mxu0 0
    %1592 = vmatpush.bf16.msra.mxu0 0
    %1593 = vmatpush.bf16.msra.mxu0 %v1368
    %1594 = vmatmul.bf16.gmra.mxu0 %v1391
    %v1595 = vpop.f32.mrf.mxu0
    %v1596 = vadd.f32 %v1288, %v1595
    %v1597 = vpop.f32.mrf.mxu0
    %v1598 = vadd.f32 %v1288, %v1597
    %1599 = vmatmul.bf16.gmra.mxu0 %v1394
    %v1600 = vpop.f32.mrf.mxu0
    %v1601 = vadd.f32 %v1288, %v1600
    %v1602 = vpop.f32.mrf.mxu0
    %v1603 = vadd.f32 %v1288, %v1602
    %1604 = vdwg.mxu0
    %1605 = vmatpush.bf16.msra.mxu0 0
    %1606 = vmatpush.bf16.msra.mxu0 0
    %1607 = vmatpush.bf16.msra.mxu0 0
    %1608 = vmatpush.bf16.msra.mxu0 0
    %1609 = vmatpush.bf16.msra.mxu0 0
    %1610 = vmatpush.bf16.msra.mxu0 0
    %1611 = vmatpush.bf16.msra.mxu0 0
    %1612 = vmatpush.bf16.msra.mxu0 %v1369
    %1613 = vmatmul.bf16.gmra.mxu0 %v1391
    %v1614 = vpop.f32.mrf.mxu0
    %v1615 = vadd.f32 %v1289, %v1614
    %v1616 = vpop.f32.mrf.mxu0
    %v1617 = vadd.f32 %v1289, %v1616
    %1618 = vmatmul.bf16.gmra.mxu0 %v1394
    %v1619 = vpop.f32.mrf.mxu0
    %v1620 = vadd.f32 %v1289, %v1619
    %v1621 = vpop.f32.mrf.mxu0
    %v1622 = vadd.f32 %v1289, %v1621
    %1623 = vdwg.mxu0
    %1624 = vmatpush.bf16.msra.mxu0 0
    %1625 = vmatpush.bf16.msra.mxu0 0
    %1626 = vmatpush.bf16.msra.mxu0 0
    %1627 = vmatpush.bf16.msra.mxu0 0
    %1628 = vmatpush.bf16.msra.mxu0 0
    %1629 = vmatpush.bf16.msra.mxu0 0
    %1630 = vmatpush.bf16.msra.mxu0 0
    %1631 = vmatpush.bf16.msra.mxu0 %v1370
    %1632 = vmatmul.bf16.gmra.mxu0 %v1391
    %v1633 = vpop.f32.mrf.mxu0
    %v1634 = vadd.f32 %v1290, %v1633
    %v1635 = vpop.f32.mrf.mxu0
    %v1636 = vadd.f32 %v1290, %v1635
    %1637 = vmatmul.bf16.gmra.mxu0 %v1394
    %v1638 = vpop.f32.mrf.mxu0
    %v1639 = vadd.f32 %v1290, %v1638
    %v1640 = vpop.f32.mrf.mxu0
    %v1641 = vadd.f32 %v1290, %v1640
    %1642 = vdwg.mxu0
    %1643 = vmatpush.bf16.msra.mxu0 0
    %1644 = vmatpush.bf16.msra.mxu0 0
    %1645 = vmatpush.bf16.msra.mxu0 0
    %1646 = vmatpush.bf16.msra.mxu0 0
    %1647 = vmatpush.bf16.msra.mxu0 0
    %1648 = vmatpush.bf16.msra.mxu0 0
    %1649 = vmatpush.bf16.msra.mxu0 0
    %1650 = vmatpush.bf16.msra.mxu0 %v1371
    %1651 = vmatmul.bf16.gmra.mxu0 %v1391
    %v1652 = vpop.f32.mrf.mxu0
    %v1653 = vadd.f32 %v1291, %v1652
    %v1654 = vpop.f32.mrf.mxu0
    %v1655 = vadd.f32 %v1291, %v1654
    %1656 = vmatmul.bf16.gmra.mxu0 %v1394
    %v1657 = vpop.f32.mrf.mxu0
    %v1658 = vadd.f32 %v1291, %v1657
    %v1659 = vpop.f32.mrf.mxu0
    %v1660 = vadd.f32 %v1291, %v1659
    %1661 = vdwg.mxu0
    %1662 = vmatpush.bf16.msra.mxu0 0
    %1663 = vmatpush.bf16.msra.mxu0 0
    %1664 = vmatpush.bf16.msra.mxu0 0
    %1665 = vmatpush.bf16.msra.mxu0 0
    %1666 = vmatpush.bf16.msra.mxu0 0
    %1667 = vmatpush.bf16.msra.mxu0 0
    %1668 = vmatpush.bf16.msra.mxu0 0
    %1669 = vmatpush.bf16.msra.mxu0 %v1372
    %1670 = vmatmul.bf16.gmra.mxu0 %v1391
    %v1671 = vpop.f32.mrf.mxu0
    %v1672 = vadd.f32 %v1292, %v1671
    %v1673 = vpop.f32.mrf.mxu0
    %v1674 = vadd.f32 %v1292, %v1673
    %1675 = vmatmul.bf16.gmra.mxu0 %v1394
    %v1676 = vpop.f32.mrf.mxu0
    %v1677 = vadd.f32 %v1292, %v1676
    %v1678 = vpop.f32.mrf.mxu0
    %v1679 = vadd.f32 %v1292, %v1678
    %1680 = vdwg.mxu0
    %1681 = vmatpush.bf16.msra.mxu0 0
    %1682 = vmatpush.bf16.msra.mxu0 0
    %1683 = vmatpush.bf16.msra.mxu0 0
    %1684 = vmatpush.bf16.msra.mxu0 0
    %1685 = vmatpush.bf16.msra.mxu0 0
    %1686 = vmatpush.bf16.msra.mxu0 0
    %1687 = vmatpush.bf16.msra.mxu0 0
    %1688 = vmatpush.bf16.msra.mxu0 %v1373
    %1689 = vmatmul.bf16.gmra.mxu0 %v1391
    %v1690 = vpop.f32.mrf.mxu0
    %v1691 = vadd.f32 %v1293, %v1690
    %v1692 = vpop.f32.mrf.mxu0
    %v1693 = vadd.f32 %v1293, %v1692
    %1694 = vmatmul.bf16.gmra.mxu0 %v1394
    %v1695 = vpop.f32.mrf.mxu0
    %v1696 = vadd.f32 %v1293, %v1695
    %v1697 = vpop.f32.mrf.mxu0
    %v1698 = vadd.f32 %v1293, %v1697
    %1699 = vdwg.mxu0
    %v1700 = vmax.f32 %v1406, 0.0
    %v1701 = vmax.f32 %v1425, 0.0
    %v1702 = vmax.f32 %v1444, 0.0
    %v1703 = vmax.f32 %v1463, 0.0
    %v1704 = vmax.f32 %v1482, 0.0
    %v1705 = vmax.f32 %v1501, 0.0
    %v1706 = vmax.f32 %v1520, 0.0
    %v1707 = vmax.f32 %v1539, 0.0
    %v1708 = vmax.f32 %v1558, 0.0
    %v1709 = vmax.f32 %v1577, 0.0
    %v1710 = vmax.f32 %v1596, 0.0
    %v1711 = vmax.f32 %v1615, 0.0
    %v1712 = vmax.f32 %v1634, 0.0
    %v1713 = vmax.f32 %v1653, 0.0
    %v1714 = vmax.f32 %v1672, 0.0
    %v1715 = vmax.f32 %v1691, 0.0
    %v1716 = vmax.f32 %v1408, 0.0
    %v1717 = vmax.f32 %v1427, 0.0
    %v1718 = vmax.f32 %v1446, 0.0
    %v1719 = vmax.f32 %v1465, 0.0
    %v1720 = vmax.f32 %v1484, 0.0
    %v1721 = vmax.f32 %v1503, 0.0
    %v1722 = vmax.f32 %v1522, 0.0
    %v1723 = vmax.f32 %v1541, 0.0
    %v1724 = vmax.f32 %v1560, 0.0
    %v1725 = vmax.f32 %v1579, 0.0
    %v1726 = vmax.f32 %v1598, 0.0
    %v1727 = vmax.f32 %v1617, 0.0
    %v1728 = vmax.f32 %v1636, 0.0
    %v1729 = vmax.f32 %v1655, 0.0
    %v1730 = vmax.f32 %v1674, 0.0
    %v1731 = vmax.f32 %v1693, 0.0
    %v1732 = vmax.f32 %v1411, 0.0
    %v1733 = vmax.f32 %v1430, 0.0
    %v1734 = vmax.f32 %v1449, 0.0
    %v1735 = vmax.f32 %v1468, 0.0
    %v1736 = vmax.f32 %v1487, 0.0
    %v1737 = vmax.f32 %v1506, 0.0
    %v1738 = vmax.f32 %v1525, 0.0
    %v1739 = vmax.f32 %v1544, 0.0
    %v1740 = vmax.f32 %v1563, 0.0
    %v1741 = vmax.f32 %v1582, 0.0
    %v1742 = vmax.f32 %v1601, 0.0
    %v1743 = vmax.f32 %v1620, 0.0
    %v1744 = vmax.f32 %v1639, 0.0
    %v1745 = vmax.f32 %v1658, 0.0
    %v1746 = vmax.f32 %v1677, 0.0
    %v1747 = vmax.f32 %v1696, 0.0
    %v1748 = vmax.f32 %v1413, 0.0
    %v1749 = vmax.f32 %v1432, 0.0
    %v1750 = vmax.f32 %v1451, 0.0
    %v1751 = vmax.f32 %v1470, 0.0
    %v1752 = vmax.f32 %v1489, 0.0
    %v1753 = vmax.f32 %v1508, 0.0
    %v1754 = vmax.f32 %v1527, 0.0
    %v1755 = vmax.f32 %v1546, 0.0
    %v1756 = vmax.f32 %v1565, 0.0
    %v1757 = vmax.f32 %v1584, 0.0
    %v1758 = vmax.f32 %v1603, 0.0
    %v1759 = vmax.f32 %v1622, 0.0
    %v1760 = vmax.f32 %v1641, 0.0
    %v1761 = vmax.f32 %v1660, 0.0
    %v1762 = vmax.f32 %v1679, 0.0
    %v1763 = vmax.f32 %v1698, 0.0
    %v1764 = vpack.c.bf16 %v1716, %v1700
    %v1765 = vpack.c.bf16 %v1717, %v1701
    %v1766 = vpack.c.bf16 %v1718, %v1702
    %v1767 = vpack.c.bf16 %v1719, %v1703
    %v1768 = vpack.c.bf16 %v1720, %v1704
    %v1769 = vpack.c.bf16 %v1721, %v1705
    %v1770 = vpack.c.bf16 %v1722, %v1706
    %v1771 = vpack.c.bf16 %v1723, %v1707
    %v1772 = vpack.c.bf16 %v1724, %v1708
    %v1773 = vpack.c.bf16 %v1725, %v1709
    %v1774 = vpack.c.bf16 %v1726, %v1710
    %v1775 = vpack.c.bf16 %v1727, %v1711
    %v1776 = vpack.c.bf16 %v1728, %v1712
    %v1777 = vpack.c.bf16 %v1729, %v1713
    %v1778 = vpack.c.bf16 %v1730, %v1714
    %v1779 = vpack.c.bf16 %v1731, %v1715
    %v1780 = vpack.c.bf16 %v1748, %v1732
    %v1781 = vpack.c.bf16 %v1749, %v1733
    %v1782 = vpack.c.bf16 %v1750, %v1734
    %v1783 = vpack.c.bf16 %v1751, %v1735
    %v1784 = vpack.c.bf16 %v1752, %v1736
    %v1785 = vpack.c.bf16 %v1753, %v1737
    %v1786 = vpack.c.bf16 %v1754, %v1738
    %v1787 = vpack.c.bf16 %v1755, %v1739
    %v1788 = vpack.c.bf16 %v1756, %v1740
    %v1789 = vpack.c.bf16 %v1757, %v1741
    %v1790 = vpack.c.bf16 %v1758, %v1742
    %v1791 = vpack.c.bf16 %v1759, %v1743
    %v1792 = vpack.c.bf16 %v1760, %v1744
    %v1793 = vpack.c.bf16 %v1761, %v1745
    %v1794 = vpack.c.bf16 %v1762, %v1746
    %v1795 = vpack.c.bf16 %v1763, %v1747
    %v1796 = vld [vmem:[%s10] sm:$0xf]
    %v1797 = vld [vmem:[%s10 + $0x4] sm:$0xf]
    %v1798 = vld [vmem:[%s10 + $0x8] sm:$0xf]
    %v1799 = vld [vmem:[%s10 + $0xc] sm:$0xf]
    %v1800 = vld [vmem:[%s10 + $0x10] sm:$0xf]
    %v1801 = vld [vmem:[%s10 + $0x14] sm:$0xf]
    %v1802 = vld [vmem:[%s10 + $0x18] sm:$0xf]
    %v1803 = vld [vmem:[%s10 + $0x1c] sm:$0xf]
    %v1804 = vld [vmem:[%s10 + $0x20] sm:$0xf]
    %v1805 = vld [vmem:[%s10 + $0x24] sm:$0xf]
    %v1806 = vld [vmem:[%s10 + $0x28] sm:$0xf]
    %v1807 = vld [vmem:[%s10 + $0x2c] sm:$0xf]
    %v1808 = vld [vmem:[%s10 + $0x30] sm:$0xf]
    %v1809 = vld [vmem:[%s10 + $0x34] sm:$0xf]
    %v1810 = vld [vmem:[%s10 + $0x38] sm:$0xf]
    %v1811 = vld [vmem:[%s10 + $0x3c] sm:$0xf]
    %v1812 = vld [vmem:[%s10 + $0x40] sm:$0xf]
    %v1813 = vld [vmem:[%s10 + $0x44] sm:$0xf]
    %v1814 = vld [vmem:[%s10 + $0x48] sm:$0xf]
    %v1815 = vld [vmem:[%s10 + $0x4c] sm:$0xf]
    %v1816 = vld [vmem:[%s10 + $0x50] sm:$0xf]
    %v1817 = vld [vmem:[%s10 + $0x54] sm:$0xf]
    %v1818 = vld [vmem:[%s10 + $0x58] sm:$0xf]
    %v1819 = vld [vmem:[%s10 + $0x5c] sm:$0xf]
    %v1820 = vld [vmem:[%s10 + $0x60] sm:$0xf]
    %v1821 = vld [vmem:[%s10 + $0x64] sm:$0xf]
    %v1822 = vld [vmem:[%s10 + $0x68] sm:$0xf]
    %v1823 = vld [vmem:[%s10 + $0x6c] sm:$0xf]
    %v1824 = vld [vmem:[%s10 + $0x70] sm:$0xf]
    %v1825 = vld [vmem:[%s10 + $0x74] sm:$0xf]
    %v1826 = vld [vmem:[%s10 + $0x78] sm:$0xf]
    %v1827 = vld [vmem:[%s10 + $0x7c] sm:$0xf]
    %v1828 = vld [vmem:[%s10 + $0x80] sm:$0xf]
    %v1829 = vld [vmem:[%s10 + $0x84] sm:$0xf]
    %v1830 = vld [vmem:[%s10 + $0x88] sm:$0xf]
    %v1831 = vld [vmem:[%s10 + $0x8c] sm:$0xf]
    %v1832 = vld [vmem:[%s10 + $0x90] sm:$0xf]
    %v1833 = vld [vmem:[%s10 + $0x94] sm:$0xf]
    %v1834 = vld [vmem:[%s10 + $0x98] sm:$0xf]
    %v1835 = vld [vmem:[%s10 + $0x9c] sm:$0xf]
    %v1836 = vld [vmem:[%s10 + $0xa0] sm:$0xf]
    %v1837 = vld [vmem:[%s10 + $0xa4] sm:$0xf]
    %v1838 = vld [vmem:[%s10 + $0xa8] sm:$0xf]
    %v1839 = vld [vmem:[%s10 + $0xac] sm:$0xf]
    %v1840 = vld [vmem:[%s10 + $0xb0] sm:$0xf]
    %v1841 = vld [vmem:[%s10 + $0xb4] sm:$0xf]
    %v1842 = vld [vmem:[%s10 + $0xb8] sm:$0xf]
    %v1843 = vld [vmem:[%s10 + $0xbc] sm:$0xf]
    %v1844 = vld [vmem:[%s10 + $0xc0] sm:$0xf]
    %v1845 = vld [vmem:[%s10 + $0xc4] sm:$0xf]
    %v1846 = vld [vmem:[%s10 + $0xc8] sm:$0xf]
    %v1847 = vld [vmem:[%s10 + $0xcc] sm:$0xf]
    %v1848 = vld [vmem:[%s10 + $0xd0] sm:$0xf]
    %v1849 = vld [vmem:[%s10 + $0xd4] sm:$0xf]
    %v1850 = vld [vmem:[%s10 + $0xd8] sm:$0xf]
    %v1851 = vld [vmem:[%s10 + $0xdc] sm:$0xf]
    %v1852 = vld [vmem:[%s10 + $0xe0] sm:$0xf]
    %v1853 = vld [vmem:[%s10 + $0xe4] sm:$0xf]
    %v1854 = vld [vmem:[%s10 + $0xe8] sm:$0xf]
    %v1855 = vld [vmem:[%s10 + $0xec] sm:$0xf]
    %v1856 = vld [vmem:[%s10 + $0xf0] sm:$0xf]
    %v1857 = vld [vmem:[%s10 + $0xf4] sm:$0xf]
    %v1858 = vld [vmem:[%s10 + $0xf8] sm:$0xf]
    %v1859 = vld [vmem:[%s10 + $0xfc] sm:$0xf]
    %v1860 = vld [vmem:[%s10 + $0x100] sm:$0xf]
    %v1861 = vld [vmem:[%s10 + $0x104] sm:$0xf]
    %v1862 = vld [vmem:[%s10 + $0x108] sm:$0xf]
    %v1863 = vld [vmem:[%s10 + $0x10c] sm:$0xf]
    %v1864 = vld [vmem:[%s10 + $0x110] sm:$0xf]
    %v1865 = vld [vmem:[%s10 + $0x114] sm:$0xf]
    %v1866 = vld [vmem:[%s10 + $0x118] sm:$0xf]
    %v1867 = vld [vmem:[%s10 + $0x11c] sm:$0xf]
    %v1868 = vld [vmem:[%s10 + $0x120] sm:$0xf]
    %v1869 = vld [vmem:[%s10 + $0x124] sm:$0xf]
    %v1870 = vld [vmem:[%s10 + $0x128] sm:$0xf]
    %v1871 = vld [vmem:[%s10 + $0x12c] sm:$0xf]
    %v1872 = vld [vmem:[%s10 + $0x130] sm:$0xf]
    %v1873 = vld [vmem:[%s10 + $0x134] sm:$0xf]
    %v1874 = vld [vmem:[%s10 + $0x138] sm:$0xf]
    %v1875 = vld [vmem:[%s10 + $0x13c] sm:$0xf]
    %v1876 = vld [vmem:[%s10 + $0x140] sm:$0xf]
    %v1877 = vld [vmem:[%s10 + $0x144] sm:$0xf]
    %v1878 = vld [vmem:[%s10 + $0x148] sm:$0xf]
    %v1879 = vld [vmem:[%s10 + $0x14c] sm:$0xf]
    %v1880 = vld [vmem:[%s10 + $0x150] sm:$0xf]
    %v1881 = vld [vmem:[%s10 + $0x154] sm:$0xf]
    %v1882 = vld [vmem:[%s10 + $0x158] sm:$0xf]
    %v1883 = vld [vmem:[%s10 + $0x15c] sm:$0xf]
    %v1884 = vld [vmem:[%s10 + $0x160] sm:$0xf]
    %v1885 = vld [vmem:[%s10 + $0x164] sm:$0xf]
    %v1886 = vld [vmem:[%s10 + $0x168] sm:$0xf]
    %v1887 = vld [vmem:[%s10 + $0x16c] sm:$0xf]
    %v1888 = vld [vmem:[%s10 + $0x170] sm:$0xf]
    %v1889 = vld [vmem:[%s10 + $0x174] sm:$0xf]
    %v1890 = vld [vmem:[%s10 + $0x178] sm:$0xf]
    %v1891 = vld [vmem:[%s10 + $0x17c] sm:$0xf]
    %v1892 = vld [vmem:[%s10 + $0x180] sm:$0xf]
    %v1893 = vld [vmem:[%s10 + $0x184] sm:$0xf]
    %v1894 = vld [vmem:[%s10 + $0x188] sm:$0xf]
    %v1895 = vld [vmem:[%s10 + $0x18c] sm:$0xf]
    %v1896 = vld [vmem:[%s10 + $0x190] sm:$0xf]
    %v1897 = vld [vmem:[%s10 + $0x194] sm:$0xf]
    %v1898 = vld [vmem:[%s10 + $0x198] sm:$0xf]
    %v1899 = vld [vmem:[%s10 + $0x19c] sm:$0xf]
    %v1900 = vld [vmem:[%s10 + $0x1a0] sm:$0xf]
    %v1901 = vld [vmem:[%s10 + $0x1a4] sm:$0xf]
    %v1902 = vld [vmem:[%s10 + $0x1a8] sm:$0xf]
    %v1903 = vld [vmem:[%s10 + $0x1ac] sm:$0xf]
    %v1904 = vld [vmem:[%s10 + $0x1b0] sm:$0xf]
    %v1905 = vld [vmem:[%s10 + $0x1b4] sm:$0xf]
    %v1906 = vld [vmem:[%s10 + $0x1b8] sm:$0xf]
    %v1907 = vld [vmem:[%s10 + $0x1bc] sm:$0xf]
    %v1908 = vld [vmem:[%s10 + $0x1c0] sm:$0xf]
    %v1909 = vld [vmem:[%s10 + $0x1c4] sm:$0xf]
    %v1910 = vld [vmem:[%s10 + $0x1c8] sm:$0xf]
    %v1911 = vld [vmem:[%s10 + $0x1cc] sm:$0xf]
    %v1912 = vld [vmem:[%s10 + $0x1d0] sm:$0xf]
    %v1913 = vld [vmem:[%s10 + $0x1d4] sm:$0xf]
    %v1914 = vld [vmem:[%s10 + $0x1d8] sm:$0xf]
    %v1915 = vld [vmem:[%s10 + $0x1dc] sm:$0xf]
    %v1916 = vld [vmem:[%s10 + $0x1e0] sm:$0xf]
    %v1917 = vld [vmem:[%s10 + $0x1e4] sm:$0xf]
    %v1918 = vld [vmem:[%s10 + $0x1e8] sm:$0xf]
    %v1919 = vld [vmem:[%s10 + $0x1ec] sm:$0xf]
    %v1920 = vld [vmem:[%s10 + $0x1f0] sm:$0xf]
    %v1921 = vld [vmem:[%s10 + $0x1f4] sm:$0xf]
    %v1922 = vld [vmem:[%s10 + $0x1f8] sm:$0xf]
    %v1923 = vld [vmem:[%s10 + $0x1fc] sm:$0xf]
    %v1924 = vld [vmem:[%s10 + $0x200] sm:$0xf]
    %v1925 = vld [vmem:[%s10 + $0x204] sm:$0xf]
    %v1926 = vld [vmem:[%s10 + $0x208] sm:$0xf]
    %v1927 = vld [vmem:[%s10 + $0x20c] sm:$0xf]
    %v1928 = vld [vmem:[%s10 + $0x210] sm:$0xf]
    %v1929 = vld [vmem:[%s10 + $0x214] sm:$0xf]
    %v1930 = vld [vmem:[%s10 + $0x218] sm:$0xf]
    %v1931 = vld [vmem:[%s10 + $0x21c] sm:$0xf]
    %v1932 = vld [vmem:[%s10 + $0x220] sm:$0xf]
    %v1933 = vld [vmem:[%s10 + $0x224] sm:$0xf]
    %v1934 = vld [vmem:[%s10 + $0x228] sm:$0xf]
    %v1935 = vld [vmem:[%s10 + $0x22c] sm:$0xf]
    %v1936 = vld [vmem:[%s10 + $0x230] sm:$0xf]
    %v1937 = vld [vmem:[%s10 + $0x234] sm:$0xf]
    %v1938 = vld [vmem:[%s10 + $0x238] sm:$0xf]
    %v1939 = vld [vmem:[%s10 + $0x23c] sm:$0xf]
    %v1940 = vld [vmem:[%s10 + $0x240] sm:$0xf]
    %v1941 = vld [vmem:[%s10 + $0x244] sm:$0xf]
    %v1942 = vld [vmem:[%s10 + $0x248] sm:$0xf]
    %v1943 = vld [vmem:[%s10 + $0x24c] sm:$0xf]
    %v1944 = vld [vmem:[%s10 + $0x250] sm:$0xf]
    %v1945 = vld [vmem:[%s10 + $0x254] sm:$0xf]
    %v1946 = vld [vmem:[%s10 + $0x258] sm:$0xf]
    %v1947 = vld [vmem:[%s10 + $0x25c] sm:$0xf]
    %v1948 = vld [vmem:[%s10 + $0x260] sm:$0xf]
    %v1949 = vld [vmem:[%s10 + $0x264] sm:$0xf]
    %v1950 = vld [vmem:[%s10 + $0x268] sm:$0xf]
    %v1951 = vld [vmem:[%s10 + $0x26c] sm:$0xf]
    %v1952 = vld [vmem:[%s10 + $0x270] sm:$0xf]
    %v1953 = vld [vmem:[%s10 + $0x274] sm:$0xf]
    %v1954 = vld [vmem:[%s10 + $0x278] sm:$0xf]
    %v1955 = vld [vmem:[%s10 + $0x27c] sm:$0xf]
    %v1956 = vld [vmem:[%s10 + $0x280] sm:$0xf]
    %v1957 = vld [vmem:[%s10 + $0x284] sm:$0xf]
    %v1958 = vld [vmem:[%s10 + $0x288] sm:$0xf]
    %v1959 = vld [vmem:[%s10 + $0x28c] sm:$0xf]
    %v1960 = vld [vmem:[%s10 + $0x290] sm:$0xf]
    %v1961 = vld [vmem:[%s10 + $0x294] sm:$0xf]
    %v1962 = vld [vmem:[%s10 + $0x298] sm:$0xf]
    %v1963 = vld [vmem:[%s10 + $0x29c] sm:$0xf]
    %v1964 = vld [vmem:[%s10 + $0x2a0] sm:$0xf]
    %v1965 = vld [vmem:[%s10 + $0x2a4] sm:$0xf]
    %v1966 = vld [vmem:[%s10 + $0x2a8] sm:$0xf]
    %v1967 = vld [vmem:[%s10 + $0x2ac] sm:$0xf]
    %v1968 = vld [vmem:[%s10 + $0x2b0] sm:$0xf]
    %v1969 = vld [vmem:[%s10 + $0x2b4] sm:$0xf]
    %v1970 = vld [vmem:[%s10 + $0x2b8] sm:$0xf]
    %v1971 = vld [vmem:[%s10 + $0x2bc] sm:$0xf]
    %v1972 = vld [vmem:[%s10 + $0x2c0] sm:$0xf]
    %v1973 = vld [vmem:[%s10 + $0x2c4] sm:$0xf]
    %v1974 = vld [vmem:[%s10 + $0x2c8] sm:$0xf]
    %v1975 = vld [vmem:[%s10 + $0x2cc] sm:$0xf]
    %v1976 = vld [vmem:[%s10 + $0x2d0] sm:$0xf]
    %v1977 = vld [vmem:[%s10 + $0x2d4] sm:$0xf]
    %v1978 = vld [vmem:[%s10 + $0x2d8] sm:$0xf]
    %v1979 = vld [vmem:[%s10 + $0x2dc] sm:$0xf]
    %v1980 = vld [vmem:[%s10 + $0x2e0] sm:$0xf]
    %v1981 = vld [vmem:[%s10 + $0x2e4] sm:$0xf]
    %v1982 = vld [vmem:[%s10 + $0x2e8] sm:$0xf]
    %v1983 = vld [vmem:[%s10 + $0x2ec] sm:$0xf]
    %v1984 = vld [vmem:[%s10 + $0x2f0] sm:$0xf]
    %v1985 = vld [vmem:[%s10 + $0x2f4] sm:$0xf]
    %v1986 = vld [vmem:[%s10 + $0x2f8] sm:$0xf]
    %v1987 = vld [vmem:[%s10 + $0x2fc] sm:$0xf]
    %v1988 = vld [vmem:[%s10 + $0x300] sm:$0xf]
    %v1989 = vld [vmem:[%s10 + $0x304] sm:$0xf]
    %v1990 = vld [vmem:[%s10 + $0x308] sm:$0xf]
    %v1991 = vld [vmem:[%s10 + $0x30c] sm:$0xf]
    %v1992 = vld [vmem:[%s10 + $0x310] sm:$0xf]
    %v1993 = vld [vmem:[%s10 + $0x314] sm:$0xf]
    %v1994 = vld [vmem:[%s10 + $0x318] sm:$0xf]
    %v1995 = vld [vmem:[%s10 + $0x31c] sm:$0xf]
    %v1996 = vld [vmem:[%s10 + $0x320] sm:$0xf]
    %v1997 = vld [vmem:[%s10 + $0x324] sm:$0xf]
    %v1998 = vld [vmem:[%s10 + $0x328] sm:$0xf]
    %v1999 = vld [vmem:[%s10 + $0x32c] sm:$0xf]
    %v2000 = vld [vmem:[%s10 + $0x330] sm:$0xf]
    %v2001 = vld [vmem:[%s10 + $0x334] sm:$0xf]
    %v2002 = vld [vmem:[%s10 + $0x338] sm:$0xf]
    %v2003 = vld [vmem:[%s10 + $0x33c] sm:$0xf]
    %v2004 = vld [vmem:[%s10 + $0x340] sm:$0xf]
    %v2005 = vld [vmem:[%s10 + $0x344] sm:$0xf]
    %v2006 = vld [vmem:[%s10 + $0x348] sm:$0xf]
    %v2007 = vld [vmem:[%s10 + $0x34c] sm:$0xf]
    %v2008 = vld [vmem:[%s10 + $0x350] sm:$0xf]
    %v2009 = vld [vmem:[%s10 + $0x354] sm:$0xf]
    %v2010 = vld [vmem:[%s10 + $0x358] sm:$0xf]
    %v2011 = vld [vmem:[%s10 + $0x35c] sm:$0xf]
    %v2012 = vld [vmem:[%s10 + $0x360] sm:$0xf]
    %v2013 = vld [vmem:[%s10 + $0x364] sm:$0xf]
    %v2014 = vld [vmem:[%s10 + $0x368] sm:$0xf]
    %v2015 = vld [vmem:[%s10 + $0x36c] sm:$0xf]
    %v2016 = vld [vmem:[%s10 + $0x370] sm:$0xf]
    %v2017 = vld [vmem:[%s10 + $0x374] sm:$0xf]
    %v2018 = vld [vmem:[%s10 + $0x378] sm:$0xf]
    %v2019 = vld [vmem:[%s10 + $0x37c] sm:$0xf]
    %v2020 = vld [vmem:[%s10 + $0x380] sm:$0xf]
    %v2021 = vld [vmem:[%s10 + $0x384] sm:$0xf]
    %v2022 = vld [vmem:[%s10 + $0x388] sm:$0xf]
    %v2023 = vld [vmem:[%s10 + $0x38c] sm:$0xf]
    %v2024 = vld [vmem:[%s10 + $0x390] sm:$0xf]
    %v2025 = vld [vmem:[%s10 + $0x394] sm:$0xf]
    %v2026 = vld [vmem:[%s10 + $0x398] sm:$0xf]
    %v2027 = vld [vmem:[%s10 + $0x39c] sm:$0xf]
    %v2028 = vld [vmem:[%s10 + $0x3a0] sm:$0xf]
    %v2029 = vld [vmem:[%s10 + $0x3a4] sm:$0xf]
    %v2030 = vld [vmem:[%s10 + $0x3a8] sm:$0xf]
    %v2031 = vld [vmem:[%s10 + $0x3ac] sm:$0xf]
    %v2032 = vld [vmem:[%s10 + $0x3b0] sm:$0xf]
    %v2033 = vld [vmem:[%s10 + $0x3b4] sm:$0xf]
    %v2034 = vld [vmem:[%s10 + $0x3b8] sm:$0xf]
    %v2035 = vld [vmem:[%s10 + $0x3bc] sm:$0xf]
    %v2036 = vld [vmem:[%s10 + $0x3c0] sm:$0xf]
    %v2037 = vld [vmem:[%s10 + $0x3c4] sm:$0xf]
    %v2038 = vld [vmem:[%s10 + $0x3c8] sm:$0xf]
    %v2039 = vld [vmem:[%s10 + $0x3cc] sm:$0xf]
    %v2040 = vld [vmem:[%s10 + $0x3d0] sm:$0xf]
    %v2041 = vld [vmem:[%s10 + $0x3d4] sm:$0xf]
    %v2042 = vld [vmem:[%s10 + $0x3d8] sm:$0xf]
    %v2043 = vld [vmem:[%s10 + $0x3dc] sm:$0xf]
    %v2044 = vld [vmem:[%s10 + $0x3e0] sm:$0xf]
    %v2045 = vld [vmem:[%s10 + $0x3e4] sm:$0xf]
    %v2046 = vld [vmem:[%s10 + $0x3e8] sm:$0xf]
    %v2047 = vld [vmem:[%s10 + $0x3ec] sm:$0xf]
    %v2048 = vld [vmem:[%s10 + $0x3f0] sm:$0xf]
    %v2049 = vld [vmem:[%s10 + $0x3f4] sm:$0xf]
    %v2050 = vld [vmem:[%s10 + $0x3f8] sm:$0xf]
    %v2051 = vld [vmem:[%s10 + $0x3fc] sm:$0xf]
    %v2052 = vld [vmem:[%s11] sm:$0x1]
    %v2054 = vperm.slane %v2052, 0
    %v2312 = vunpack.c.l.b16 %v1796
    %v2313 = vunpack.c.l.b16 %v1797
    %v2314 = vunpack.c.l.b16 %v1798
    %v2315 = vunpack.c.l.b16 %v1799
    %v2316 = vunpack.c.l.b16 %v1800
    %v2317 = vunpack.c.l.b16 %v1801
    %v2318 = vunpack.c.l.b16 %v1802
    %v2319 = vunpack.c.l.b16 %v1803
    %v2320 = vunpack.c.l.b16 %v1804
    %v2321 = vunpack.c.l.b16 %v1805
    %v2322 = vunpack.c.l.b16 %v1806
    %v2323 = vunpack.c.l.b16 %v1807
    %v2324 = vunpack.c.l.b16 %v1808
    %v2325 = vunpack.c.l.b16 %v1809
    %v2326 = vunpack.c.l.b16 %v1810
    %v2327 = vunpack.c.l.b16 %v1811
    %v2328 = vunpack.c.l.b16 %v1812
    %v2329 = vunpack.c.l.b16 %v1813
    %v2330 = vunpack.c.l.b16 %v1814
    %v2331 = vunpack.c.l.b16 %v1815
    %v2332 = vunpack.c.l.b16 %v1816
    %v2333 = vunpack.c.l.b16 %v1817
    %v2334 = vunpack.c.l.b16 %v1818
    %v2335 = vunpack.c.l.b16 %v1819
    %v2336 = vunpack.c.l.b16 %v1820
    %v2337 = vunpack.c.l.b16 %v1821
    %v2338 = vunpack.c.l.b16 %v1822
    %v2339 = vunpack.c.l.b16 %v1823
    %v2340 = vunpack.c.l.b16 %v1824
    %v2341 = vunpack.c.l.b16 %v1825
    %v2342 = vunpack.c.l.b16 %v1826
    %v2343 = vunpack.c.l.b16 %v1827
    %v2344 = vunpack.c.l.b16 %v1828
    %v2345 = vunpack.c.l.b16 %v1829
    %v2346 = vunpack.c.l.b16 %v1830
    %v2347 = vunpack.c.l.b16 %v1831
    %v2348 = vunpack.c.l.b16 %v1832
    %v2349 = vunpack.c.l.b16 %v1833
    %v2350 = vunpack.c.l.b16 %v1834
    %v2351 = vunpack.c.l.b16 %v1835
    %v2352 = vunpack.c.l.b16 %v1836
    %v2353 = vunpack.c.l.b16 %v1837
    %v2354 = vunpack.c.l.b16 %v1838
    %v2355 = vunpack.c.l.b16 %v1839
    %v2356 = vunpack.c.l.b16 %v1840
    %v2357 = vunpack.c.l.b16 %v1841
    %v2358 = vunpack.c.l.b16 %v1842
    %v2359 = vunpack.c.l.b16 %v1843
    %v2360 = vunpack.c.l.b16 %v1844
    %v2361 = vunpack.c.l.b16 %v1845
    %v2362 = vunpack.c.l.b16 %v1846
    %v2363 = vunpack.c.l.b16 %v1847
    %v2364 = vunpack.c.l.b16 %v1848
    %v2365 = vunpack.c.l.b16 %v1849
    %v2366 = vunpack.c.l.b16 %v1850
    %v2367 = vunpack.c.l.b16 %v1851
    %v2368 = vunpack.c.l.b16 %v1852
    %v2369 = vunpack.c.l.b16 %v1853
    %v2370 = vunpack.c.l.b16 %v1854
    %v2371 = vunpack.c.l.b16 %v1855
    %v2372 = vunpack.c.l.b16 %v1856
    %v2373 = vunpack.c.l.b16 %v1857
    %v2374 = vunpack.c.l.b16 %v1858
    %v2375 = vunpack.c.l.b16 %v1859
    %v2376 = vunpack.c.l.b16 %v1860
    %v2377 = vunpack.c.l.b16 %v1861
    %v2378 = vunpack.c.l.b16 %v1862
    %v2379 = vunpack.c.l.b16 %v1863
    %v2380 = vunpack.c.l.b16 %v1864
    %v2381 = vunpack.c.l.b16 %v1865
    %v2382 = vunpack.c.l.b16 %v1866
    %v2383 = vunpack.c.l.b16 %v1867
    %v2384 = vunpack.c.l.b16 %v1868
    %v2385 = vunpack.c.l.b16 %v1869
    %v2386 = vunpack.c.l.b16 %v1870
    %v2387 = vunpack.c.l.b16 %v1871
    %v2388 = vunpack.c.l.b16 %v1872
    %v2389 = vunpack.c.l.b16 %v1873
    %v2390 = vunpack.c.l.b16 %v1874
    %v2391 = vunpack.c.l.b16 %v1875
    %v2392 = vunpack.c.l.b16 %v1876
    %v2393 = vunpack.c.l.b16 %v1877
    %v2394 = vunpack.c.l.b16 %v1878
    %v2395 = vunpack.c.l.b16 %v1879
    %v2396 = vunpack.c.l.b16 %v1880
    %v2397 = vunpack.c.l.b16 %v1881
    %v2398 = vunpack.c.l.b16 %v1882
    %v2399 = vunpack.c.l.b16 %v1883
    %v2400 = vunpack.c.l.b16 %v1884
    %v2401 = vunpack.c.l.b16 %v1885
    %v2402 = vunpack.c.l.b16 %v1886
    %v2403 = vunpack.c.l.b16 %v1887
    %v2404 = vunpack.c.l.b16 %v1888
    %v2405 = vunpack.c.l.b16 %v1889
    %v2406 = vunpack.c.l.b16 %v1890
    %v2407 = vunpack.c.l.b16 %v1891
    %v2408 = vunpack.c.l.b16 %v1892
    %v2409 = vunpack.c.l.b16 %v1893
    %v2410 = vunpack.c.l.b16 %v1894
    %v2411 = vunpack.c.l.b16 %v1895
    %v2412 = vunpack.c.l.b16 %v1896
    %v2413 = vunpack.c.l.b16 %v1897
    %v2414 = vunpack.c.l.b16 %v1898
    %v2415 = vunpack.c.l.b16 %v1899
    %v2416 = vunpack.c.l.b16 %v1900
    %v2417 = vunpack.c.l.b16 %v1901
    %v2418 = vunpack.c.l.b16 %v1902
    %v2419 = vunpack.c.l.b16 %v1903
    %v2420 = vunpack.c.l.b16 %v1904
    %v2421 = vunpack.c.l.b16 %v1905
    %v2422 = vunpack.c.l.b16 %v1906
    %v2423 = vunpack.c.l.b16 %v1907
    %v2424 = vunpack.c.l.b16 %v1908
    %v2425 = vunpack.c.l.b16 %v1909
    %v2426 = vunpack.c.l.b16 %v1910
    %v2427 = vunpack.c.l.b16 %v1911
    %v2428 = vunpack.c.l.b16 %v1912
    %v2429 = vunpack.c.l.b16 %v1913
    %v2430 = vunpack.c.l.b16 %v1914
    %v2431 = vunpack.c.l.b16 %v1915
    %v2432 = vunpack.c.l.b16 %v1916
    %v2433 = vunpack.c.l.b16 %v1917
    %v2434 = vunpack.c.l.b16 %v1918
    %v2435 = vunpack.c.l.b16 %v1919
    %v2436 = vunpack.c.l.b16 %v1920
    %v2437 = vunpack.c.l.b16 %v1921
    %v2438 = vunpack.c.l.b16 %v1922
    %v2439 = vunpack.c.l.b16 %v1923
    %v2440 = vunpack.c.l.b16 %v1924
    %v2441 = vunpack.c.l.b16 %v1925
    %v2442 = vunpack.c.l.b16 %v1926
    %v2443 = vunpack.c.l.b16 %v1927
    %v2444 = vunpack.c.l.b16 %v1928
    %v2445 = vunpack.c.l.b16 %v1929
    %v2446 = vunpack.c.l.b16 %v1930
    %v2447 = vunpack.c.l.b16 %v1931
    %v2448 = vunpack.c.l.b16 %v1932
    %v2449 = vunpack.c.l.b16 %v1933
    %v2450 = vunpack.c.l.b16 %v1934
    %v2451 = vunpack.c.l.b16 %v1935
    %v2452 = vunpack.c.l.b16 %v1936
    %v2453 = vunpack.c.l.b16 %v1937
    %v2454 = vunpack.c.l.b16 %v1938
    %v2455 = vunpack.c.l.b16 %v1939
    %v2456 = vunpack.c.l.b16 %v1940
    %v2457 = vunpack.c.l.b16 %v1941
    %v2458 = vunpack.c.l.b16 %v1942
    %v2459 = vunpack.c.l.b16 %v1943
    %v2460 = vunpack.c.l.b16 %v1944
    %v2461 = vunpack.c.l.b16 %v1945
    %v2462 = vunpack.c.l.b16 %v1946
    %v2463 = vunpack.c.l.b16 %v1947
    %v2464 = vunpack.c.l.b16 %v1948
    %v2465 = vunpack.c.l.b16 %v1949
    %v2466 = vunpack.c.l.b16 %v1950
    %v2467 = vunpack.c.l.b16 %v1951
    %v2468 = vunpack.c.l.b16 %v1952
    %v2469 = vunpack.c.l.b16 %v1953
    %v2470 = vunpack.c.l.b16 %v1954
    %v2471 = vunpack.c.l.b16 %v1955
    %v2472 = vunpack.c.l.b16 %v1956
    %v2473 = vunpack.c.l.b16 %v1957
    %v2474 = vunpack.c.l.b16 %v1958
    %v2475 = vunpack.c.l.b16 %v1959
    %v2476 = vunpack.c.l.b16 %v1960
    %v2477 = vunpack.c.l.b16 %v1961
    %v2478 = vunpack.c.l.b16 %v1962
    %v2479 = vunpack.c.l.b16 %v1963
    %v2480 = vunpack.c.l.b16 %v1964
    %v2481 = vunpack.c.l.b16 %v1965
    %v2482 = vunpack.c.l.b16 %v1966
    %v2483 = vunpack.c.l.b16 %v1967
    %v2484 = vunpack.c.l.b16 %v1968
    %v2485 = vunpack.c.l.b16 %v1969
    %v2486 = vunpack.c.l.b16 %v1970
    %v2487 = vunpack.c.l.b16 %v1971
    %v2488 = vunpack.c.l.b16 %v1972
    %v2489 = vunpack.c.l.b16 %v1973
    %v2490 = vunpack.c.l.b16 %v1974
    %v2491 = vunpack.c.l.b16 %v1975
    %v2492 = vunpack.c.l.b16 %v1976
    %v2493 = vunpack.c.l.b16 %v1977
    %v2494 = vunpack.c.l.b16 %v1978
    %v2495 = vunpack.c.l.b16 %v1979
    %v2496 = vunpack.c.l.b16 %v1980
    %v2497 = vunpack.c.l.b16 %v1981
    %v2498 = vunpack.c.l.b16 %v1982
    %v2499 = vunpack.c.l.b16 %v1983
    %v2500 = vunpack.c.l.b16 %v1984
    %v2501 = vunpack.c.l.b16 %v1985
    %v2502 = vunpack.c.l.b16 %v1986
    %v2503 = vunpack.c.l.b16 %v1987
    %v2504 = vunpack.c.l.b16 %v1988
    %v2505 = vunpack.c.l.b16 %v1989
    %v2506 = vunpack.c.l.b16 %v1990
    %v2507 = vunpack.c.l.b16 %v1991
    %v2508 = vunpack.c.l.b16 %v1992
    %v2509 = vunpack.c.l.b16 %v1993
    %v2510 = vunpack.c.l.b16 %v1994
    %v2511 = vunpack.c.l.b16 %v1995
    %v2512 = vunpack.c.l.b16 %v1996
    %v2513 = vunpack.c.l.b16 %v1997
    %v2514 = vunpack.c.l.b16 %v1998
    %v2515 = vunpack.c.l.b16 %v1999
    %v2516 = vunpack.c.l.b16 %v2000
    %v2517 = vunpack.c.l.b16 %v2001
    %v2518 = vunpack.c.l.b16 %v2002
    %v2519 = vunpack.c.l.b16 %v2003
    %v2520 = vunpack.c.l.b16 %v2004
    %v2521 = vunpack.c.l.b16 %v2005
    %v2522 = vunpack.c.l.b16 %v2006
    %v2523 = vunpack.c.l.b16 %v2007
    %v2524 = vunpack.c.l.b16 %v2008
    %v2525 = vunpack.c.l.b16 %v2009
    %v2526 = vunpack.c.l.b16 %v2010
    %v2527 = vunpack.c.l.b16 %v2011
    %v2528 = vunpack.c.l.b16 %v2012
    %v2529 = vunpack.c.l.b16 %v2013
    %v2530 = vunpack.c.l.b16 %v2014
    %v2531 = vunpack.c.l.b16 %v2015
    %v2532 = vunpack.c.l.b16 %v2016
    %v2533 = vunpack.c.l.b16 %v2017
    %v2534 = vunpack.c.l.b16 %v2018
    %v2535 = vunpack.c.l.b16 %v2019
    %v2536 = vunpack.c.l.b16 %v2020
    %v2537 = vunpack.c.l.b16 %v2021
    %v2538 = vunpack.c.l.b16 %v2022
    %v2539 = vunpack.c.l.b16 %v2023
    %v2540 = vunpack.c.l.b16 %v2024
    %v2541 = vunpack.c.l.b16 %v2025
    %v2542 = vunpack.c.l.b16 %v2026
    %v2543 = vunpack.c.l.b16 %v2027
    %v2544 = vunpack.c.l.b16 %v2028
    %v2545 = vunpack.c.l.b16 %v2029
    %v2546 = vunpack.c.l.b16 %v2030
    %v2547 = vunpack.c.l.b16 %v2031
    %v2548 = vunpack.c.l.b16 %v2032
    %v2549 = vunpack.c.l.b16 %v2033
    %v2550 = vunpack.c.l.b16 %v2034
    %v2551 = vunpack.c.l.b16 %v2035
    %v2552 = vunpack.c.l.b16 %v2036
    %v2553 = vunpack.c.l.b16 %v2037
    %v2554 = vunpack.c.l.b16 %v2038
    %v2555 = vunpack.c.l.b16 %v2039
    %v2556 = vunpack.c.l.b16 %v2040
    %v2557 = vunpack.c.l.b16 %v2041
    %v2558 = vunpack.c.l.b16 %v2042
    %v2559 = vunpack.c.l.b16 %v2043
    %v2560 = vunpack.c.l.b16 %v2044
    %v2561 = vunpack.c.l.b16 %v2045
    %v2562 = vunpack.c.l.b16 %v2046
    %v2563 = vunpack.c.l.b16 %v2047
    %v2564 = vunpack.c.l.b16 %v2048
    %v2565 = vunpack.c.l.b16 %v2049
    %v2566 = vunpack.c.l.b16 %v2050
    %v2567 = vunpack.c.l.b16 %v2051
    %v2568 = vpack.c.b16 %v2313, %v2312
    %v2569 = vpack.c.b16 %v2315, %v2314
    %v2570 = vpack.c.b16 %v2317, %v2316
    %v2571 = vpack.c.b16 %v2319, %v2318
    %v2572 = vpack.c.b16 %v2321, %v2320
    %v2573 = vpack.c.b16 %v2323, %v2322
    %v2574 = vpack.c.b16 %v2325, %v2324
    %v2575 = vpack.c.b16 %v2327, %v2326
    %v2576 = vpack.c.b16 %v2329, %v2328
    %v2577 = vpack.c.b16 %v2331, %v2330
    %v2578 = vpack.c.b16 %v2333, %v2332
    %v2579 = vpack.c.b16 %v2335, %v2334
    %v2580 = vpack.c.b16 %v2337, %v2336
    %v2581 = vpack.c.b16 %v2339, %v2338
    %v2582 = vpack.c.b16 %v2341, %v2340
    %v2583 = vpack.c.b16 %v2343, %v2342
    %v2584 = vpack.c.b16 %v2345, %v2344
    %v2585 = vpack.c.b16 %v2347, %v2346
    %v2586 = vpack.c.b16 %v2349, %v2348
    %v2587 = vpack.c.b16 %v2351, %v2350
    %v2588 = vpack.c.b16 %v2353, %v2352
    %v2589 = vpack.c.b16 %v2355, %v2354
    %v2590 = vpack.c.b16 %v2357, %v2356
    %v2591 = vpack.c.b16 %v2359, %v2358
    %v2592 = vpack.c.b16 %v2361, %v2360
    %v2593 = vpack.c.b16 %v2363, %v2362
    %v2594 = vpack.c.b16 %v2365, %v2364
    %v2595 = vpack.c.b16 %v2367, %v2366
    %v2596 = vpack.c.b16 %v2369, %v2368
    %v2597 = vpack.c.b16 %v2371, %v2370
    %v2598 = vpack.c.b16 %v2373, %v2372
    %v2599 = vpack.c.b16 %v2375, %v2374
    %v2600 = vpack.c.b16 %v2377, %v2376
    %v2601 = vpack.c.b16 %v2379, %v2378
    %v2602 = vpack.c.b16 %v2381, %v2380
    %v2603 = vpack.c.b16 %v2383, %v2382
    %v2604 = vpack.c.b16 %v2385, %v2384
    %v2605 = vpack.c.b16 %v2387, %v2386
    %v2606 = vpack.c.b16 %v2389, %v2388
    %v2607 = vpack.c.b16 %v2391, %v2390
    %v2608 = vpack.c.b16 %v2393, %v2392
    %v2609 = vpack.c.b16 %v2395, %v2394
    %v2610 = vpack.c.b16 %v2397, %v2396
    %v2611 = vpack.c.b16 %v2399, %v2398
    %v2612 = vpack.c.b16 %v2401, %v2400
    %v2613 = vpack.c.b16 %v2403, %v2402
    %v2614 = vpack.c.b16 %v2405, %v2404
    %v2615 = vpack.c.b16 %v2407, %v2406
    %v2616 = vpack.c.b16 %v2409, %v2408
    %v2617 = vpack.c.b16 %v2411, %v2410
    %v2618 = vpack.c.b16 %v2413, %v2412
    %v2619 = vpack.c.b16 %v2415, %v2414
    %v2620 = vpack.c.b16 %v2417, %v2416
    %v2621 = vpack.c.b16 %v2419, %v2418
    %v2622 = vpack.c.b16 %v2421, %v2420
    %v2623 = vpack.c.b16 %v2423, %v2422
    %v2624 = vpack.c.b16 %v2425, %v2424
    %v2625 = vpack.c.b16 %v2427, %v2426
    %v2626 = vpack.c.b16 %v2429, %v2428
    %v2627 = vpack.c.b16 %v2431, %v2430
    %v2628 = vpack.c.b16 %v2433, %v2432
    %v2629 = vpack.c.b16 %v2435, %v2434
    %v2630 = vpack.c.b16 %v2437, %v2436
    %v2631 = vpack.c.b16 %v2439, %v2438
    %v2632 = vpack.c.b16 %v2441, %v2440
    %v2633 = vpack.c.b16 %v2443, %v2442
    %v2634 = vpack.c.b16 %v2445, %v2444
    %v2635 = vpack.c.b16 %v2447, %v2446
    %v2636 = vpack.c.b16 %v2449, %v2448
    %v2637 = vpack.c.b16 %v2451, %v2450
    %v2638 = vpack.c.b16 %v2453, %v2452
    %v2639 = vpack.c.b16 %v2455, %v2454
    %v2640 = vpack.c.b16 %v2457, %v2456
    %v2641 = vpack.c.b16 %v2459, %v2458
    %v2642 = vpack.c.b16 %v2461, %v2460
    %v2643 = vpack.c.b16 %v2463, %v2462
    %v2644 = vpack.c.b16 %v2465, %v2464
    %v2645 = vpack.c.b16 %v2467, %v2466
    %v2646 = vpack.c.b16 %v2469, %v2468
    %v2647 = vpack.c.b16 %v2471, %v2470
    %v2648 = vpack.c.b16 %v2473, %v2472
    %v2649 = vpack.c.b16 %v2475, %v2474
    %v2650 = vpack.c.b16 %v2477, %v2476
    %v2651 = vpack.c.b16 %v2479, %v2478
    %v2652 = vpack.c.b16 %v2481, %v2480
    %v2653 = vpack.c.b16 %v2483, %v2482
    %v2654 = vpack.c.b16 %v2485, %v2484
    %v2655 = vpack.c.b16 %v2487, %v2486
    %v2656 = vpack.c.b16 %v2489, %v2488
    %v2657 = vpack.c.b16 %v2491, %v2490
    %v2658 = vpack.c.b16 %v2493, %v2492
    %v2659 = vpack.c.b16 %v2495, %v2494
    %v2660 = vpack.c.b16 %v2497, %v2496
    %v2661 = vpack.c.b16 %v2499, %v2498
    %v2662 = vpack.c.b16 %v2501, %v2500
    %v2663 = vpack.c.b16 %v2503, %v2502
    %v2664 = vpack.c.b16 %v2505, %v2504
    %v2665 = vpack.c.b16 %v2507, %v2506
    %v2666 = vpack.c.b16 %v2509, %v2508
    %v2667 = vpack.c.b16 %v2511, %v2510
    %v2668 = vpack.c.b16 %v2513, %v2512
    %v2669 = vpack.c.b16 %v2515, %v2514
    %v2670 = vpack.c.b16 %v2517, %v2516
    %v2671 = vpack.c.b16 %v2519, %v2518
    %v2672 = vpack.c.b16 %v2521, %v2520
    %v2673 = vpack.c.b16 %v2523, %v2522
    %v2674 = vpack.c.b16 %v2525, %v2524
    %v2675 = vpack.c.b16 %v2527, %v2526
    %v2676 = vpack.c.b16 %v2529, %v2528
    %v2677 = vpack.c.b16 %v2531, %v2530
    %v2678 = vpack.c.b16 %v2533, %v2532
    %v2679 = vpack.c.b16 %v2535, %v2534
    %v2680 = vpack.c.b16 %v2537, %v2536
    %v2681 = vpack.c.b16 %v2539, %v2538
    %v2682 = vpack.c.b16 %v2541, %v2540
    %v2683 = vpack.c.b16 %v2543, %v2542
    %v2684 = vpack.c.b16 %v2545, %v2544
    %v2685 = vpack.c.b16 %v2547, %v2546
    %v2686 = vpack.c.b16 %v2549, %v2548
    %v2687 = vpack.c.b16 %v2551, %v2550
    %v2688 = vpack.c.b16 %v2553, %v2552
    %v2689 = vpack.c.b16 %v2555, %v2554
    %v2690 = vpack.c.b16 %v2557, %v2556
    %v2691 = vpack.c.b16 %v2559, %v2558
    %v2692 = vpack.c.b16 %v2561, %v2560
    %v2693 = vpack.c.b16 %v2563, %v2562
    %v2694 = vpack.c.b16 %v2565, %v2564
    %v2695 = vpack.c.b16 %v2567, %v2566
    %2824 = vmatpush.bf16.msra.mxu0 %v2575
    %2825 = vmatpush.bf16.msra.mxu0 %v2574
    %2826 = vmatpush.bf16.msra.mxu0 %v2573
    %2827 = vmatpush.bf16.msra.mxu0 %v2572
    %2828 = vmatpush.bf16.msra.mxu0 %v2571
    %2829 = vmatpush.bf16.msra.mxu0 %v2570
    %2830 = vmatpush.bf16.msra.mxu0 %v2569
    %2831 = vmatpush.bf16.msra.mxu0 %v2568
    %2832 = vmatmul.bf16.gmra.mxu0 %v1764
    %v2833 = vpop.f32.mrf.mxu0
    %v2834 = vadd.f32 %v2054, %v2833
    %v2835 = vpop.f32.mrf.mxu0
    %v2836 = vadd.f32 %v2054, %v2835
    %2837 = vmatmul.bf16.gmra.mxu0 %v1780
    %v2838 = vpop.f32.mrf.mxu0
    %v2839 = vadd.f32 %v2054, %v2838
    %v2840 = vpop.f32.mrf.mxu0
    %v2841 = vadd.f32 %v2054, %v2840
    %2842 = vdwg.mxu0
    %2843 = vmatpush.bf16.msra.mxu0 %v2583
    %2844 = vmatpush.bf16.msra.mxu0 %v2582
    %2845 = vmatpush.bf16.msra.mxu0 %v2581
    %2846 = vmatpush.bf16.msra.mxu0 %v2580
    %2847 = vmatpush.bf16.msra.mxu0 %v2579
    %2848 = vmatpush.bf16.msra.mxu0 %v2578
    %2849 = vmatpush.bf16.msra.mxu0 %v2577
    %2850 = vmatpush.bf16.msra.mxu0 %v2576
    %2851 = vmatmul.bf16.gmra.mxu0 %v1765
    %v2852 = vpop.f32.mrf.mxu0
    %v2853 = vadd.f32 %v2834, %v2852
    %v2854 = vpop.f32.mrf.mxu0
    %v2855 = vadd.f32 %v2836, %v2854
    %2856 = vmatmul.bf16.gmra.mxu0 %v1781
    %v2857 = vpop.f32.mrf.mxu0
    %v2858 = vadd.f32 %v2839, %v2857
    %v2859 = vpop.f32.mrf.mxu0
    %v2860 = vadd.f32 %v2841, %v2859
    %2861 = vdwg.mxu0
    %2862 = vmatpush.bf16.msra.mxu0 %v2591
    %2863 = vmatpush.bf16.msra.mxu0 %v2590
    %2864 = vmatpush.bf16.msra.mxu0 %v2589
    %2865 = vmatpush.bf16.msra.mxu0 %v2588
    %2866 = vmatpush.bf16.msra.mxu0 %v2587
    %2867 = vmatpush.bf16.msra.mxu0 %v2586
    %2868 = vmatpush.bf16.msra.mxu0 %v2585
    %2869 = vmatpush.bf16.msra.mxu0 %v2584
    %2870 = vmatmul.bf16.gmra.mxu0 %v1766
    %v2871 = vpop.f32.mrf.mxu0
    %v2872 = vadd.f32 %v2853, %v2871
    %v2873 = vpop.f32.mrf.mxu0
    %v2874 = vadd.f32 %v2855, %v2873
    %2875 = vmatmul.bf16.gmra.mxu0 %v1782
    %v2876 = vpop.f32.mrf.mxu0
    %v2877 = vadd.f32 %v2858, %v2876
    %v2878 = vpop.f32.mrf.mxu0
    %v2879 = vadd.f32 %v2860, %v2878
    %2880 = vdwg.mxu0
    %2881 = vmatpush.bf16.msra.mxu0 %v2599
    %2882 = vmatpush.bf16.msra.mxu0 %v2598
    %2883 = vmatpush.bf16.msra.mxu0 %v2597
    %2884 = vmatpush.bf16.msra.mxu0 %v2596
    %2885 = vmatpush.bf16.msra.mxu0 %v2595
    %2886 = vmatpush.bf16.msra.mxu0 %v2594
    %2887 = vmatpush.bf16.msra.mxu0 %v2593
    %2888 = vmatpush.bf16.msra.mxu0 %v2592
    %2889 = vmatmul.bf16.gmra.mxu0 %v1767
    %v2890 = vpop.f32.mrf.mxu0
    %v2891 = vadd.f32 %v2872, %v2890
    %v2892 = vpop.f32.mrf.mxu0
    %v2893 = vadd.f32 %v2874, %v2892
    %2894 = vmatmul.bf16.gmra.mxu0 %v1783
    %v2895 = vpop.f32.mrf.mxu0
    %v2896 = vadd.f32 %v2877, %v2895
    %v2897 = vpop.f32.mrf.mxu0
    %v2898 = vadd.f32 %v2879, %v2897
    %2899 = vdwg.mxu0
    %2900 = vmatpush.bf16.msra.mxu0 %v2607
    %2901 = vmatpush.bf16.msra.mxu0 %v2606
    %2902 = vmatpush.bf16.msra.mxu0 %v2605
    %2903 = vmatpush.bf16.msra.mxu0 %v2604
    %2904 = vmatpush.bf16.msra.mxu0 %v2603
    %2905 = vmatpush.bf16.msra.mxu0 %v2602
    %2906 = vmatpush.bf16.msra.mxu0 %v2601
    %2907 = vmatpush.bf16.msra.mxu0 %v2600
    %2908 = vmatmul.bf16.gmra.mxu0 %v1768
    %v2909 = vpop.f32.mrf.mxu0
    %v2910 = vadd.f32 %v2891, %v2909
    %v2911 = vpop.f32.mrf.mxu0
    %v2912 = vadd.f32 %v2893, %v2911
    %2913 = vmatmul.bf16.gmra.mxu0 %v1784
    %v2914 = vpop.f32.mrf.mxu0
    %v2915 = vadd.f32 %v2896, %v2914
    %v2916 = vpop.f32.mrf.mxu0
    %v2917 = vadd.f32 %v2898, %v2916
    %2918 = vdwg.mxu0
    %2919 = vmatpush.bf16.msra.mxu0 %v2615
    %2920 = vmatpush.bf16.msra.mxu0 %v2614
    %2921 = vmatpush.bf16.msra.mxu0 %v2613
    %2922 = vmatpush.bf16.msra.mxu0 %v2612
    %2923 = vmatpush.bf16.msra.mxu0 %v2611
    %2924 = vmatpush.bf16.msra.mxu0 %v2610
    %2925 = vmatpush.bf16.msra.mxu0 %v2609
    %2926 = vmatpush.bf16.msra.mxu0 %v2608
    %2927 = vmatmul.bf16.gmra.mxu0 %v1769
    %v2928 = vpop.f32.mrf.mxu0
    %v2929 = vadd.f32 %v2910, %v2928
    %v2930 = vpop.f32.mrf.mxu0
    %v2931 = vadd.f32 %v2912, %v2930
    %2932 = vmatmul.bf16.gmra.mxu0 %v1785
    %v2933 = vpop.f32.mrf.mxu0
    %v2934 = vadd.f32 %v2915, %v2933
    %v2935 = vpop.f32.mrf.mxu0
    %v2936 = vadd.f32 %v2917, %v2935
    %2937 = vdwg.mxu0
    %2938 = vmatpush.bf16.msra.mxu0 %v2623
    %2939 = vmatpush.bf16.msra.mxu0 %v2622
    %2940 = vmatpush.bf16.msra.mxu0 %v2621
    %2941 = vmatpush.bf16.msra.mxu0 %v2620
    %2942 = vmatpush.bf16.msra.mxu0 %v2619
    %2943 = vmatpush.bf16.msra.mxu0 %v2618
    %2944 = vmatpush.bf16.msra.mxu0 %v2617
    %2945 = vmatpush.bf16.msra.mxu0 %v2616
    %2946 = vmatmul.bf16.gmra.mxu0 %v1770
    %v2947 = vpop.f32.mrf.mxu0
    %v2948 = vadd.f32 %v2929, %v2947
    %v2949 = vpop.f32.mrf.mxu0
    %v2950 = vadd.f32 %v2931, %v2949
    %2951 = vmatmul.bf16.gmra.mxu0 %v1786
    %v2952 = vpop.f32.mrf.mxu0
    %v2953 = vadd.f32 %v2934, %v2952
    %v2954 = vpop.f32.mrf.mxu0
    %v2955 = vadd.f32 %v2936, %v2954
    %2956 = vdwg.mxu0
    %2957 = vmatpush.bf16.msra.mxu0 %v2631
    %2958 = vmatpush.bf16.msra.mxu0 %v2630
    %2959 = vmatpush.bf16.msra.mxu0 %v2629
    %2960 = vmatpush.bf16.msra.mxu0 %v2628
    %2961 = vmatpush.bf16.msra.mxu0 %v2627
    %2962 = vmatpush.bf16.msra.mxu0 %v2626
    %2963 = vmatpush.bf16.msra.mxu0 %v2625
    %2964 = vmatpush.bf16.msra.mxu0 %v2624
    %2965 = vmatmul.bf16.gmra.mxu0 %v1771
    %v2966 = vpop.f32.mrf.mxu0
    %v2967 = vadd.f32 %v2948, %v2966
    %v2968 = vpop.f32.mrf.mxu0
    %v2969 = vadd.f32 %v2950, %v2968
    %2970 = vmatmul.bf16.gmra.mxu0 %v1787
    %v2971 = vpop.f32.mrf.mxu0
    %v2972 = vadd.f32 %v2953, %v2971
    %v2973 = vpop.f32.mrf.mxu0
    %v2974 = vadd.f32 %v2955, %v2973
    %2975 = vdwg.mxu0
    %2976 = vmatpush.bf16.msra.mxu0 %v2639
    %2977 = vmatpush.bf16.msra.mxu0 %v2638
    %2978 = vmatpush.bf16.msra.mxu0 %v2637
    %2979 = vmatpush.bf16.msra.mxu0 %v2636
    %2980 = vmatpush.bf16.msra.mxu0 %v2635
    %2981 = vmatpush.bf16.msra.mxu0 %v2634
    %2982 = vmatpush.bf16.msra.mxu0 %v2633
    %2983 = vmatpush.bf16.msra.mxu0 %v2632
    %2984 = vmatmul.bf16.gmra.mxu0 %v1772
    %v2985 = vpop.f32.mrf.mxu0
    %v2986 = vadd.f32 %v2967, %v2985
    %v2987 = vpop.f32.mrf.mxu0
    %v2988 = vadd.f32 %v2969, %v2987
    %2989 = vmatmul.bf16.gmra.mxu0 %v1788
    %v2990 = vpop.f32.mrf.mxu0
    %v2991 = vadd.f32 %v2972, %v2990
    %v2992 = vpop.f32.mrf.mxu0
    %v2993 = vadd.f32 %v2974, %v2992
    %2994 = vdwg.mxu0
    %2995 = vmatpush.bf16.msra.mxu0 %v2647
    %2996 = vmatpush.bf16.msra.mxu0 %v2646
    %2997 = vmatpush.bf16.msra.mxu0 %v2645
    %2998 = vmatpush.bf16.msra.mxu0 %v2644
    %2999 = vmatpush.bf16.msra.mxu0 %v2643
    %3000 = vmatpush.bf16.msra.mxu0 %v2642
    %3001 = vmatpush.bf16.msra.mxu0 %v2641
    %3002 = vmatpush.bf16.msra.mxu0 %v2640
    %3003 = vmatmul.bf16.gmra.mxu0 %v1773
    %v3004 = vpop.f32.mrf.mxu0
    %v3005 = vadd.f32 %v2986, %v3004
    %v3006 = vpop.f32.mrf.mxu0
    %v3007 = vadd.f32 %v2988, %v3006
    %3008 = vmatmul.bf16.gmra.mxu0 %v1789
    %v3009 = vpop.f32.mrf.mxu0
    %v3010 = vadd.f32 %v2991, %v3009
    %v3011 = vpop.f32.mrf.mxu0
    %v3012 = vadd.f32 %v2993, %v3011
    %3013 = vdwg.mxu0
    %3014 = vmatpush.bf16.msra.mxu0 %v2655
    %3015 = vmatpush.bf16.msra.mxu0 %v2654
    %3016 = vmatpush.bf16.msra.mxu0 %v2653
    %3017 = vmatpush.bf16.msra.mxu0 %v2652
    %3018 = vmatpush.bf16.msra.mxu0 %v2651
    %3019 = vmatpush.bf16.msra.mxu0 %v2650
    %3020 = vmatpush.bf16.msra.mxu0 %v2649
    %3021 = vmatpush.bf16.msra.mxu0 %v2648
    %3022 = vmatmul.bf16.gmra.mxu0 %v1774
    %v3023 = vpop.f32.mrf.mxu0
    %v3024 = vadd.f32 %v3005, %v3023
    %v3025 = vpop.f32.mrf.mxu0
    %v3026 = vadd.f32 %v3007, %v3025
    %3027 = vmatmul.bf16.gmra.mxu0 %v1790
    %v3028 = vpop.f32.mrf.mxu0
    %v3029 = vadd.f32 %v3010, %v3028
    %v3030 = vpop.f32.mrf.mxu0
    %v3031 = vadd.f32 %v3012, %v3030
    %3032 = vdwg.mxu0
    %3033 = vmatpush.bf16.msra.mxu0 %v2663
    %3034 = vmatpush.bf16.msra.mxu0 %v2662
    %3035 = vmatpush.bf16.msra.mxu0 %v2661
    %3036 = vmatpush.bf16.msra.mxu0 %v2660
    %3037 = vmatpush.bf16.msra.mxu0 %v2659
    %3038 = vmatpush.bf16.msra.mxu0 %v2658
    %3039 = vmatpush.bf16.msra.mxu0 %v2657
    %3040 = vmatpush.bf16.msra.mxu0 %v2656
    %3041 = vmatmul.bf16.gmra.mxu0 %v1775
    %v3042 = vpop.f32.mrf.mxu0
    %v3043 = vadd.f32 %v3024, %v3042
    %v3044 = vpop.f32.mrf.mxu0
    %v3045 = vadd.f32 %v3026, %v3044
    %3046 = vmatmul.bf16.gmra.mxu0 %v1791
    %v3047 = vpop.f32.mrf.mxu0
    %v3048 = vadd.f32 %v3029, %v3047
    %v3049 = vpop.f32.mrf.mxu0
    %v3050 = vadd.f32 %v3031, %v3049
    %3051 = vdwg.mxu0
    %3052 = vmatpush.bf16.msra.mxu0 %v2671
    %3053 = vmatpush.bf16.msra.mxu0 %v2670
    %3054 = vmatpush.bf16.msra.mxu0 %v2669
    %3055 = vmatpush.bf16.msra.mxu0 %v2668
    %3056 = vmatpush.bf16.msra.mxu0 %v2667
    %3057 = vmatpush.bf16.msra.mxu0 %v2666
    %3058 = vmatpush.bf16.msra.mxu0 %v2665
    %3059 = vmatpush.bf16.msra.mxu0 %v2664
    %3060 = vmatmul.bf16.gmra.mxu0 %v1776
    %v3061 = vpop.f32.mrf.mxu0
    %v3062 = vadd.f32 %v3043, %v3061
    %v3063 = vpop.f32.mrf.mxu0
    %v3064 = vadd.f32 %v3045, %v3063
    %3065 = vmatmul.bf16.gmra.mxu0 %v1792
    %v3066 = vpop.f32.mrf.mxu0
    %v3067 = vadd.f32 %v3048, %v3066
    %v3068 = vpop.f32.mrf.mxu0
    %v3069 = vadd.f32 %v3050, %v3068
    %3070 = vdwg.mxu0
    %3071 = vmatpush.bf16.msra.mxu0 %v2679
    %3072 = vmatpush.bf16.msra.mxu0 %v2678
    %3073 = vmatpush.bf16.msra.mxu0 %v2677
    %3074 = vmatpush.bf16.msra.mxu0 %v2676
    %3075 = vmatpush.bf16.msra.mxu0 %v2675
    %3076 = vmatpush.bf16.msra.mxu0 %v2674
    %3077 = vmatpush.bf16.msra.mxu0 %v2673
    %3078 = vmatpush.bf16.msra.mxu0 %v2672
    %3079 = vmatmul.bf16.gmra.mxu0 %v1777
    %v3080 = vpop.f32.mrf.mxu0
    %v3081 = vadd.f32 %v3062, %v3080
    %v3082 = vpop.f32.mrf.mxu0
    %v3083 = vadd.f32 %v3064, %v3082
    %3084 = vmatmul.bf16.gmra.mxu0 %v1793
    %v3085 = vpop.f32.mrf.mxu0
    %v3086 = vadd.f32 %v3067, %v3085
    %v3087 = vpop.f32.mrf.mxu0
    %v3088 = vadd.f32 %v3069, %v3087
    %3089 = vdwg.mxu0
    %3090 = vmatpush.bf16.msra.mxu0 %v2687
    %3091 = vmatpush.bf16.msra.mxu0 %v2686
    %3092 = vmatpush.bf16.msra.mxu0 %v2685
    %3093 = vmatpush.bf16.msra.mxu0 %v2684
    %3094 = vmatpush.bf16.msra.mxu0 %v2683
    %3095 = vmatpush.bf16.msra.mxu0 %v2682
    %3096 = vmatpush.bf16.msra.mxu0 %v2681
    %3097 = vmatpush.bf16.msra.mxu0 %v2680
    %3098 = vmatmul.bf16.gmra.mxu0 %v1778
    %v3099 = vpop.f32.mrf.mxu0
    %v3100 = vadd.f32 %v3081, %v3099
    %v3101 = vpop.f32.mrf.mxu0
    %v3102 = vadd.f32 %v3083, %v3101
    %3103 = vmatmul.bf16.gmra.mxu0 %v1794
    %v3104 = vpop.f32.mrf.mxu0
    %v3105 = vadd.f32 %v3086, %v3104
    %v3106 = vpop.f32.mrf.mxu0
    %v3107 = vadd.f32 %v3088, %v3106
    %3108 = vdwg.mxu0
    %3109 = vmatpush.bf16.msra.mxu0 %v2695
    %3110 = vmatpush.bf16.msra.mxu0 %v2694
    %3111 = vmatpush.bf16.msra.mxu0 %v2693
    %3112 = vmatpush.bf16.msra.mxu0 %v2692
    %3113 = vmatpush.bf16.msra.mxu0 %v2691
    %3114 = vmatpush.bf16.msra.mxu0 %v2690
    %3115 = vmatpush.bf16.msra.mxu0 %v2689
    %3116 = vmatpush.bf16.msra.mxu0 %v2688
    %3117 = vmatmul.bf16.gmra.mxu0 %v1779
    %v3118 = vpop.f32.mrf.mxu0
    %v3119 = vadd.f32 %v3100, %v3118
    %v3120 = vpop.f32.mrf.mxu0
    %v3121 = vadd.f32 %v3102, %v3120
    %3122 = vmatmul.bf16.gmra.mxu0 %v1795
    %v3123 = vpop.f32.mrf.mxu0
    %v3124 = vadd.f32 %v3105, %v3123
    %v3125 = vpop.f32.mrf.mxu0
    %v3126 = vadd.f32 %v3107, %v3125
    %3127 = vdwg.mxu0
    %v3128 = vadd.f32 %v1252, %v3119
    %v3129 = vadd.f32 %v1253, %v3121
    %v3130 = vadd.f32 %v1254, %v3124
    %v3131 = vadd.f32 %v1255, %v3126
    %v3132 = vsel %vm219, %v3128, 0.0
    %3133 = vadd.xlane.f32.xlu0 %v3132
    %v3134 = vpop.xlane.xlu0 %3133
    %v3135 = vsel %vm219, %v3129, 0.0
    %3136 = vadd.xlane.f32.xlu0 %v3135
    %v3137 = vpop.xlane.xlu0 %3136
    %v3138 = vsel %vm219, %v3130, 0.0
    %3139 = vadd.xlane.f32.xlu0 %v3138
    %v3140 = vpop.xlane.xlu0 %3139
    %v3141 = vsel %vm219, %v3131, 0.0
    %3142 = vadd.xlane.f32.xlu0 %v3141
    %v3143 = vpop.xlane.xlu0 %3142
    %v3144 = vmul.f32 %v3134, %v1163
    %v3145 = vmul.f32 %v3137, %v1163
    %v3146 = vmul.f32 %v3140, %v1163
    %v3147 = vmul.f32 %v3143, %v1163
    %v3148 = vsub.f32 %v3128, %v3144
    %v3149 = vsub.f32 %v3129, %v3145
    %v3150 = vsub.f32 %v3130, %v3146
    %v3151 = vsub.f32 %v3131, %v3147
    %v3152 = vmul.f32 %v3148, %v3148
    %v3153 = vmul.f32 %v3149, %v3149
    %v3154 = vmul.f32 %v3150, %v3150
    %v3155 = vmul.f32 %v3151, %v3151
    %v3156 = vsel %vm219, %v3152, 0.0
    %3157 = vadd.xlane.f32.xlu0 %v3156
    %v3158 = vpop.xlane.xlu0 %3157
    %v3159 = vsel %vm219, %v3153, 0.0
    %3160 = vadd.xlane.f32.xlu0 %v3159
    %v3161 = vpop.xlane.xlu0 %3160
    %v3162 = vsel %vm219, %v3154, 0.0
    %3163 = vadd.xlane.f32.xlu0 %v3162
    %v3164 = vpop.xlane.xlu0 %3163
    %v3165 = vsel %vm219, %v3155, 0.0
    %3166 = vadd.xlane.f32.xlu0 %v3165
    %v3167 = vpop.xlane.xlu0 %3166
    %v3168 = vmul.f32 %v3158, %v1163
    %v3169 = vmul.f32 %v3161, %v1163
    %v3170 = vmul.f32 %v3164, %v1163
    %v3171 = vmul.f32 %v3167, %v1163
    %v3172 = vadd.f32 %v3168, 1e-05
    %v3173 = vadd.f32 %v3169, 1e-05
    %v3174 = vadd.f32 %v3170, 1e-05
    %v3175 = vadd.f32 %v3171, 1e-05
    %v3176 = vrsqrt.pop %v3172
    %v3177 = vmul.f32 %v3176, %v3172
    %v3178 = vmul.f32 %v3177, %v3176
    %v3179 = vmul.f32 0.5, %v3178
    %v3180 = vsub.f32 1.5, %v3179
    %v3181 = vmul.f32 %v3176, %v3180
    %vm3182 = vweird.f32 %v3172
    %vm3183 = vweird.f32 %v3176
    %vm3184 = vmor %vm3182, %vm3183
    %v3185 = vsel %vm3184, %v3176, %v3181
    %v3186 = vrsqrt.pop %v3173
    %v3187 = vmul.f32 %v3186, %v3173
    %v3188 = vmul.f32 %v3187, %v3186
    %v3189 = vmul.f32 0.5, %v3188
    %v3190 = vsub.f32 1.5, %v3189
    %v3191 = vmul.f32 %v3186, %v3190
    %vm3192 = vweird.f32 %v3173
    %vm3193 = vweird.f32 %v3186
    %vm3194 = vmor %vm3192, %vm3193
    %v3195 = vsel %vm3194, %v3186, %v3191
    %v3196 = vrsqrt.pop %v3174
    %v3197 = vmul.f32 %v3196, %v3174
    %v3198 = vmul.f32 %v3197, %v3196
    %v3199 = vmul.f32 0.5, %v3198
    %v3200 = vsub.f32 1.5, %v3199
    %v3201 = vmul.f32 %v3196, %v3200
    %vm3202 = vweird.f32 %v3174
    %vm3203 = vweird.f32 %v3196
    %vm3204 = vmor %vm3202, %vm3203
    %v3205 = vsel %vm3204, %v3196, %v3201
    %v3206 = vrsqrt.pop %v3175
    %v3207 = vmul.f32 %v3206, %v3175
    %v3208 = vmul.f32 %v3207, %v3206
    %v3209 = vmul.f32 0.5, %v3208
    %v3210 = vsub.f32 1.5, %v3209
    %v3211 = vmul.f32 %v3206, %v3210
    %vm3212 = vweird.f32 %v3175
    %vm3213 = vweird.f32 %v3206
    %vm3214 = vmor %vm3212, %vm3213
    %v3215 = vsel %vm3214, %v3206, %v3211
    %v3216 = vmul.f32 %v3148, %v3185
    %v3217 = vmul.f32 %v3149, %v3195
    %v3218 = vmul.f32 %v3150, %v3205
    %v3219 = vmul.f32 %v3151, %v3215
    %v3220 = vld [vmem:[%s12] sm:$0x1]
    %v3222 = vperm.slane %v3220, 0
    %v3224 = vmul.f32 %v3216, %v3222
    %v3225 = vmul.f32 %v3217, %v3222
    %v3226 = vmul.f32 %v3218, %v3222
    %v3227 = vmul.f32 %v3219, %v3222
    %v3228 = vld [vmem:[%s13] sm:$0x1]
    %v3230 = vperm.slane %v3228, 0
    %v3232 = vadd.f32 %v3224, %v3230
    %v3233 = vadd.f32 %v3225, %v3230
    %v3234 = vadd.f32 %v3226, %v3230
    %v3235 = vadd.f32 %v3227, %v3230
    %v3237 = vrot.slane %v3232, 1
    %v3238 = vrot.slane %v3232, 2
    %v3239 = vrot.slane %v3232, 3
    %v3240 = vrot.slane %v3232, 4
    %v3241 = vrot.slane %v3232, 5
    %v3242 = vrot.slane %v3232, 6
    %v3243 = vrot.slane %v3232, 7
    %vm3251 = vcmask 122880
    %3252 = vst.msk [vmem:[#allocation2] sm:$0x1] %vm3251, %v3232
    %3253 = vst.msk [vmem:[#allocation2 + $0x4] sm:$0x1] %vm3251, %v3237
    %3254 = vst.msk [vmem:[#allocation2 + $0x8] sm:$0x1] %vm3251, %v3238
    %3255 = vst.msk [vmem:[#allocation2 + $0xc] sm:$0x1] %vm3251, %v3239
    %3256 = vst.msk [vmem:[#allocation2 + $0x10] sm:$0x1] %vm3251, %v3240
    %3257 = vst.msk [vmem:[#allocation2 + $0x14] sm:$0x1] %vm3251, %v3241
    %3258 = vst.msk [vmem:[#allocation2 + $0x18] sm:$0x1] %vm3251, %v3242
    %3259 = vst.msk [vmem:[#allocation2 + $0x1c] sm:$0x1] %vm3251, %v3243
    %v3261 = vrot.slane %v3233, 1
    %v3262 = vrot.slane %v3233, 2
    %v3263 = vrot.slane %v3233, 3
    %v3264 = vrot.slane %v3233, 4
    %v3265 = vrot.slane %v3233, 5
    %v3266 = vrot.slane %v3233, 6
    %v3267 = vrot.slane %v3233, 7
    %3275 = vst.msk [vmem:[#allocation2 + $0x1] sm:$0x1] %vm3251, %v3233
    %3276 = vst.msk [vmem:[#allocation2 + $0x5] sm:$0x1] %vm3251, %v3261
    %3277 = vst.msk [vmem:[#allocation2 + $0x9] sm:$0x1] %vm3251, %v3262
    %3278 = vst.msk [vmem:[#allocation2 + $0xd] sm:$0x1] %vm3251, %v3263
    %3279 = vst.msk [vmem:[#allocation2 + $0x11] sm:$0x1] %vm3251, %v3264
    %3280 = vst.msk [vmem:[#allocation2 + $0x15] sm:$0x1] %vm3251, %v3265
    %3281 = vst.msk [vmem:[#allocation2 + $0x19] sm:$0x1] %vm3251, %v3266
    %3282 = vst.msk [vmem:[#allocation2 + $0x1d] sm:$0x1] %vm3251, %v3267
    %v3284 = vrot.slane %v3234, 1
    %v3285 = vrot.slane %v3234, 2
    %v3286 = vrot.slane %v3234, 3
    %v3287 = vrot.slane %v3234, 4
    %v3288 = vrot.slane %v3234, 5
    %v3289 = vrot.slane %v3234, 6
    %v3290 = vrot.slane %v3234, 7
    %3298 = vst.msk [vmem:[#allocation2 + $0x2] sm:$0x1] %vm3251, %v3234
    %3299 = vst.msk [vmem:[#allocation2 + $0x6] sm:$0x1] %vm3251, %v3284
    %3300 = vst.msk [vmem:[#allocation2 + $0xa] sm:$0x1] %vm3251, %v3285
    %3301 = vst.msk [vmem:[#allocation2 + $0xe] sm:$0x1] %vm3251, %v3286
    %3302 = vst.msk [vmem:[#allocation2 + $0x12] sm:$0x1] %vm3251, %v3287
    %3303 = vst.msk [vmem:[#allocation2 + $0x16] sm:$0x1] %vm3251, %v3288
    %3304 = vst.msk [vmem:[#allocation2 + $0x1a] sm:$0x1] %vm3251, %v3289
    %3305 = vst.msk [vmem:[#allocation2 + $0x1e] sm:$0x1] %vm3251, %v3290
    %v3307 = vrot.slane %v3235, 1
    %v3308 = vrot.slane %v3235, 2
    %v3309 = vrot.slane %v3235, 3
    %v3310 = vrot.slane %v3235, 4
    %v3311 = vrot.slane %v3235, 5
    %v3312 = vrot.slane %v3235, 6
    %v3313 = vrot.slane %v3235, 7
    %3321 = vst.msk [vmem:[#allocation2 + $0x3] sm:$0x1] %vm3251, %v3235
    %3322 = vst.msk [vmem:[#allocation2 + $0x7] sm:$0x1] %vm3251, %v3307
    %3323 = vst.msk [vmem:[#allocation2 + $0xb] sm:$0x1] %vm3251, %v3308
    %3324 = vst.msk [vmem:[#allocation2 + $0xf] sm:$0x1] %vm3251, %v3309
    %3325 = vst.msk [vmem:[#allocation2 + $0x13] sm:$0x1] %vm3251, %v3310
    %3326 = vst.msk [vmem:[#allocation2 + $0x17] sm:$0x1] %vm3251, %v3311
    %3327 = vst.msk [vmem:[#allocation2 + $0x1b] sm:$0x1] %vm3251, %v3312
    %3328 = vst.msk [vmem:[#allocation2 + $0x1f] sm:$0x1] %vm3251, %v3313
    // Predicated region
    $region58: #{tpu_custom_call.1} parent=1 // pred_check
      _
    $region59: #{tpu_custom_call.1} parent=1 // pred_check_branch
      %3330 = sbr.rel (0) target = $region61
    $region60: #{tpu_custom_call.1} parent=1 // pred_region
      %3332 = vsyncadd [#allocation3], 0
      %s3333 = sshll.u32 [#allocation2], 4
      %s3334 = int_to_ptr.vmem [resolvable:$true] %s3333
      %s3335 = sshll.u32 %s14, 4
      %s3336 = int_to_ptr.hbm [resolvable:$true] %s3335
      %3341 = dma.vmem_to_hbm [thread:$0]  %s3334, 512, %s3336, [#allocation3], 64, 64, 4
    $region61: #{tpu_custom_call.1} parent=1 // pred_fallthru
      _
    // Predicated region
    $region62: #{tpu_custom_call.1} parent=1 // pred_check
      _
    $region63: #{tpu_custom_call.1} parent=1 // pred_check_branch
      %3343 = sbr.rel (0) target = $region65
    $region64: #{tpu_custom_call.1} parent=1 // pred_region
      %3345 = dma.done [#allocation3], 512
    $region65: #{tpu_custom_call.1} parent=1 // pred_fallthru
      _
    %3346 = vsyncpa [#allocation3], 1

</llo_original>
